<compile_context>
chip_gen: v6e
topology: v6e:2x2x1
jax: 0.10.0
libtpu: 0.0.40
codegen_flags: <defaults>
</compile_context>

<pallas_src>
import functools
import math

import jax
import jax.numpy as jnp
from jax import lax
from jax.experimental import pallas as pl
from jax.experimental.pallas import tpu as pltpu


def _round_up(x, m):
    return ((x + m - 1) // m) * m


# --------------------------------------------------------------------------
# Pallas kernel: 4-layer MLP forward + per-batch-tile masked SSE partial
# --------------------------------------------------------------------------
def fcnn_kernel(x_ref, w1_ref, b1_ref, w2_ref, b2_ref, w3_ref, b3_ref,
                w4_ref, b4_ref, loc_ref, pred_ref, sse_ref, *, batch, tile_b):
    # Per-tile bf16 cast of the f32 activations (no wrapper-side HBM pass).
    x = x_ref[...].astype(jnp.bfloat16)

    # Layer 1: Linear(D_pad -> 1024) + ReLU   (bf16 into MXU, f32 accumulate)
    h = jnp.dot(x, w1_ref[...], preferred_element_type=jnp.float32)
    h = jnp.maximum(h + b1_ref[...], 0.0)                      # f32 epilogue

    # Layer 2: Linear(1024 -> 1024) + ReLU
    h = jnp.dot(h.astype(jnp.bfloat16), w2_ref[...],
                preferred_element_type=jnp.float32)
    h = jnp.maximum(h + b2_ref[...], 0.0)

    # Layer 3: Linear(1024 -> 256) + ReLU
    h = jnp.dot(h.astype(jnp.bfloat16), w3_ref[...],
                preferred_element_type=jnp.float32)
    h = jnp.maximum(h + b3_ref[...], 0.0)

    # Output layer: Linear(256 -> 128) where columns 2..127 are zero-padded,
    # so pred[:, 2:] == 0 and the lane-dense store is unmasked.
    pred = jnp.dot(h.astype(jnp.bfloat16), w4_ref[...],
                   preferred_element_type=jnp.float32) + b4_ref[...]
    pred_ref[...] = pred.astype(pred_ref.dtype)

    # Partial sum-of-squared-errors for this batch tile.  Padded rows (global
    # row index >= real batch) are masked out; padded output columns are zero
    # on both pred and loc so they contribute nothing.  The scalar mean is
    # finished in the wrapper so the grid axis stays fully parallel.
    row = (lax.broadcasted_iota(jnp.int32, pred.shape, 0)
           + pl.program_id(0) * tile_b)
    diff = jnp.where(row < batch, pred - loc_ref[...], 0.0)
    sse = jnp.sum(diff * diff)
    sse_ref[...] = jnp.broadcast_to(sse, sse_ref.shape)


# --------------------------------------------------------------------------
# Parameter setup (glue). Weights stored [in, out] (= torch weight.T), f32.
# --------------------------------------------------------------------------
def init_fcnn_params(key, input_dim, hidden_dims=(1024, 1024, 256), output_dim=2):
    dims = [input_dim] + list(hidden_dims) + [output_dim]
    params = []
    for i in range(len(dims) - 1):
        key, kw, kb = jax.random.split(key, 3)
        scale = 1.0 / math.sqrt(dims[i])
        w = jax.random.uniform(kw, (dims[i], dims[i + 1]), jnp.float32,
                               minval=-scale, maxval=scale)
        b = jax.random.uniform(kb, (1, dims[i + 1]), jnp.float32,
                               minval=-scale, maxval=scale)
        params.append((w, b))
    return params


def prepare_fcnn_params(params, *, d_pad=None, out_pad=128):
    """One-time prep outside the hot path: bf16 weight cast + zero padding.

    W1 rows padded to d_pad (multiple of 128); final layer padded from OUT=2
    to out_pad lanes with exact zeros so the SSE and pred[:, :2] are unchanged.
    """
    (w1, b1), (w2, b2), (w3, b3), (w4, b4) = params
    D = w1.shape[0]
    if d_pad is None:
        d_pad = _round_up(D, 128)
    assert d_pad >= D
    if d_pad > D:
        w1 = jnp.pad(w1, ((0, d_pad - D), (0, 0)))
    out = w4.shape[1]
    if out_pad > out:
        w4 = jnp.pad(w4, ((0, 0), (0, out_pad - out)))
        b4 = jnp.pad(b4, ((0, 0), (0, out_pad - out)))
    w1b, w2b, w3b, w4b = (w.astype(jnp.bfloat16) for w in (w1, w2, w3, w4))
    b1f, b2f, b3f, b4f = (b.astype(jnp.float32) for b in (b1, b2, b3, b4))
    return (w1b, b1f, w2b, b2f, w3b, b3f, w4b, b4f)


# --------------------------------------------------------------------------
# Wrapper: batch/feature padding, batch tiling, pallas_call, final MSE reduce
# --------------------------------------------------------------------------
def wireless_loc_fcnn_forward(channel, uelocation, prepared, *, tile_b=None):
    """
    channel:    [B, 2, A, S]
    uelocation: [B, 2]
    prepared:   output of prepare_fcnn_params
    returns:    (pred [B, 2] f32, mse scalar f32)
    """
    w1b, b1, w2b, b2, w3b, b3, w4b, b4 = prepared

    B = channel.shape[0]
    x = channel.reshape(B, -1).astype(jnp.float32)      # glue: view((B, -1))
    D = x.shape[1]
    D_pad = w1b.shape[0]
    H1, H2, H3 = w1b.shape[1], w2b.shape[1], w3b.shape[1]
    OUT_pad = w4b.shape[1]
    OUT = 2                                              # real output dim

    loc = uelocation.astype(jnp.float32)

    # Batch tile: multiple of 16 (bf16 sublane packing), capped at 512 rows,
    # sized ~ceil(B/2) so num_tiles >= 2 when the batch allows (v7x megacore).
    if tile_b is None:
        half = -(-max(B, 1) // 2)
        tile_b = min(512, _round_up(half, 16))
    tile_b = max(16, _round_up(tile_b, 16))
    B_pad = _round_up(B, tile_b)
    num_tiles = B_pad // tile_b

    # Zero-pad: x columns to D_pad (keeps layer-1 K lane-dense), x/loc rows to
    # B_pad, loc columns to OUT_pad (padded lanes are zero on both sides).
    if D_pad != D:
        x = jnp.pad(x, ((0, 0), (0, D_pad - D)))
    if B_pad != B:
        x = jnp.pad(x, ((0, B_pad - B), (0, 0)))
    loc = jnp.pad(loc, ((0, B_pad - B), (0, OUT_pad - OUT)))

    # Advisory cost estimate + VMEM budget from actual block footprint.
    weight_elems = D_pad * H1 + H1 * H2 + H2 * H3 + H3 * OUT_pad
    bias_elems = H1 + H2 + H3 + OUT_pad
    flops = int(2 * B_pad * weight_elems)
    bytes_accessed = int(
        B_pad * D_pad * 4                 # x (f32)
        + 2 * weight_elems                # weights (bf16)
        + 4 * bias_elems                  # biases (f32)
        + B_pad * OUT_pad * 4 * 2         # loc + pred (f32)
        + num_tiles * 8 * 128 * 4         # SSE partials (f32)
    )
    vmem_est = (
        2 * 2 * weight_elems                        # bf16 weights (double-buffered)
        + 2 * 4 * bias_elems                        # f32 biases
        + 2 * 4 * tile_b * D_pad                    # x tile (f32)
        + 2 * 4 * tile_b * OUT_pad * 2              # loc + pred tiles
        + 2 * 4 * 8 * 128                           # SSE partial tile
        + 4 * tile_b * (H1 + H2 + H3 + OUT_pad)     # f32 intermediates (approx)
    )
    vmem_limit = int(min(max(2 * vmem_est, 24 << 20), 60 << 20))

    kernel = functools.partial(fcnn_kernel, batch=B, tile_b=tile_b)

    pred_pad, sse_parts = pl.pallas_call(
        kernel,
        grid=(num_tiles,),
        in_specs=[
            pl.BlockSpec((tile_b, D_pad), lambda i: (i, 0)),   # x tile streams
            pl.BlockSpec((D_pad, H1),   lambda i: (0, 0)),     # weights stay
            pl.BlockSpec((1, H1),       lambda i: (0, 0)),     #  VMEM-resident
            pl.BlockSpec((H1, H2),      lambda i: (0, 0)),     #  (constant
            pl.BlockSpec((1, H2),       lambda i: (0, 0)),     #   block index)
            pl.BlockSpec((H2, H3),      lambda i: (0, 0)),
            pl.BlockSpec((1, H3),       lambda i: (0, 0)),
            pl.BlockSpec((H3, OUT_pad), lambda i: (0, 0)),
            pl.BlockSpec((1, OUT_pad),  lambda i: (0, 0)),
            pl.BlockSpec((tile_b, OUT_pad), lambda i: (i, 0)),  # loc tile streams
        ],
        out_specs=(
            pl.BlockSpec((tile_b, OUT_pad), lambda i: (i, 0)),  # pred (lane-dense)
            pl.BlockSpec((1, 8, 128), lambda i: (i, 0, 0)),     # per-tile SSE
        ),
        out_shape=(
            jax.ShapeDtypeStruct((B_pad, OUT_pad), jnp.float32),
            jax.ShapeDtypeStruct((num_tiles, 8, 128), jnp.float32),
        ),
        compiler_params=pltpu.CompilerParams(
            dimension_semantics=("parallel",),
            vmem_limit_bytes=vmem_limit,
        ),
        cost_estimate=pl.CostEstimate(
            flops=flops, bytes_accessed=bytes_accessed, transcendentals=0),
    )(x, w1b, b1, w2b, b2, w3b, b3, w4b, b4, loc)

    pred = pred_pad[:B, :OUT]
    mse = jnp.sum(sse_parts[:, 0, 0]) / float(B * OUT)   # nn.MSELoss 'mean'
    return pred, mse


# --------------------------------------------------------------------------
# Pure-JAX reference (same bf16-into-matmul / f32-accumulate precision)
# --------------------------------------------------------------------------
def reference_forward(channel, uelocation, params):
    B = channel.shape[0]
    h = channel.reshape(B, -1).astype(jnp.float32).astype(jnp.bfloat16)
    (w1, b1), (w2, b2), (w3, b3), (w4, b4) = params

    def lin(a, w, b):
        return jnp.dot(a, w.astype(jnp.bfloat16),
                       preferred_element_type=jnp.float32) + b

    h = jnp.maximum(lin(h, w1, b1), 0.0).astype(jnp.bfloat16)
    h = jnp.maximum(lin(h, w2, b2), 0.0).astype(jnp.bfloat16)
    h = jnp.maximum(lin(h, w3, b3), 0.0).astype(jnp.bfloat16)
    pred = lin(h, w4, b4)
    mse = jnp.mean((pred - uelocation.astype(jnp.float32)) ** 2)
    return pred, mse


if __name__ == "__main__":
    # EnvPara-equivalent (small shapes): model='FCNN',
    # input_antenna_dim=4, input_subcarrier_dim=16 -> input_dim = 2*4*16 = 128
    B, C, A, S = 2, 2, 4, 16
    input_dim = C * A * S

    key = jax.random.PRNGKey(0)
    k_chan, k_loc, k_params = jax.random.split(key, 3)

    channel = jax.random.normal(k_chan, (B, C, A, S), jnp.float32)
    uelocation = jax.random.normal(k_loc, (B, 2), jnp.float32)
    params = init_fcnn_params(k_params, input_dim)

    # One-time weight prep outside the hot path (bf16 cast + padding).
    prepared = prepare_fcnn_params(params)

    fwd = jax.jit(wireless_loc_fcnn_forward)
    pred, mse = fwd(channel, uelocation, prepared)
    pred = jax.block_until_ready(pred)
    mse = jax.block_until_ready(mse)

    # Sanity check against a precision-matched pure-JAX reference.
    ref_pred, ref_mse = reference_forward(channel, uelocation, params)
    assert pred.shape == (B, 2), "pred shape mismatch"
    assert jnp.allclose(pred, ref_pred, atol=1e-2, rtol=1e-2), "pred mismatch"
    assert jnp.allclose(mse, ref_mse, atol=1e-2, rtol=1e-2), "mse mismatch"

    print("KERNEL_OK")
</pallas_src>

<mosaic_0001>
module attributes {stable_mosaic.version = 11 : i64} {
  func.func @fcnn_kernel(%arg0: i32, %arg1: memref<16x128xf32, #tpu.memory_space<vmem>>, %arg2: memref<128x1024xbf16, #tpu.memory_space<vmem>>, %arg3: memref<1x1024xf32, #tpu.memory_space<vmem>>, %arg4: memref<1024x1024xbf16, #tpu.memory_space<vmem>>, %arg5: memref<1x1024xf32, #tpu.memory_space<vmem>>, %arg6: memref<1024x256xbf16, #tpu.memory_space<vmem>>, %arg7: memref<1x256xf32, #tpu.memory_space<vmem>>, %arg8: memref<256x128xbf16, #tpu.memory_space<vmem>>, %arg9: memref<1x128xf32, #tpu.memory_space<vmem>>, %arg10: memref<16x128xf32, #tpu.memory_space<vmem>>, %arg11: memref<16x128xf32, #tpu.memory_space<vmem>>, %arg12: memref<1x8x128xf32, #tpu.memory_space<vmem>>) attributes {dimension_semantics = [#tpu.dimension_semantics<parallel>], iteration_bounds = array<i64: 1>, scalar_prefetch = 0 : i64, scratch_operands = 0 : i64, tpu.core_type = #tpu.core_type<tc>, window_params = [{transform_indices = @transform_0, window_bounds = array<i64: 16, 128>}, {pipeline_mode = #tpu.pipeline_mode<synchronous>, transform_indices = @transform_1, window_bounds = array<i64: 128, 1024>}, {pipeline_mode = #tpu.pipeline_mode<synchronous>, transform_indices = @transform_2, window_bounds = array<i64: 1, 1024>}, {pipeline_mode = #tpu.pipeline_mode<synchronous>, transform_indices = @transform_3, window_bounds = array<i64: 1024, 1024>}, {pipeline_mode = #tpu.pipeline_mode<synchronous>, transform_indices = @transform_4, window_bounds = array<i64: 1, 1024>}, {pipeline_mode = #tpu.pipeline_mode<synchronous>, transform_indices = @transform_5, window_bounds = array<i64: 1024, 256>}, {pipeline_mode = #tpu.pipeline_mode<synchronous>, transform_indices = @transform_6, window_bounds = array<i64: 1, 256>}, {pipeline_mode = #tpu.pipeline_mode<synchronous>, transform_indices = @transform_7, window_bounds = array<i64: 256, 128>}, {pipeline_mode = #tpu.pipeline_mode<synchronous>, transform_indices = @transform_8, window_bounds = array<i64: 1, 128>}, {transform_indices = @transform_9, window_bounds = array<i64: 16, 128>}, {transform_indices = @transform_10, window_bounds = array<i64: 16, 128>}, {transform_indices = @transform_11, window_bounds = array<i64: 1, 8, 128>}]} {
    %c0 = arith.constant 0 : index
    %c0_0 = arith.constant 0 : index
    %0 = vector.load %arg1[%c0, %c0_0] : memref<16x128xf32, #tpu.memory_space<vmem>>, vector<16x128xf32>
    %1 = arith.truncf %0 : vector<16x128xf32> to vector<16x128xbf16>
    %c0_1 = arith.constant 0 : index
    %c0_2 = arith.constant 0 : index
    %2 = vector.load %arg2[%c0_1, %c0_2] : memref<128x1024xbf16, #tpu.memory_space<vmem>>, vector<128x1024xbf16>
    %cst = arith.constant dense<0.000000e+00> : vector<16x1024xf32>
    %3 = tpu.matmul %1, %2, %cst {dimension_numbers = #tpu.dot_dimension_numbers<[1], [0], [0], [1], [0, 0, 1, 1], [], []>} : vector<16x128xbf16>, vector<128x1024xbf16>, vector<16x1024xf32> -> vector<16x1024xf32>
    %c0_3 = arith.constant 0 : index
    %c0_4 = arith.constant 0 : index
    %4 = vector.load %arg3[%c0_3, %c0_4] : memref<1x1024xf32, #tpu.memory_space<vmem>>, vector<1x1024xf32>
    %5 = vector.broadcast %4 : vector<1x1024xf32> to vector<16x1024xf32>
    %6 = arith.addf %3, %5 : vector<16x1024xf32>
    %cst_5 = arith.constant 0.000000e+00 : f32
    %7 = vector.broadcast %cst_5 : f32 to vector<16x1024xf32>
    %8 = arith.maximumf %6, %7 : vector<16x1024xf32>
    %9 = arith.truncf %8 : vector<16x1024xf32> to vector<16x1024xbf16>
    %c0_6 = arith.constant 0 : index
    %c0_7 = arith.constant 0 : index
    %10 = vector.load %arg4[%c0_6, %c0_7] : memref<1024x1024xbf16, #tpu.memory_space<vmem>>, vector<1024x1024xbf16>
    %cst_8 = arith.constant dense<0.000000e+00> : vector<16x1024xf32>
    %11 = tpu.matmul %9, %10, %cst_8 {dimension_numbers = #tpu.dot_dimension_numbers<[1], [0], [0], [1], [0, 0, 1, 1], [], []>} : vector<16x1024xbf16>, vector<1024x1024xbf16>, vector<16x1024xf32> -> vector<16x1024xf32>
    %c0_9 = arith.constant 0 : index
    %c0_10 = arith.constant 0 : index
    %12 = vector.load %arg5[%c0_9, %c0_10] : memref<1x1024xf32, #tpu.memory_space<vmem>>, vector<1x1024xf32>
    %13 = vector.broadcast %12 : vector<1x1024xf32> to vector<16x1024xf32>
    %14 = arith.addf %11, %13 : vector<16x1024xf32>
    %cst_11 = arith.constant 0.000000e+00 : f32
    %15 = vector.broadcast %cst_11 : f32 to vector<16x1024xf32>
    %16 = arith.maximumf %14, %15 : vector<16x1024xf32>
    %17 = arith.truncf %16 : vector<16x1024xf32> to vector<16x1024xbf16>
    %c0_12 = arith.constant 0 : index
    %c0_13 = arith.constant 0 : index
    %18 = vector.load %arg6[%c0_12, %c0_13] : memref<1024x256xbf16, #tpu.memory_space<vmem>>, vector<1024x256xbf16>
    %cst_14 = arith.constant dense<0.000000e+00> : vector<16x256xf32>
    %19 = tpu.matmul %17, %18, %cst_14 {dimension_numbers = #tpu.dot_dimension_numbers<[1], [0], [0], [1], [0, 0, 1, 1], [], []>} : vector<16x1024xbf16>, vector<1024x256xbf16>, vector<16x256xf32> -> vector<16x256xf32>
    %c0_15 = arith.constant 0 : index
    %c0_16 = arith.constant 0 : index
    %20 = vector.load %arg7[%c0_15, %c0_16] : memref<1x256xf32, #tpu.memory_space<vmem>>, vector<1x256xf32>
    %21 = vector.broadcast %20 : vector<1x256xf32> to vector<16x256xf32>
    %22 = arith.addf %19, %21 : vector<16x256xf32>
    %cst_17 = arith.constant 0.000000e+00 : f32
    %23 = vector.broadcast %cst_17 : f32 to vector<16x256xf32>
    %24 = arith.maximumf %22, %23 : vector<16x256xf32>
    %25 = arith.truncf %24 : vector<16x256xf32> to vector<16x256xbf16>
    %c0_18 = arith.constant 0 : index
    %c0_19 = arith.constant 0 : index
    %26 = vector.load %arg8[%c0_18, %c0_19] : memref<256x128xbf16, #tpu.memory_space<vmem>>, vector<256x128xbf16>
    %cst_20 = arith.constant dense<0.000000e+00> : vector<16x128xf32>
    %27 = tpu.matmul %25, %26, %cst_20 {dimension_numbers = #tpu.dot_dimension_numbers<[1], [0], [0], [1], [0, 0, 1, 1], [], []>} : vector<16x256xbf16>, vector<256x128xbf16>, vector<16x128xf32> -> vector<16x128xf32>
    %c0_21 = arith.constant 0 : index
    %c0_22 = arith.constant 0 : index
    %28 = vector.load %arg9[%c0_21, %c0_22] : memref<1x128xf32, #tpu.memory_space<vmem>>, vector<1x128xf32>
    %29 = vector.broadcast %28 : vector<1x128xf32> to vector<16x128xf32>
    %30 = arith.addf %27, %29 : vector<16x128xf32>
    %c0_23 = arith.constant 0 : index
    %c0_24 = arith.constant 0 : index
    %31 = vector.load %arg11[%c0_23, %c0_24] : memref<16x128xf32, #tpu.memory_space<vmem>>, vector<16x128xf32>
    tpu.vector_store %arg11[%c0_23, %c0_24], %30 {strides = array<i32>} : memref<16x128xf32, #tpu.memory_space<vmem>>, vector<16x128xf32>,
    %32 = tpu.iota {dimensions = array<i32: 0>} : vector<16x128xi32>
    %c16_i32 = arith.constant 16 : i32
    %33 = arith.muli %arg0, %c16_i32 : i32
    %34 = vector.broadcast %33 : i32 to vector<16x128xi32>
    %35 = arith.addi %32, %34 : vector<16x128xi32>
    %c2_i32 = arith.constant 2 : i32
    %36 = vector.broadcast %c2_i32 : i32 to vector<16x128xi32>
    %37 = arith.cmpi slt, %35, %36 : vector<16x128xi32>
    %c0_25 = arith.constant 0 : index
    %c0_26 = arith.constant 0 : index
    %38 = vector.load %arg10[%c0_25, %c0_26] : memref<16x128xf32, #tpu.memory_space<vmem>>, vector<16x128xf32>
    %39 = arith.subf %30, %38 : vector<16x128xf32>
    %cst_27 = arith.constant 0.000000e+00 : f32
    %40 = vector.broadcast %cst_27 : f32 to vector<16x128xf32>
    %41 = arith.select %37, %39, %40 : vector<16x128xi1>, vector<16x128xf32>
    %42 = arith.mulf %41, %41 : vector<16x128xf32>
    %43 = vector.shape_cast %42 : vector<16x128xf32> to vector<1x16x128xf32>
    %cst_28 = arith.constant dense<0.000000e+00> : vector<1xf32>
    %44 = vector.multi_reduction <add>, %43, %cst_28 [1, 2] : vector<1x16x128xf32> to vector<1xf32>
    %45 = vector.shape_cast %44 : vector<1xf32> to vector<1x1x1xf32>
    %46 = vector.extract %45[0, 0, 0] : f32 from vector<1x1x1xf32>
    %47 = vector.broadcast %46 : f32 to vector<1x8x128xf32>
    %c0_29 = arith.constant 0 : index
    %c0_30 = arith.constant 0 : index
    %c0_31 = arith.constant 0 : index
    %48 = vector.load %arg12[%c0_29, %c0_30, %c0_31] : memref<1x8x128xf32, #tpu.memory_space<vmem>>, vector<1x8x128xf32>
    tpu.vector_store %arg12[%c0_29, %c0_30, %c0_31], %47 {strides = array<i32>} : memref<1x8x128xf32, #tpu.memory_space<vmem>>, vector<1x8x128xf32>,
    return
  }
  func.func @transform_0(%arg0: i32) -> (i32, i32) {
    %c0_i32 = arith.constant 0 : i32
    %c0_i32_0 = arith.constant 0 : i32
    return %arg0, %c0_i32 : i32, i32
  }
  func.func @transform_1(%arg0: i32) -> (i32, i32) {
    %c0_i32 = arith.constant 0 : i32
    %c0_i32_0 = arith.constant 0 : i32
    %c0_i32_1 = arith.constant 0 : i32
    return %c0_i32, %c0_i32_0 : i32, i32
  }
  func.func @transform_2(%arg0: i32) -> (i32, i32) {
    %c0_i32 = arith.constant 0 : i32
    %c0_i32_0 = arith.constant 0 : i32
    %c0_i32_1 = arith.constant 0 : i32
    return %c0_i32, %c0_i32_0 : i32, i32
  }
  func.func @transform_3(%arg0: i32) -> (i32, i32) {
    %c0_i32 = arith.constant 0 : i32
    %c0_i32_0 = arith.constant 0 : i32
    %c0_i32_1 = arith.constant 0 : i32
    return %c0_i32, %c0_i32_0 : i32, i32
  }
  func.func @transform_4(%arg0: i32) -> (i32, i32) {
    %c0_i32 = arith.constant 0 : i32
    %c0_i32_0 = arith.constant 0 : i32
    %c0_i32_1 = arith.constant 0 : i32
    return %c0_i32, %c0_i32_0 : i32, i32
  }
  func.func @transform_5(%arg0: i32) -> (i32, i32) {
    %c0_i32 = arith.constant 0 : i32
    %c0_i32_0 = arith.constant 0 : i32
    %c0_i32_1 = arith.constant 0 : i32
    return %c0_i32, %c0_i32_0 : i32, i32
  }
  func.func @transform_6(%arg0: i32) -> (i32, i32) {
    %c0_i32 = arith.constant 0 : i32
    %c0_i32_0 = arith.constant 0 : i32
    %c0_i32_1 = arith.constant 0 : i32
    return %c0_i32, %c0_i32_0 : i32, i32
  }
  func.func @transform_7(%arg0: i32) -> (i32, i32) {
    %c0_i32 = arith.constant 0 : i32
    %c0_i32_0 = arith.constant 0 : i32
    %c0_i32_1 = arith.constant 0 : i32
    return %c0_i32, %c0_i32_0 : i32, i32
  }
  func.func @transform_8(%arg0: i32) -> (i32, i32) {
    %c0_i32 = arith.constant 0 : i32
    %c0_i32_0 = arith.constant 0 : i32
    %c0_i32_1 = arith.constant 0 : i32
    return %c0_i32, %c0_i32_0 : i32, i32
  }
  func.func @transform_9(%arg0: i32) -> (i32, i32) {
    %c0_i32 = arith.constant 0 : i32
    %c0_i32_0 = arith.constant 0 : i32
    return %arg0, %c0_i32 : i32, i32
  }
  func.func @transform_10(%arg0: i32) -> (i32, i32) {
    %c0_i32 = arith.constant 0 : i32
    %c0_i32_0 = arith.constant 0 : i32
    return %arg0, %c0_i32 : i32, i32
  }
  func.func @transform_11(%arg0: i32) -> (i32, i32, i32) {
    %c0_i32 = arith.constant 0 : i32
    %c0_i32_0 = arith.constant 0 : i32
    %c0_i32_1 = arith.constant 0 : i32
    return %arg0, %c0_i32, %c0_i32_0 : i32, i32, i32
  }
}

</mosaic_0001>

<llo_original>
// kernel: wireless_loc_fcnn_forward.1
$region0: #{wireless_loc_fcnn_forward.1}
  #allocation0 [shape = 'u32[]', space=smem, size = 0x4, offset = 0x4, fixed_abs, tag = 'smem constant byte address 0x4 - core index']
  #allocation1 [shape = 'u32[144,128]{1,0:T(1,128)}', space=vmem, size = 0x12000, scoped, tag = 'internal scratch']
  %s0 = inlined_call_operand.vmem [shape: f32[16,128], index: 0, kind: input, shape index: {}]
  %s1 = inlined_call_operand.hbm [shape: bf16[128,1024], index: 1, kind: input, shape index: {}]
  %s2 = inlined_call_operand.hbm [shape: f32[1,1024], index: 2, kind: input, shape index: {}]
  %s3 = inlined_call_operand.hbm [shape: bf16[1024,1024], index: 3, kind: input, shape index: {}]
  %s4 = inlined_call_operand.hbm [shape: f32[1,1024], index: 4, kind: input, shape index: {}]
  %s5 = inlined_call_operand.hbm [shape: bf16[1024,256], index: 5, kind: input, shape index: {}]
  %s6 = inlined_call_operand.hbm [shape: f32[1,256], index: 6, kind: input, shape index: {}]
  %s7 = inlined_call_operand.hbm [shape: bf16[256,128], index: 7, kind: input, shape index: {}]
  %s8 = inlined_call_operand.hbm [shape: f32[1,128], index: 8, kind: input, shape index: {}]
  %s9 = inlined_call_operand.vmem [shape: f32[16,128], index: 9, kind: input, shape index: {}]
  %s10 = inlined_call_operand.vmem [shape: f32[16,128], index: 10, kind: output, shape index: {0}]
  %s11 = inlined_call_operand.vmem [shape: f32[1,8,128], index: 11, kind: output, shape index: {1}]
  %12 = xla_tuple %s10, %s11
  %s13 = sld [smem:[#allocation0]]
  $region90: #{wireless_loc_fcnn_forward.1} parent=0
    _
  %s15 = ssub.s32 1, %s13
  %s16 = scalar_select 0, %s15, %s13
  $region1: #{wireless_loc_fcnn_forward.1} parent=0
    #allocation2 [shape = 'u8[262144]{0}', space=vmem, size = 0x40000, scoped, tag = 'input window, operand 1, single buffered']
    #allocation3 [shape = 's32[1]{0}', space=sflag, size = 0x4, scoped, tag = 'scoped memory for wireless_loc_fcnn_forward.1']
    #allocation4 [shape = 'u8[4096]{0}', space=vmem, size = 0x1000, scoped, tag = 'input window, operand 2, single buffered']
    #allocation5 [shape = 's32[1]{0}', space=sflag, size = 0x4, scoped, tag = 'scoped memory for wireless_loc_fcnn_forward.1']
    #allocation6 [shape = 'u8[2097152]{0}', space=vmem, size = 0x200000, scoped, tag = 'input window, operand 3, single buffered']
    #allocation7 [shape = 'u8[4096]{0}', space=vmem, size = 0x1000, scoped, tag = 'input window, operand 4, single buffered']
    #allocation8 [shape = 's32[1]{0}', space=sflag, size = 0x4, scoped, tag = 'scoped memory for wireless_loc_fcnn_forward.1']
    #allocation9 [shape = 'u8[524288]{0}', space=vmem, size = 0x80000, scoped, tag = 'input window, operand 5, single buffered']
    #allocation10 [shape = 'u8[1024]{0}', space=vmem, size = 0x400, scoped, tag = 'input window, operand 6, single buffered']
    #allocation11 [shape = 's32[1]{0}', space=sflag, size = 0x4, scoped, tag = 'scoped memory for wireless_loc_fcnn_forward.1']
    #allocation12 [shape = 'u8[65536]{0}', space=vmem, size = 0x10000, scoped, tag = 'input window, operand 7, single buffered']
    #allocation13 [shape = 'u8[512]{0}', space=vmem, size = 0x400, scoped, tag = 'input window, operand 8, single buffered']
    #allocation14 [shape = 's32[1]{0}', space=sflag, size = 0x4, scoped, tag = 'scoped memory for wireless_loc_fcnn_forward.1']
    %17 = vsyncpa [#allocation3], 0
    %18 = vsyncpa [#allocation5], 0
    %19 = vsyncpa [#allocation8], 0
    %20 = vsyncpa [#allocation11], 0
    %21 = vsyncpa [#allocation14], 0
    // Predicated region
    $region2: #{wireless_loc_fcnn_forward.1} parent=1 // pred_check
      _
    $region3: #{wireless_loc_fcnn_forward.1} parent=1 // pred_check_branch
      %23 = sbr.rel (0) target = $region5
    $region4: #{wireless_loc_fcnn_forward.1} parent=1 // pred_region
      _
    $region5: #{wireless_loc_fcnn_forward.1} parent=1 // pred_fallthru
      _
    // Predicated region
    $region6: #{wireless_loc_fcnn_forward.1} parent=1 // pred_check
      _
    $region7: #{wireless_loc_fcnn_forward.1} parent=1 // pred_check_branch
      %25 = sbr.rel (0) target = $region9
    $region8: #{wireless_loc_fcnn_forward.1} parent=1 // pred_region
      %s27 = ssub.s32 8192, 8192
      %28 = vsyncadd [#allocation3], %s27
      %s29 = sshll.u32 [#allocation2], 4
      %s30 = int_to_ptr.vmem [resolvable:$true] %s29
      %35 = dma.hbm_to_vmem [thread:$0]  %s1, 8192, %s30, [#allocation3], 512, 512, 32
    $region9: #{wireless_loc_fcnn_forward.1} parent=1 // pred_fallthru
      _
    // Predicated region
    $region10: #{wireless_loc_fcnn_forward.1} parent=1 // pred_check
      _
    $region11: #{wireless_loc_fcnn_forward.1} parent=1 // pred_check_branch
      %37 = sbr.rel (0) target = $region13
    $region12: #{wireless_loc_fcnn_forward.1} parent=1 // pred_region
      %s39 = ssub.s32 128, 128
      %40 = vsyncadd [#allocation5], %s39
      %s42 = sshll.u32 [#allocation4], 4
      %s43 = int_to_ptr.vmem [resolvable:$true] %s42
      %45 = dma.hbm_to_vmem [thread:$0]  %s2, 128, %s43, [#allocation5]
    $region13: #{wireless_loc_fcnn_forward.1} parent=1 // pred_fallthru
      _
    // Predicated region
    $region14: #{wireless_loc_fcnn_forward.1} parent=1 // pred_check
      _
    $region15: #{wireless_loc_fcnn_forward.1} parent=1 // pred_check_branch
      %47 = sbr.rel (0) target = $region17
    $region16: #{wireless_loc_fcnn_forward.1} parent=1 // pred_region
      %s49 = ssub.s32 65536, 65536
      %50 = vsyncadd [#allocation5], %s49
      %s51 = sshll.u32 [#allocation6], 4
      %s52 = int_to_ptr.vmem [resolvable:$true] %s51
      %57 = dma.hbm_to_vmem [thread:$0]  %s3, 65536, %s52, [#allocation5], 512, 512, 32
    $region17: #{wireless_loc_fcnn_forward.1} parent=1 // pred_fallthru
      _
    // Predicated region
    $region18: #{wireless_loc_fcnn_forward.1} parent=1 // pred_check
      _
    $region19: #{wireless_loc_fcnn_forward.1} parent=1 // pred_check_branch
      %59 = sbr.rel (0) target = $region21
    $region20: #{wireless_loc_fcnn_forward.1} parent=1 // pred_region
      %s61 = ssub.s32 128, 128
      %62 = vsyncadd [#allocation8], %s61
      %s64 = sshll.u32 [#allocation7], 4
      %s65 = int_to_ptr.vmem [resolvable:$true] %s64
      %67 = dma.hbm_to_vmem [thread:$0]  %s4, 128, %s65, [#allocation8]
    $region21: #{wireless_loc_fcnn_forward.1} parent=1 // pred_fallthru
      _
    // Predicated region
    $region22: #{wireless_loc_fcnn_forward.1} parent=1 // pred_check
      _
    $region23: #{wireless_loc_fcnn_forward.1} parent=1 // pred_check_branch
      %69 = sbr.rel (0) target = $region25
    $region24: #{wireless_loc_fcnn_forward.1} parent=1 // pred_region
      %s71 = ssub.s32 16384, 16384
      %72 = vsyncadd [#allocation8], %s71
      %s73 = sshll.u32 [#allocation9], 4
      %s74 = int_to_ptr.vmem [resolvable:$true] %s73
      %79 = dma.hbm_to_vmem [thread:$0]  %s5, 16384, %s74, [#allocation8], 128, 128, 8
    $region25: #{wireless_loc_fcnn_forward.1} parent=1 // pred_fallthru
      _
    // Predicated region
    $region26: #{wireless_loc_fcnn_forward.1} parent=1 // pred_check
      _
    $region27: #{wireless_loc_fcnn_forward.1} parent=1 // pred_check_branch
      %81 = sbr.rel (0) target = $region29
    $region28: #{wireless_loc_fcnn_forward.1} parent=1 // pred_region
      %s83 = ssub.s32 32, 32
      %84 = vsyncadd [#allocation11], %s83
      %s86 = sshll.u32 [#allocation10], 4
      %s87 = int_to_ptr.vmem [resolvable:$true] %s86
      %89 = dma.hbm_to_vmem [thread:$0]  %s6, 32, %s87, [#allocation11]
    $region29: #{wireless_loc_fcnn_forward.1} parent=1 // pred_fallthru
      _
    // Predicated region
    $region30: #{wireless_loc_fcnn_forward.1} parent=1 // pred_check
      _
    $region31: #{wireless_loc_fcnn_forward.1} parent=1 // pred_check_branch
      %91 = sbr.rel (0) target = $region33
    $region32: #{wireless_loc_fcnn_forward.1} parent=1 // pred_region
      %s93 = ssub.s32 2048, 2048
      %94 = vsyncadd [#allocation11], %s93
      %s95 = sshll.u32 [#allocation12], 4
      %s96 = int_to_ptr.vmem [resolvable:$true] %s95
      %101 = dma.hbm_to_vmem [thread:$0]  %s7, 2048, %s96, [#allocation11], 64, 64, 4
    $region33: #{wireless_loc_fcnn_forward.1} parent=1 // pred_fallthru
      _
    // Predicated region
    $region34: #{wireless_loc_fcnn_forward.1} parent=1 // pred_check
      _
    $region35: #{wireless_loc_fcnn_forward.1} parent=1 // pred_check_branch
      %103 = sbr.rel (0) target = $region37
    $region36: #{wireless_loc_fcnn_forward.1} parent=1 // pred_region
      %s105 = ssub.s32 16, 16
      %106 = vsyncadd [#allocation14], %s105
      %s108 = sshll.u32 [#allocation13], 4
      %s109 = int_to_ptr.vmem [resolvable:$true] %s108
      %111 = dma.hbm_to_vmem [thread:$0]  %s8, 16, %s109, [#allocation14]
    $region37: #{wireless_loc_fcnn_forward.1} parent=1 // pred_fallthru
      _
    // Predicated region
    $region38: #{wireless_loc_fcnn_forward.1} parent=1 // pred_check
      _
    $region39: #{wireless_loc_fcnn_forward.1} parent=1 // pred_check_branch
      %113 = sbr.rel (0) target = $region41
    $region40: #{wireless_loc_fcnn_forward.1} parent=1 // pred_region
      _
    $region41: #{wireless_loc_fcnn_forward.1} parent=1 // pred_fallthru
      _
    // Predicated region
    $region42: #{wireless_loc_fcnn_forward.1} parent=1 // pred_check
      _
    $region43: #{wireless_loc_fcnn_forward.1} parent=1 // pred_check_branch
      %115 = sbr.rel (0) target = $region45
    $region44: #{wireless_loc_fcnn_forward.1} parent=1 // pred_region
      %116 = dma.done [#allocation3], 8192
    $region45: #{wireless_loc_fcnn_forward.1} parent=1 // pred_fallthru
      _
    // Predicated region
    $region46: #{wireless_loc_fcnn_forward.1} parent=1 // pred_check
      _
    $region47: #{wireless_loc_fcnn_forward.1} parent=1 // pred_check_branch
      %118 = sbr.rel (0) target = $region49
    $region48: #{wireless_loc_fcnn_forward.1} parent=1 // pred_region
      %119 = dma.done [#allocation5], 128
    $region49: #{wireless_loc_fcnn_forward.1} parent=1 // pred_fallthru
      _
    // Predicated region
    $region50: #{wireless_loc_fcnn_forward.1} parent=1 // pred_check
      _
    $region51: #{wireless_loc_fcnn_forward.1} parent=1 // pred_check_branch
      %121 = sbr.rel (0) target = $region53
    $region52: #{wireless_loc_fcnn_forward.1} parent=1 // pred_region
      %122 = dma.done [#allocation5], 65536
    $region53: #{wireless_loc_fcnn_forward.1} parent=1 // pred_fallthru
      _
    // Predicated region
    $region54: #{wireless_loc_fcnn_forward.1} parent=1 // pred_check
      _
    $region55: #{wireless_loc_fcnn_forward.1} parent=1 // pred_check_branch
      %124 = sbr.rel (0) target = $region57
    $region56: #{wireless_loc_fcnn_forward.1} parent=1 // pred_region
      %125 = dma.done [#allocation8], 128
    $region57: #{wireless_loc_fcnn_forward.1} parent=1 // pred_fallthru
      _
    // Predicated region
    $region58: #{wireless_loc_fcnn_forward.1} parent=1 // pred_check
      _
    $region59: #{wireless_loc_fcnn_forward.1} parent=1 // pred_check_branch
      %127 = sbr.rel (0) target = $region61
    $region60: #{wireless_loc_fcnn_forward.1} parent=1 // pred_region
      %128 = dma.done [#allocation8], 16384
    $region61: #{wireless_loc_fcnn_forward.1} parent=1 // pred_fallthru
      _
    // Predicated region
    $region62: #{wireless_loc_fcnn_forward.1} parent=1 // pred_check
      _
    $region63: #{wireless_loc_fcnn_forward.1} parent=1 // pred_check_branch
      %130 = sbr.rel (0) target = $region65
    $region64: #{wireless_loc_fcnn_forward.1} parent=1 // pred_region
      %131 = dma.done [#allocation11], 32
    $region65: #{wireless_loc_fcnn_forward.1} parent=1 // pred_fallthru
      _
    // Predicated region
    $region66: #{wireless_loc_fcnn_forward.1} parent=1 // pred_check
      _
    $region67: #{wireless_loc_fcnn_forward.1} parent=1 // pred_check_branch
      %133 = sbr.rel (0) target = $region69
    $region68: #{wireless_loc_fcnn_forward.1} parent=1 // pred_region
      %134 = dma.done [#allocation11], 2048
    $region69: #{wireless_loc_fcnn_forward.1} parent=1 // pred_fallthru
      _
    // Predicated region
    $region70: #{wireless_loc_fcnn_forward.1} parent=1 // pred_check
      _
    $region71: #{wireless_loc_fcnn_forward.1} parent=1 // pred_check_branch
      %136 = sbr.rel (0) target = $region73
    $region72: #{wireless_loc_fcnn_forward.1} parent=1 // pred_region
      %137 = dma.done [#allocation14], 16
    $region73: #{wireless_loc_fcnn_forward.1} parent=1 // pred_fallthru
      _
    %v139 = vld [vmem:[%s0] sm:$0xff]
    %v140 = vld [vmem:[%s0 + $0x8] sm:$0xff]
    %v141 = vpack.c.bf16 %v140, %v139
    %v142 = vld [vmem:[#allocation2] sm:$0xff]
    %v143 = vld [vmem:[#allocation2 + $0x8] sm:$0xff]
    %v144 = vld [vmem:[#allocation2 + $0x10] sm:$0xff]
    %v145 = vld [vmem:[#allocation2 + $0x18] sm:$0xff]
    %v146 = vld [vmem:[#allocation2 + $0x20] sm:$0xff]
    %v147 = vld [vmem:[#allocation2 + $0x28] sm:$0xff]
    %v148 = vld [vmem:[#allocation2 + $0x30] sm:$0xff]
    %v149 = vld [vmem:[#allocation2 + $0x38] sm:$0xff]
    %v150 = vld [vmem:[#allocation2 + $0x40] sm:$0xff]
    %v151 = vld [vmem:[#allocation2 + $0x48] sm:$0xff]
    %v152 = vld [vmem:[#allocation2 + $0x50] sm:$0xff]
    %v153 = vld [vmem:[#allocation2 + $0x58] sm:$0xff]
    %v154 = vld [vmem:[#allocation2 + $0x60] sm:$0xff]
    %v155 = vld [vmem:[#allocation2 + $0x68] sm:$0xff]
    %v156 = vld [vmem:[#allocation2 + $0x70] sm:$0xff]
    %v157 = vld [vmem:[#allocation2 + $0x78] sm:$0xff]
    %v158 = vld [vmem:[#allocation2 + $0x80] sm:$0xff]
    %v159 = vld [vmem:[#allocation2 + $0x88] sm:$0xff]
    %v160 = vld [vmem:[#allocation2 + $0x90] sm:$0xff]
    %v161 = vld [vmem:[#allocation2 + $0x98] sm:$0xff]
    %v162 = vld [vmem:[#allocation2 + $0xa0] sm:$0xff]
    %v163 = vld [vmem:[#allocation2 + $0xa8] sm:$0xff]
    %v164 = vld [vmem:[#allocation2 + $0xb0] sm:$0xff]
    %v165 = vld [vmem:[#allocation2 + $0xb8] sm:$0xff]
    %v166 = vld [vmem:[#allocation2 + $0xc0] sm:$0xff]
    %v167 = vld [vmem:[#allocation2 + $0xc8] sm:$0xff]
    %v168 = vld [vmem:[#allocation2 + $0xd0] sm:$0xff]
    %v169 = vld [vmem:[#allocation2 + $0xd8] sm:$0xff]
    %v170 = vld [vmem:[#allocation2 + $0xe0] sm:$0xff]
    %v171 = vld [vmem:[#allocation2 + $0xe8] sm:$0xff]
    %v172 = vld [vmem:[#allocation2 + $0xf0] sm:$0xff]
    %v173 = vld [vmem:[#allocation2 + $0xf8] sm:$0xff]
    %v174 = vld [vmem:[#allocation2 + $0x100] sm:$0xff]
    %v175 = vld [vmem:[#allocation2 + $0x108] sm:$0xff]
    %v176 = vld [vmem:[#allocation2 + $0x110] sm:$0xff]
    %v177 = vld [vmem:[#allocation2 + $0x118] sm:$0xff]
    %v178 = vld [vmem:[#allocation2 + $0x120] sm:$0xff]
    %v179 = vld [vmem:[#allocation2 + $0x128] sm:$0xff]
    %v180 = vld [vmem:[#allocation2 + $0x130] sm:$0xff]
    %v181 = vld [vmem:[#allocation2 + $0x138] sm:$0xff]
    %v182 = vld [vmem:[#allocation2 + $0x140] sm:$0xff]
    %v183 = vld [vmem:[#allocation2 + $0x148] sm:$0xff]
    %v184 = vld [vmem:[#allocation2 + $0x150] sm:$0xff]
    %v185 = vld [vmem:[#allocation2 + $0x158] sm:$0xff]
    %v186 = vld [vmem:[#allocation2 + $0x160] sm:$0xff]
    %v187 = vld [vmem:[#allocation2 + $0x168] sm:$0xff]
    %v188 = vld [vmem:[#allocation2 + $0x170] sm:$0xff]
    %v189 = vld [vmem:[#allocation2 + $0x178] sm:$0xff]
    %v190 = vld [vmem:[#allocation2 + $0x180] sm:$0xff]
    %v191 = vld [vmem:[#allocation2 + $0x188] sm:$0xff]
    %v192 = vld [vmem:[#allocation2 + $0x190] sm:$0xff]
    %v193 = vld [vmem:[#allocation2 + $0x198] sm:$0xff]
    %v194 = vld [vmem:[#allocation2 + $0x1a0] sm:$0xff]
    %v195 = vld [vmem:[#allocation2 + $0x1a8] sm:$0xff]
    %v196 = vld [vmem:[#allocation2 + $0x1b0] sm:$0xff]
    %v197 = vld [vmem:[#allocation2 + $0x1b8] sm:$0xff]
    %v198 = vld [vmem:[#allocation2 + $0x1c0] sm:$0xff]
    %v199 = vld [vmem:[#allocation2 + $0x1c8] sm:$0xff]
    %v200 = vld [vmem:[#allocation2 + $0x1d0] sm:$0xff]
    %v201 = vld [vmem:[#allocation2 + $0x1d8] sm:$0xff]
    %v202 = vld [vmem:[#allocation2 + $0x1e0] sm:$0xff]
    %v203 = vld [vmem:[#allocation2 + $0x1e8] sm:$0xff]
    %v204 = vld [vmem:[#allocation2 + $0x1f0] sm:$0xff]
    %v205 = vld [vmem:[#allocation2 + $0x1f8] sm:$0xff]
    %v206 = vld [vmem:[#allocation4] sm:$0xff]
    %v208 = vlaneseq
    %v209 = vshrl.u32 %v208, 7
    %v210 = vsub.s32 0, %v209
    %v211 = vrot.slane %v206, %v210
    %v212 = vlaneseq
    %v213 = vshrl.u32 %v212, 7
    %v214 = vsub.s32 1, %v213
    %v215 = vrot.slane %v206, %v214
    %v216 = vlaneseq
    %v217 = vshrl.u32 %v216, 7
    %v218 = vsub.s32 2, %v217
    %v219 = vrot.slane %v206, %v218
    %v220 = vlaneseq
    %v221 = vshrl.u32 %v220, 7
    %v222 = vsub.s32 3, %v221
    %v223 = vrot.slane %v206, %v222
    %v224 = vlaneseq
    %v225 = vshrl.u32 %v224, 7
    %v226 = vsub.s32 4, %v225
    %v227 = vrot.slane %v206, %v226
    %v228 = vlaneseq
    %v229 = vshrl.u32 %v228, 7
    %v230 = vsub.s32 5, %v229
    %v231 = vrot.slane %v206, %v230
    %v232 = vlaneseq
    %v233 = vshrl.u32 %v232, 7
    %v234 = vsub.s32 6, %v233
    %v235 = vrot.slane %v206, %v234
    %v236 = vlaneseq
    %v237 = vshrl.u32 %v236, 7
    %v238 = vsub.s32 7, %v237
    %v239 = vrot.slane %v206, %v238
    %v312 = vunpack.c.l.b16 %v142
    %v313 = vunpack.c.h.b16 %v142
    %v314 = vunpack.c.l.b16 %v143
    %v315 = vunpack.c.h.b16 %v143
    %v316 = vunpack.c.l.b16 %v144
    %v317 = vunpack.c.h.b16 %v144
    %v318 = vunpack.c.l.b16 %v145
    %v319 = vunpack.c.h.b16 %v145
    %v320 = vunpack.c.l.b16 %v146
    %v321 = vunpack.c.h.b16 %v146
    %v322 = vunpack.c.l.b16 %v147
    %v323 = vunpack.c.h.b16 %v147
    %v324 = vunpack.c.l.b16 %v148
    %v325 = vunpack.c.h.b16 %v148
    %v326 = vunpack.c.l.b16 %v149
    %v327 = vunpack.c.h.b16 %v149
    %v328 = vunpack.c.l.b16 %v150
    %v329 = vunpack.c.h.b16 %v150
    %v330 = vunpack.c.l.b16 %v151
    %v331 = vunpack.c.h.b16 %v151
    %v332 = vunpack.c.l.b16 %v152
    %v333 = vunpack.c.h.b16 %v152
    %v334 = vunpack.c.l.b16 %v153
    %v335 = vunpack.c.h.b16 %v153
    %v336 = vunpack.c.l.b16 %v154
    %v337 = vunpack.c.h.b16 %v154
    %v338 = vunpack.c.l.b16 %v155
    %v339 = vunpack.c.h.b16 %v155
    %v340 = vunpack.c.l.b16 %v156
    %v341 = vunpack.c.h.b16 %v156
    %v342 = vunpack.c.l.b16 %v157
    %v343 = vunpack.c.h.b16 %v157
    %v344 = vunpack.c.l.b16 %v158
    %v345 = vunpack.c.h.b16 %v158
    %v346 = vunpack.c.l.b16 %v159
    %v347 = vunpack.c.h.b16 %v159
    %v348 = vunpack.c.l.b16 %v160
    %v349 = vunpack.c.h.b16 %v160
    %v350 = vunpack.c.l.b16 %v161
    %v351 = vunpack.c.h.b16 %v161
    %v352 = vunpack.c.l.b16 %v162
    %v353 = vunpack.c.h.b16 %v162
    %v354 = vunpack.c.l.b16 %v163
    %v355 = vunpack.c.h.b16 %v163
    %v356 = vunpack.c.l.b16 %v164
    %v357 = vunpack.c.h.b16 %v164
    %v358 = vunpack.c.l.b16 %v165
    %v359 = vunpack.c.h.b16 %v165
    %v360 = vunpack.c.l.b16 %v166
    %v361 = vunpack.c.h.b16 %v166
    %v362 = vunpack.c.l.b16 %v167
    %v363 = vunpack.c.h.b16 %v167
    %v364 = vunpack.c.l.b16 %v168
    %v365 = vunpack.c.h.b16 %v168
    %v366 = vunpack.c.l.b16 %v169
    %v367 = vunpack.c.h.b16 %v169
    %v368 = vunpack.c.l.b16 %v170
    %v369 = vunpack.c.h.b16 %v170
    %v370 = vunpack.c.l.b16 %v171
    %v371 = vunpack.c.h.b16 %v171
    %v372 = vunpack.c.l.b16 %v172
    %v373 = vunpack.c.h.b16 %v172
    %v374 = vunpack.c.l.b16 %v173
    %v375 = vunpack.c.h.b16 %v173
    %v376 = vunpack.c.l.b16 %v174
    %v377 = vunpack.c.h.b16 %v174
    %v378 = vunpack.c.l.b16 %v175
    %v379 = vunpack.c.h.b16 %v175
    %v380 = vunpack.c.l.b16 %v176
    %v381 = vunpack.c.h.b16 %v176
    %v382 = vunpack.c.l.b16 %v177
    %v383 = vunpack.c.h.b16 %v177
    %v384 = vunpack.c.l.b16 %v178
    %v385 = vunpack.c.h.b16 %v178
    %v386 = vunpack.c.l.b16 %v179
    %v387 = vunpack.c.h.b16 %v179
    %v388 = vunpack.c.l.b16 %v180
    %v389 = vunpack.c.h.b16 %v180
    %v390 = vunpack.c.l.b16 %v181
    %v391 = vunpack.c.h.b16 %v181
    %v392 = vunpack.c.l.b16 %v182
    %v393 = vunpack.c.h.b16 %v182
    %v394 = vunpack.c.l.b16 %v183
    %v395 = vunpack.c.h.b16 %v183
    %v396 = vunpack.c.l.b16 %v184
    %v397 = vunpack.c.h.b16 %v184
    %v398 = vunpack.c.l.b16 %v185
    %v399 = vunpack.c.h.b16 %v185
    %v400 = vunpack.c.l.b16 %v186
    %v401 = vunpack.c.h.b16 %v186
    %v402 = vunpack.c.l.b16 %v187
    %v403 = vunpack.c.h.b16 %v187
    %v404 = vunpack.c.l.b16 %v188
    %v405 = vunpack.c.h.b16 %v188
    %v406 = vunpack.c.l.b16 %v189
    %v407 = vunpack.c.h.b16 %v189
    %v408 = vunpack.c.l.b16 %v190
    %v409 = vunpack.c.h.b16 %v190
    %v410 = vunpack.c.l.b16 %v191
    %v411 = vunpack.c.h.b16 %v191
    %v412 = vunpack.c.l.b16 %v192
    %v413 = vunpack.c.h.b16 %v192
    %v414 = vunpack.c.l.b16 %v193
    %v415 = vunpack.c.h.b16 %v193
    %v416 = vunpack.c.l.b16 %v194
    %v417 = vunpack.c.h.b16 %v194
    %v418 = vunpack.c.l.b16 %v195
    %v419 = vunpack.c.h.b16 %v195
    %v420 = vunpack.c.l.b16 %v196
    %v421 = vunpack.c.h.b16 %v196
    %v422 = vunpack.c.l.b16 %v197
    %v423 = vunpack.c.h.b16 %v197
    %v424 = vunpack.c.l.b16 %v198
    %v425 = vunpack.c.h.b16 %v198
    %v426 = vunpack.c.l.b16 %v199
    %v427 = vunpack.c.h.b16 %v199
    %v428 = vunpack.c.l.b16 %v200
    %v429 = vunpack.c.h.b16 %v200
    %v430 = vunpack.c.l.b16 %v201
    %v431 = vunpack.c.h.b16 %v201
    %v432 = vunpack.c.l.b16 %v202
    %v433 = vunpack.c.h.b16 %v202
    %v434 = vunpack.c.l.b16 %v203
    %v435 = vunpack.c.h.b16 %v203
    %v436 = vunpack.c.l.b16 %v204
    %v437 = vunpack.c.h.b16 %v204
    %v438 = vunpack.c.l.b16 %v205
    %v439 = vunpack.c.h.b16 %v205
    %v440 = vpack.c.b16 %v320, %v312
    %v441 = vpack.c.b16 %v321, %v313
    %v442 = vpack.c.b16 %v322, %v314
    %v443 = vpack.c.b16 %v323, %v315
    %v444 = vpack.c.b16 %v324, %v316
    %v445 = vpack.c.b16 %v325, %v317
    %v446 = vpack.c.b16 %v326, %v318
    %v447 = vpack.c.b16 %v327, %v319
    %v448 = vpack.c.b16 %v336, %v328
    %v449 = vpack.c.b16 %v337, %v329
    %v450 = vpack.c.b16 %v338, %v330
    %v451 = vpack.c.b16 %v339, %v331
    %v452 = vpack.c.b16 %v340, %v332
    %v453 = vpack.c.b16 %v341, %v333
    %v454 = vpack.c.b16 %v342, %v334
    %v455 = vpack.c.b16 %v343, %v335
    %v456 = vpack.c.b16 %v352, %v344
    %v457 = vpack.c.b16 %v353, %v345
    %v458 = vpack.c.b16 %v354, %v346
    %v459 = vpack.c.b16 %v355, %v347
    %v460 = vpack.c.b16 %v356, %v348
    %v461 = vpack.c.b16 %v357, %v349
    %v462 = vpack.c.b16 %v358, %v350
    %v463 = vpack.c.b16 %v359, %v351
    %v464 = vpack.c.b16 %v368, %v360
    %v465 = vpack.c.b16 %v369, %v361
    %v466 = vpack.c.b16 %v370, %v362
    %v467 = vpack.c.b16 %v371, %v363
    %v468 = vpack.c.b16 %v372, %v364
    %v469 = vpack.c.b16 %v373, %v365
    %v470 = vpack.c.b16 %v374, %v366
    %v471 = vpack.c.b16 %v375, %v367
    %v472 = vpack.c.b16 %v384, %v376
    %v473 = vpack.c.b16 %v385, %v377
    %v474 = vpack.c.b16 %v386, %v378
    %v475 = vpack.c.b16 %v387, %v379
    %v476 = vpack.c.b16 %v388, %v380
    %v477 = vpack.c.b16 %v389, %v381
    %v478 = vpack.c.b16 %v390, %v382
    %v479 = vpack.c.b16 %v391, %v383
    %v480 = vpack.c.b16 %v400, %v392
    %v481 = vpack.c.b16 %v401, %v393
    %v482 = vpack.c.b16 %v402, %v394
    %v483 = vpack.c.b16 %v403, %v395
    %v484 = vpack.c.b16 %v404, %v396
    %v485 = vpack.c.b16 %v405, %v397
    %v486 = vpack.c.b16 %v406, %v398
    %v487 = vpack.c.b16 %v407, %v399
    %v488 = vpack.c.b16 %v416, %v408
    %v489 = vpack.c.b16 %v417, %v409
    %v490 = vpack.c.b16 %v418, %v410
    %v491 = vpack.c.b16 %v419, %v411
    %v492 = vpack.c.b16 %v420, %v412
    %v493 = vpack.c.b16 %v421, %v413
    %v494 = vpack.c.b16 %v422, %v414
    %v495 = vpack.c.b16 %v423, %v415
    %v496 = vpack.c.b16 %v432, %v424
    %v497 = vpack.c.b16 %v433, %v425
    %v498 = vpack.c.b16 %v434, %v426
    %v499 = vpack.c.b16 %v435, %v427
    %v500 = vpack.c.b16 %v436, %v428
    %v501 = vpack.c.b16 %v437, %v429
    %v502 = vpack.c.b16 %v438, %v430
    %v503 = vpack.c.b16 %v439, %v431
    %568 = vmatprep.subr.bf16.mxu0 %v497
    %569 = vmatpush1.bf16.msra.mxu0 %v496
    %570 = vmatprep.subr.bf16.mxu0 %v489
    %571 = vmatpush1.bf16.msra.mxu0 %v488
    %572 = vmatprep.subr.bf16.mxu0 %v481
    %573 = vmatpush1.bf16.msra.mxu0 %v480
    %574 = vmatprep.subr.bf16.mxu0 %v473
    %575 = vmatpush1.bf16.msra.mxu0 %v472
    %576 = vmatprep.subr.bf16.mxu0 %v465
    %577 = vmatpush1.bf16.msra.mxu0 %v464
    %578 = vmatprep.subr.bf16.mxu0 %v457
    %579 = vmatpush1.bf16.msra.mxu0 %v456
    %580 = vmatprep.subr.bf16.mxu0 %v449
    %581 = vmatpush1.bf16.msra.mxu0 %v448
    %582 = vmatprep.subr.bf16.mxu0 %v441
    %583 = vmatpush1.bf16.msra.mxu0 %v440
    %584 = vmatprep.subr.bf16.mxu0 0
    %585 = vmatpush2.bf16.msra.mxu0 0
    %586 = vmatprep.subr.bf16.mxu0 0
    %587 = vmatpush2.bf16.msra.mxu0 0
    %588 = vmatprep.subr.bf16.mxu0 0
    %589 = vmatpush2.bf16.msra.mxu0 0
    %590 = vmatprep.subr.bf16.mxu0 0
    %591 = vmatpush2.bf16.msra.mxu0 0
    %592 = vmatprep.subr.bf16.mxu0 0
    %593 = vmatpush2.bf16.msra.mxu0 0
    %594 = vmatprep.subr.bf16.mxu0 0
    %595 = vmatpush2.bf16.msra.mxu0 0
    %596 = vmatprep.subr.bf16.mxu0 0
    %597 = vmatpush2.bf16.msra.mxu0 0
    %598 = vmatprep.subr.bf16.mxu0 0
    %599 = vmatpush2.bf16.msra.mxu0 0
    %600 = vmatprep.mubr.bf16.mxu0 0
    %601 = vmatmul.mubr.bf16.gmra.mxu0 %v141
    %v602 = vpop.f32.mrf.mxu0
    %v603 = vadd.f32 %v211, %v602
    %v604 = vpop.f32.mrf.mxu0
    %v605 = vadd.f32 %v215, %v604
    %v606 = vpop.f32.mrf.mxu0
    %v607 = vadd.f32 %v211, %v606
    %v608 = vpop.f32.mrf.mxu0
    %v609 = vadd.f32 %v215, %v608
    %610 = vdwg.mxu0
    %611 = vmatprep.subr.bf16.mxu0 %v499
    %612 = vmatpush1.bf16.msra.mxu0 %v498
    %613 = vmatprep.subr.bf16.mxu0 %v491
    %614 = vmatpush1.bf16.msra.mxu0 %v490
    %615 = vmatprep.subr.bf16.mxu0 %v483
    %616 = vmatpush1.bf16.msra.mxu0 %v482
    %617 = vmatprep.subr.bf16.mxu0 %v475
    %618 = vmatpush1.bf16.msra.mxu0 %v474
    %619 = vmatprep.subr.bf16.mxu0 %v467
    %620 = vmatpush1.bf16.msra.mxu0 %v466
    %621 = vmatprep.subr.bf16.mxu0 %v459
    %622 = vmatpush1.bf16.msra.mxu0 %v458
    %623 = vmatprep.subr.bf16.mxu0 %v451
    %624 = vmatpush1.bf16.msra.mxu0 %v450
    %625 = vmatprep.subr.bf16.mxu0 %v443
    %626 = vmatpush1.bf16.msra.mxu0 %v442
    %627 = vmatprep.subr.bf16.mxu0 0
    %628 = vmatpush2.bf16.msra.mxu0 0
    %629 = vmatprep.subr.bf16.mxu0 0
    %630 = vmatpush2.bf16.msra.mxu0 0
    %631 = vmatprep.subr.bf16.mxu0 0
    %632 = vmatpush2.bf16.msra.mxu0 0
    %633 = vmatprep.subr.bf16.mxu0 0
    %634 = vmatpush2.bf16.msra.mxu0 0
    %635 = vmatprep.subr.bf16.mxu0 0
    %636 = vmatpush2.bf16.msra.mxu0 0
    %637 = vmatprep.subr.bf16.mxu0 0
    %638 = vmatpush2.bf16.msra.mxu0 0
    %639 = vmatprep.subr.bf16.mxu0 0
    %640 = vmatpush2.bf16.msra.mxu0 0
    %641 = vmatprep.subr.bf16.mxu0 0
    %642 = vmatpush2.bf16.msra.mxu0 0
    %643 = vmatprep.mubr.bf16.mxu0 0
    %644 = vmatmul.mubr.bf16.gmra.mxu0 %v141
    %v645 = vpop.f32.mrf.mxu0
    %v646 = vadd.f32 %v219, %v645
    %v647 = vpop.f32.mrf.mxu0
    %v648 = vadd.f32 %v223, %v647
    %v649 = vpop.f32.mrf.mxu0
    %v650 = vadd.f32 %v219, %v649
    %v651 = vpop.f32.mrf.mxu0
    %v652 = vadd.f32 %v223, %v651
    %653 = vdwg.mxu0
    %654 = vmatprep.subr.bf16.mxu0 %v501
    %655 = vmatpush1.bf16.msra.mxu0 %v500
    %656 = vmatprep.subr.bf16.mxu0 %v493
    %657 = vmatpush1.bf16.msra.mxu0 %v492
    %658 = vmatprep.subr.bf16.mxu0 %v485
    %659 = vmatpush1.bf16.msra.mxu0 %v484
    %660 = vmatprep.subr.bf16.mxu0 %v477
    %661 = vmatpush1.bf16.msra.mxu0 %v476
    %662 = vmatprep.subr.bf16.mxu0 %v469
    %663 = vmatpush1.bf16.msra.mxu0 %v468
    %664 = vmatprep.subr.bf16.mxu0 %v461
    %665 = vmatpush1.bf16.msra.mxu0 %v460
    %666 = vmatprep.subr.bf16.mxu0 %v453
    %667 = vmatpush1.bf16.msra.mxu0 %v452
    %668 = vmatprep.subr.bf16.mxu0 %v445
    %669 = vmatpush1.bf16.msra.mxu0 %v444
    %670 = vmatprep.subr.bf16.mxu0 0
    %671 = vmatpush2.bf16.msra.mxu0 0
    %672 = vmatprep.subr.bf16.mxu0 0
    %673 = vmatpush2.bf16.msra.mxu0 0
    %674 = vmatprep.subr.bf16.mxu0 0
    %675 = vmatpush2.bf16.msra.mxu0 0
    %676 = vmatprep.subr.bf16.mxu0 0
    %677 = vmatpush2.bf16.msra.mxu0 0
    %678 = vmatprep.subr.bf16.mxu0 0
    %679 = vmatpush2.bf16.msra.mxu0 0
    %680 = vmatprep.subr.bf16.mxu0 0
    %681 = vmatpush2.bf16.msra.mxu0 0
    %682 = vmatprep.subr.bf16.mxu0 0
    %683 = vmatpush2.bf16.msra.mxu0 0
    %684 = vmatprep.subr.bf16.mxu0 0
    %685 = vmatpush2.bf16.msra.mxu0 0
    %686 = vmatprep.mubr.bf16.mxu0 0
    %687 = vmatmul.mubr.bf16.gmra.mxu0 %v141
    %v688 = vpop.f32.mrf.mxu0
    %v689 = vadd.f32 %v227, %v688
    %v690 = vpop.f32.mrf.mxu0
    %v691 = vadd.f32 %v231, %v690
    %v692 = vpop.f32.mrf.mxu0
    %v693 = vadd.f32 %v227, %v692
    %v694 = vpop.f32.mrf.mxu0
    %v695 = vadd.f32 %v231, %v694
    %696 = vdwg.mxu0
    %697 = vmatprep.subr.bf16.mxu0 %v503
    %698 = vmatpush1.bf16.msra.mxu0 %v502
    %699 = vmatprep.subr.bf16.mxu0 %v495
    %700 = vmatpush1.bf16.msra.mxu0 %v494
    %701 = vmatprep.subr.bf16.mxu0 %v487
    %702 = vmatpush1.bf16.msra.mxu0 %v486
    %703 = vmatprep.subr.bf16.mxu0 %v479
    %704 = vmatpush1.bf16.msra.mxu0 %v478
    %705 = vmatprep.subr.bf16.mxu0 %v471
    %706 = vmatpush1.bf16.msra.mxu0 %v470
    %707 = vmatprep.subr.bf16.mxu0 %v463
    %708 = vmatpush1.bf16.msra.mxu0 %v462
    %709 = vmatprep.subr.bf16.mxu0 %v455
    %710 = vmatpush1.bf16.msra.mxu0 %v454
    %711 = vmatprep.subr.bf16.mxu0 %v447
    %712 = vmatpush1.bf16.msra.mxu0 %v446
    %713 = vmatprep.subr.bf16.mxu0 0
    %714 = vmatpush2.bf16.msra.mxu0 0
    %715 = vmatprep.subr.bf16.mxu0 0
    %716 = vmatpush2.bf16.msra.mxu0 0
    %717 = vmatprep.subr.bf16.mxu0 0
    %718 = vmatpush2.bf16.msra.mxu0 0
    %719 = vmatprep.subr.bf16.mxu0 0
    %720 = vmatpush2.bf16.msra.mxu0 0
    %721 = vmatprep.subr.bf16.mxu0 0
    %722 = vmatpush2.bf16.msra.mxu0 0
    %723 = vmatprep.subr.bf16.mxu0 0
    %724 = vmatpush2.bf16.msra.mxu0 0
    %725 = vmatprep.subr.bf16.mxu0 0
    %726 = vmatpush2.bf16.msra.mxu0 0
    %727 = vmatprep.subr.bf16.mxu0 0
    %728 = vmatpush2.bf16.msra.mxu0 0
    %729 = vmatprep.mubr.bf16.mxu0 0
    %730 = vmatmul.mubr.bf16.gmra.mxu0 %v141
    %v731 = vpop.f32.mrf.mxu0
    %v732 = vadd.f32 %v235, %v731
    %v733 = vpop.f32.mrf.mxu0
    %v734 = vadd.f32 %v239, %v733
    %v735 = vpop.f32.mrf.mxu0
    %v736 = vadd.f32 %v235, %v735
    %v737 = vpop.f32.mrf.mxu0
    %v738 = vadd.f32 %v239, %v737
    %739 = vdwg.mxu0
    %v740 = vmax.f32 %v603, 0.0
    %v741 = vmax.f32 %v605, 0.0
    %v742 = vmax.f32 %v646, 0.0
    %v743 = vmax.f32 %v648, 0.0
    %v744 = vmax.f32 %v689, 0.0
    %v745 = vmax.f32 %v691, 0.0
    %v746 = vmax.f32 %v732, 0.0
    %v747 = vmax.f32 %v734, 0.0
    %v748 = vmax.f32 %v607, 0.0
    %v749 = vmax.f32 %v609, 0.0
    %v750 = vmax.f32 %v650, 0.0
    %v751 = vmax.f32 %v652, 0.0
    %v752 = vmax.f32 %v693, 0.0
    %v753 = vmax.f32 %v695, 0.0
    %v754 = vmax.f32 %v736, 0.0
    %v755 = vmax.f32 %v738, 0.0
    %v756 = vpack.c.bf16 %v748, %v740
    %v757 = vpack.c.bf16 %v749, %v741
    %v758 = vpack.c.bf16 %v750, %v742
    %v759 = vpack.c.bf16 %v751, %v743
    %v760 = vpack.c.bf16 %v752, %v744
    %v761 = vpack.c.bf16 %v753, %v745
    %v762 = vpack.c.bf16 %v754, %v746
    %v763 = vpack.c.bf16 %v755, %v747
    %v764 = vld [vmem:[#allocation6] sm:$0xff]
    %v765 = vld [vmem:[#allocation6 + $0x8] sm:$0xff]
    %v766 = vld [vmem:[#allocation6 + $0x10] sm:$0xff]
    %v767 = vld [vmem:[#allocation6 + $0x18] sm:$0xff]
    %v768 = vld [vmem:[#allocation6 + $0x20] sm:$0xff]
    %v769 = vld [vmem:[#allocation6 + $0x28] sm:$0xff]
    %v770 = vld [vmem:[#allocation6 + $0x30] sm:$0xff]
    %v771 = vld [vmem:[#allocation6 + $0x38] sm:$0xff]
    %v772 = vld [vmem:[#allocation6 + $0x40] sm:$0xff]
    %v773 = vld [vmem:[#allocation6 + $0x48] sm:$0xff]
    %v774 = vld [vmem:[#allocation6 + $0x50] sm:$0xff]
    %v775 = vld [vmem:[#allocation6 + $0x58] sm:$0xff]
    %v776 = vld [vmem:[#allocation6 + $0x60] sm:$0xff]
    %v777 = vld [vmem:[#allocation6 + $0x68] sm:$0xff]
    %v778 = vld [vmem:[#allocation6 + $0x70] sm:$0xff]
    %v779 = vld [vmem:[#allocation6 + $0x78] sm:$0xff]
    %v780 = vld [vmem:[#allocation6 + $0x80] sm:$0xff]
    %v781 = vld [vmem:[#allocation6 + $0x88] sm:$0xff]
    %v782 = vld [vmem:[#allocation6 + $0x90] sm:$0xff]
    %v783 = vld [vmem:[#allocation6 + $0x98] sm:$0xff]
    %v784 = vld [vmem:[#allocation6 + $0xa0] sm:$0xff]
    %v785 = vld [vmem:[#allocation6 + $0xa8] sm:$0xff]
    %v786 = vld [vmem:[#allocation6 + $0xb0] sm:$0xff]
    %v787 = vld [vmem:[#allocation6 + $0xb8] sm:$0xff]
    %v788 = vld [vmem:[#allocation6 + $0xc0] sm:$0xff]
    %v789 = vld [vmem:[#allocation6 + $0xc8] sm:$0xff]
    %v790 = vld [vmem:[#allocation6 + $0xd0] sm:$0xff]
    %v791 = vld [vmem:[#allocation6 + $0xd8] sm:$0xff]
    %v792 = vld [vmem:[#allocation6 + $0xe0] sm:$0xff]
    %v793 = vld [vmem:[#allocation6 + $0xe8] sm:$0xff]
    %v794 = vld [vmem:[#allocation6 + $0xf0] sm:$0xff]
    %v795 = vld [vmem:[#allocation6 + $0xf8] sm:$0xff]
    %v796 = vld [vmem:[#allocation6 + $0x100] sm:$0xff]
    %v797 = vld [vmem:[#allocation6 + $0x108] sm:$0xff]
    %v798 = vld [vmem:[#allocation6 + $0x110] sm:$0xff]
    %v799 = vld [vmem:[#allocation6 + $0x118] sm:$0xff]
    %v800 = vld [vmem:[#allocation6 + $0x120] sm:$0xff]
    %v801 = vld [vmem:[#allocation6 + $0x128] sm:$0xff]
    %v802 = vld [vmem:[#allocation6 + $0x130] sm:$0xff]
    %v803 = vld [vmem:[#allocation6 + $0x138] sm:$0xff]
    %v804 = vld [vmem:[#allocation6 + $0x140] sm:$0xff]
    %v805 = vld [vmem:[#allocation6 + $0x148] sm:$0xff]
    %v806 = vld [vmem:[#allocation6 + $0x150] sm:$0xff]
    %v807 = vld [vmem:[#allocation6 + $0x158] sm:$0xff]
    %v808 = vld [vmem:[#allocation6 + $0x160] sm:$0xff]
    %v809 = vld [vmem:[#allocation6 + $0x168] sm:$0xff]
    %v810 = vld [vmem:[#allocation6 + $0x170] sm:$0xff]
    %v811 = vld [vmem:[#allocation6 + $0x178] sm:$0xff]
    %v812 = vld [vmem:[#allocation6 + $0x180] sm:$0xff]
    %v813 = vld [vmem:[#allocation6 + $0x188] sm:$0xff]
    %v814 = vld [vmem:[#allocation6 + $0x190] sm:$0xff]
    %v815 = vld [vmem:[#allocation6 + $0x198] sm:$0xff]
    %v816 = vld [vmem:[#allocation6 + $0x1a0] sm:$0xff]
    %v817 = vld [vmem:[#allocation6 + $0x1a8] sm:$0xff]
    %v818 = vld [vmem:[#allocation6 + $0x1b0] sm:$0xff]
    %v819 = vld [vmem:[#allocation6 + $0x1b8] sm:$0xff]
    %v820 = vld [vmem:[#allocation6 + $0x1c0] sm:$0xff]
    %v821 = vld [vmem:[#allocation6 + $0x1c8] sm:$0xff]
    %v822 = vld [vmem:[#allocation6 + $0x1d0] sm:$0xff]
    %v823 = vld [vmem:[#allocation6 + $0x1d8] sm:$0xff]
    %v824 = vld [vmem:[#allocation6 + $0x1e0] sm:$0xff]
    %v825 = vld [vmem:[#allocation6 + $0x1e8] sm:$0xff]
    %v826 = vld [vmem:[#allocation6 + $0x1f0] sm:$0xff]
    %v827 = vld [vmem:[#allocation6 + $0x1f8] sm:$0xff]
    %v828 = vld [vmem:[#allocation6 + $0x200] sm:$0xff]
    %v829 = vld [vmem:[#allocation6 + $0x208] sm:$0xff]
    %v830 = vld [vmem:[#allocation6 + $0x210] sm:$0xff]
    %v831 = vld [vmem:[#allocation6 + $0x218] sm:$0xff]
    %v832 = vld [vmem:[#allocation6 + $0x220] sm:$0xff]
    %v833 = vld [vmem:[#allocation6 + $0x228] sm:$0xff]
    %v834 = vld [vmem:[#allocation6 + $0x230] sm:$0xff]
    %v835 = vld [vmem:[#allocation6 + $0x238] sm:$0xff]
    %v836 = vld [vmem:[#allocation6 + $0x240] sm:$0xff]
    %v837 = vld [vmem:[#allocation6 + $0x248] sm:$0xff]
    %v838 = vld [vmem:[#allocation6 + $0x250] sm:$0xff]
    %v839 = vld [vmem:[#allocation6 + $0x258] sm:$0xff]
    %v840 = vld [vmem:[#allocation6 + $0x260] sm:$0xff]
    %v841 = vld [vmem:[#allocation6 + $0x268] sm:$0xff]
    %v842 = vld [vmem:[#allocation6 + $0x270] sm:$0xff]
    %v843 = vld [vmem:[#allocation6 + $0x278] sm:$0xff]
    %v844 = vld [vmem:[#allocation6 + $0x280] sm:$0xff]
    %v845 = vld [vmem:[#allocation6 + $0x288] sm:$0xff]
    %v846 = vld [vmem:[#allocation6 + $0x290] sm:$0xff]
    %v847 = vld [vmem:[#allocation6 + $0x298] sm:$0xff]
    %v848 = vld [vmem:[#allocation6 + $0x2a0] sm:$0xff]
    %v849 = vld [vmem:[#allocation6 + $0x2a8] sm:$0xff]
    %v850 = vld [vmem:[#allocation6 + $0x2b0] sm:$0xff]
    %v851 = vld [vmem:[#allocation6 + $0x2b8] sm:$0xff]
    %v852 = vld [vmem:[#allocation6 + $0x2c0] sm:$0xff]
    %v853 = vld [vmem:[#allocation6 + $0x2c8] sm:$0xff]
    %v854 = vld [vmem:[#allocation6 + $0x2d0] sm:$0xff]
    %v855 = vld [vmem:[#allocation6 + $0x2d8] sm:$0xff]
    %v856 = vld [vmem:[#allocation6 + $0x2e0] sm:$0xff]
    %v857 = vld [vmem:[#allocation6 + $0x2e8] sm:$0xff]
    %v858 = vld [vmem:[#allocation6 + $0x2f0] sm:$0xff]
    %v859 = vld [vmem:[#allocation6 + $0x2f8] sm:$0xff]
    %v860 = vld [vmem:[#allocation6 + $0x300] sm:$0xff]
    %v861 = vld [vmem:[#allocation6 + $0x308] sm:$0xff]
    %v862 = vld [vmem:[#allocation6 + $0x310] sm:$0xff]
    %v863 = vld [vmem:[#allocation6 + $0x318] sm:$0xff]
    %v864 = vld [vmem:[#allocation6 + $0x320] sm:$0xff]
    %v865 = vld [vmem:[#allocation6 + $0x328] sm:$0xff]
    %v866 = vld [vmem:[#allocation6 + $0x330] sm:$0xff]
    %v867 = vld [vmem:[#allocation6 + $0x338] sm:$0xff]
    %v868 = vld [vmem:[#allocation6 + $0x340] sm:$0xff]
    %v869 = vld [vmem:[#allocation6 + $0x348] sm:$0xff]
    %v870 = vld [vmem:[#allocation6 + $0x350] sm:$0xff]
    %v871 = vld [vmem:[#allocation6 + $0x358] sm:$0xff]
    %v872 = vld [vmem:[#allocation6 + $0x360] sm:$0xff]
    %v873 = vld [vmem:[#allocation6 + $0x368] sm:$0xff]
    %v874 = vld [vmem:[#allocation6 + $0x370] sm:$0xff]
    %v875 = vld [vmem:[#allocation6 + $0x378] sm:$0xff]
    %v876 = vld [vmem:[#allocation6 + $0x380] sm:$0xff]
    %v877 = vld [vmem:[#allocation6 + $0x388] sm:$0xff]
    %v878 = vld [vmem:[#allocation6 + $0x390] sm:$0xff]
    %v879 = vld [vmem:[#allocation6 + $0x398] sm:$0xff]
    %v880 = vld [vmem:[#allocation6 + $0x3a0] sm:$0xff]
    %v881 = vld [vmem:[#allocation6 + $0x3a8] sm:$0xff]
    %v882 = vld [vmem:[#allocation6 + $0x3b0] sm:$0xff]
    %v883 = vld [vmem:[#allocation6 + $0x3b8] sm:$0xff]
    %v884 = vld [vmem:[#allocation6 + $0x3c0] sm:$0xff]
    %v885 = vld [vmem:[#allocation6 + $0x3c8] sm:$0xff]
    %v886 = vld [vmem:[#allocation6 + $0x3d0] sm:$0xff]
    %v887 = vld [vmem:[#allocation6 + $0x3d8] sm:$0xff]
    %v888 = vld [vmem:[#allocation6 + $0x3e0] sm:$0xff]
    %v889 = vld [vmem:[#allocation6 + $0x3e8] sm:$0xff]
    %v890 = vld [vmem:[#allocation6 + $0x3f0] sm:$0xff]
    %v891 = vld [vmem:[#allocation6 + $0x3f8] sm:$0xff]
    %v892 = vld [vmem:[#allocation6 + $0x400] sm:$0xff]
    %v893 = vld [vmem:[#allocation6 + $0x408] sm:$0xff]
    %v894 = vld [vmem:[#allocation6 + $0x410] sm:$0xff]
    %v895 = vld [vmem:[#allocation6 + $0x418] sm:$0xff]
    %v896 = vld [vmem:[#allocation6 + $0x420] sm:$0xff]
    %v897 = vld [vmem:[#allocation6 + $0x428] sm:$0xff]
    %v898 = vld [vmem:[#allocation6 + $0x430] sm:$0xff]
    %v899 = vld [vmem:[#allocation6 + $0x438] sm:$0xff]
    %v900 = vld [vmem:[#allocation6 + $0x440] sm:$0xff]
    %v901 = vld [vmem:[#allocation6 + $0x448] sm:$0xff]
    %v902 = vld [vmem:[#allocation6 + $0x450] sm:$0xff]
    %v903 = vld [vmem:[#allocation6 + $0x458] sm:$0xff]
    %v904 = vld [vmem:[#allocation6 + $0x460] sm:$0xff]
    %v905 = vld [vmem:[#allocation6 + $0x468] sm:$0xff]
    %v906 = vld [vmem:[#allocation6 + $0x470] sm:$0xff]
    %v907 = vld [vmem:[#allocation6 + $0x478] sm:$0xff]
    %v908 = vld [vmem:[#allocation6 + $0x480] sm:$0xff]
    %v909 = vld [vmem:[#allocation6 + $0x488] sm:$0xff]
    %v910 = vld [vmem:[#allocation6 + $0x490] sm:$0xff]
    %v911 = vld [vmem:[#allocation6 + $0x498] sm:$0xff]
    %v912 = vld [vmem:[#allocation6 + $0x4a0] sm:$0xff]
    %v913 = vld [vmem:[#allocation6 + $0x4a8] sm:$0xff]
    %v914 = vld [vmem:[#allocation6 + $0x4b0] sm:$0xff]
    %v915 = vld [vmem:[#allocation6 + $0x4b8] sm:$0xff]
    %v916 = vld [vmem:[#allocation6 + $0x4c0] sm:$0xff]
    %v917 = vld [vmem:[#allocation6 + $0x4c8] sm:$0xff]
    %v918 = vld [vmem:[#allocation6 + $0x4d0] sm:$0xff]
    %v919 = vld [vmem:[#allocation6 + $0x4d8] sm:$0xff]
    %v920 = vld [vmem:[#allocation6 + $0x4e0] sm:$0xff]
    %v921 = vld [vmem:[#allocation6 + $0x4e8] sm:$0xff]
    %v922 = vld [vmem:[#allocation6 + $0x4f0] sm:$0xff]
    %v923 = vld [vmem:[#allocation6 + $0x4f8] sm:$0xff]
    %v924 = vld [vmem:[#allocation6 + $0x500] sm:$0xff]
    %v925 = vld [vmem:[#allocation6 + $0x508] sm:$0xff]
    %v926 = vld [vmem:[#allocation6 + $0x510] sm:$0xff]
    %v927 = vld [vmem:[#allocation6 + $0x518] sm:$0xff]
    %v928 = vld [vmem:[#allocation6 + $0x520] sm:$0xff]
    %v929 = vld [vmem:[#allocation6 + $0x528] sm:$0xff]
    %v930 = vld [vmem:[#allocation6 + $0x530] sm:$0xff]
    %v931 = vld [vmem:[#allocation6 + $0x538] sm:$0xff]
    %v932 = vld [vmem:[#allocation6 + $0x540] sm:$0xff]
    %v933 = vld [vmem:[#allocation6 + $0x548] sm:$0xff]
    %v934 = vld [vmem:[#allocation6 + $0x550] sm:$0xff]
    %v935 = vld [vmem:[#allocation6 + $0x558] sm:$0xff]
    %v936 = vld [vmem:[#allocation6 + $0x560] sm:$0xff]
    %v937 = vld [vmem:[#allocation6 + $0x568] sm:$0xff]
    %v938 = vld [vmem:[#allocation6 + $0x570] sm:$0xff]
    %v939 = vld [vmem:[#allocation6 + $0x578] sm:$0xff]
    %v940 = vld [vmem:[#allocation6 + $0x580] sm:$0xff]
    %v941 = vld [vmem:[#allocation6 + $0x588] sm:$0xff]
    %v942 = vld [vmem:[#allocation6 + $0x590] sm:$0xff]
    %v943 = vld [vmem:[#allocation6 + $0x598] sm:$0xff]
    %v944 = vld [vmem:[#allocation6 + $0x5a0] sm:$0xff]
    %v945 = vld [vmem:[#allocation6 + $0x5a8] sm:$0xff]
    %v946 = vld [vmem:[#allocation6 + $0x5b0] sm:$0xff]
    %v947 = vld [vmem:[#allocation6 + $0x5b8] sm:$0xff]
    %v948 = vld [vmem:[#allocation6 + $0x5c0] sm:$0xff]
    %v949 = vld [vmem:[#allocation6 + $0x5c8] sm:$0xff]
    %v950 = vld [vmem:[#allocation6 + $0x5d0] sm:$0xff]
    %v951 = vld [vmem:[#allocation6 + $0x5d8] sm:$0xff]
    %v952 = vld [vmem:[#allocation6 + $0x5e0] sm:$0xff]
    %v953 = vld [vmem:[#allocation6 + $0x5e8] sm:$0xff]
    %v954 = vld [vmem:[#allocation6 + $0x5f0] sm:$0xff]
    %v955 = vld [vmem:[#allocation6 + $0x5f8] sm:$0xff]
    %v956 = vld [vmem:[#allocation6 + $0x600] sm:$0xff]
    %v957 = vld [vmem:[#allocation6 + $0x608] sm:$0xff]
    %v958 = vld [vmem:[#allocation6 + $0x610] sm:$0xff]
    %v959 = vld [vmem:[#allocation6 + $0x618] sm:$0xff]
    %v960 = vld [vmem:[#allocation6 + $0x620] sm:$0xff]
    %v961 = vld [vmem:[#allocation6 + $0x628] sm:$0xff]
    %v962 = vld [vmem:[#allocation6 + $0x630] sm:$0xff]
    %v963 = vld [vmem:[#allocation6 + $0x638] sm:$0xff]
    %v964 = vld [vmem:[#allocation6 + $0x640] sm:$0xff]
    %v965 = vld [vmem:[#allocation6 + $0x648] sm:$0xff]
    %v966 = vld [vmem:[#allocation6 + $0x650] sm:$0xff]
    %v967 = vld [vmem:[#allocation6 + $0x658] sm:$0xff]
    %v968 = vld [vmem:[#allocation6 + $0x660] sm:$0xff]
    %v969 = vld [vmem:[#allocation6 + $0x668] sm:$0xff]
    %v970 = vld [vmem:[#allocation6 + $0x670] sm:$0xff]
    %v971 = vld [vmem:[#allocation6 + $0x678] sm:$0xff]
    %v972 = vld [vmem:[#allocation6 + $0x680] sm:$0xff]
    %v973 = vld [vmem:[#allocation6 + $0x688] sm:$0xff]
    %v974 = vld [vmem:[#allocation6 + $0x690] sm:$0xff]
    %v975 = vld [vmem:[#allocation6 + $0x698] sm:$0xff]
    %v976 = vld [vmem:[#allocation6 + $0x6a0] sm:$0xff]
    %v977 = vld [vmem:[#allocation6 + $0x6a8] sm:$0xff]
    %v978 = vld [vmem:[#allocation6 + $0x6b0] sm:$0xff]
    %v979 = vld [vmem:[#allocation6 + $0x6b8] sm:$0xff]
    %v980 = vld [vmem:[#allocation6 + $0x6c0] sm:$0xff]
    %v981 = vld [vmem:[#allocation6 + $0x6c8] sm:$0xff]
    %v982 = vld [vmem:[#allocation6 + $0x6d0] sm:$0xff]
    %v983 = vld [vmem:[#allocation6 + $0x6d8] sm:$0xff]
    %v984 = vld [vmem:[#allocation6 + $0x6e0] sm:$0xff]
    %v985 = vld [vmem:[#allocation6 + $0x6e8] sm:$0xff]
    %v986 = vld [vmem:[#allocation6 + $0x6f0] sm:$0xff]
    %v987 = vld [vmem:[#allocation6 + $0x6f8] sm:$0xff]
    %v988 = vld [vmem:[#allocation6 + $0x700] sm:$0xff]
    %v989 = vld [vmem:[#allocation6 + $0x708] sm:$0xff]
    %v990 = vld [vmem:[#allocation6 + $0x710] sm:$0xff]
    %v991 = vld [vmem:[#allocation6 + $0x718] sm:$0xff]
    %v992 = vld [vmem:[#allocation6 + $0x720] sm:$0xff]
    %v993 = vld [vmem:[#allocation6 + $0x728] sm:$0xff]
    %v994 = vld [vmem:[#allocation6 + $0x730] sm:$0xff]
    %v995 = vld [vmem:[#allocation6 + $0x738] sm:$0xff]
    %v996 = vld [vmem:[#allocation6 + $0x740] sm:$0xff]
    %v997 = vld [vmem:[#allocation6 + $0x748] sm:$0xff]
    %v998 = vld [vmem:[#allocation6 + $0x750] sm:$0xff]
    %v999 = vld [vmem:[#allocation6 + $0x758] sm:$0xff]
    %v1000 = vld [vmem:[#allocation6 + $0x760] sm:$0xff]
    %v1001 = vld [vmem:[#allocation6 + $0x768] sm:$0xff]
    %v1002 = vld [vmem:[#allocation6 + $0x770] sm:$0xff]
    %v1003 = vld [vmem:[#allocation6 + $0x778] sm:$0xff]
    %v1004 = vld [vmem:[#allocation6 + $0x780] sm:$0xff]
    %v1005 = vld [vmem:[#allocation6 + $0x788] sm:$0xff]
    %v1006 = vld [vmem:[#allocation6 + $0x790] sm:$0xff]
    %v1007 = vld [vmem:[#allocation6 + $0x798] sm:$0xff]
    %v1008 = vld [vmem:[#allocation6 + $0x7a0] sm:$0xff]
    %v1009 = vld [vmem:[#allocation6 + $0x7a8] sm:$0xff]
    %v1010 = vld [vmem:[#allocation6 + $0x7b0] sm:$0xff]
    %v1011 = vld [vmem:[#allocation6 + $0x7b8] sm:$0xff]
    %v1012 = vld [vmem:[#allocation6 + $0x7c0] sm:$0xff]
    %v1013 = vld [vmem:[#allocation6 + $0x7c8] sm:$0xff]
    %v1014 = vld [vmem:[#allocation6 + $0x7d0] sm:$0xff]
    %v1015 = vld [vmem:[#allocation6 + $0x7d8] sm:$0xff]
    %v1016 = vld [vmem:[#allocation6 + $0x7e0] sm:$0xff]
    %v1017 = vld [vmem:[#allocation6 + $0x7e8] sm:$0xff]
    %v1018 = vld [vmem:[#allocation6 + $0x7f0] sm:$0xff]
    %v1019 = vld [vmem:[#allocation6 + $0x7f8] sm:$0xff]
    %v1020 = vld [vmem:[#allocation6 + $0x800] sm:$0xff]
    %v1021 = vld [vmem:[#allocation6 + $0x808] sm:$0xff]
    %v1022 = vld [vmem:[#allocation6 + $0x810] sm:$0xff]
    %v1023 = vld [vmem:[#allocation6 + $0x818] sm:$0xff]
    %v1024 = vld [vmem:[#allocation6 + $0x820] sm:$0xff]
    %v1025 = vld [vmem:[#allocation6 + $0x828] sm:$0xff]
    %v1026 = vld [vmem:[#allocation6 + $0x830] sm:$0xff]
    %v1027 = vld [vmem:[#allocation6 + $0x838] sm:$0xff]
    %v1028 = vld [vmem:[#allocation6 + $0x840] sm:$0xff]
    %v1029 = vld [vmem:[#allocation6 + $0x848] sm:$0xff]
    %v1030 = vld [vmem:[#allocation6 + $0x850] sm:$0xff]
    %v1031 = vld [vmem:[#allocation6 + $0x858] sm:$0xff]
    %v1032 = vld [vmem:[#allocation6 + $0x860] sm:$0xff]
    %v1033 = vld [vmem:[#allocation6 + $0x868] sm:$0xff]
    %v1034 = vld [vmem:[#allocation6 + $0x870] sm:$0xff]
    %v1035 = vld [vmem:[#allocation6 + $0x878] sm:$0xff]
    %v1036 = vld [vmem:[#allocation6 + $0x880] sm:$0xff]
    %v1037 = vld [vmem:[#allocation6 + $0x888] sm:$0xff]
    %v1038 = vld [vmem:[#allocation6 + $0x890] sm:$0xff]
    %v1039 = vld [vmem:[#allocation6 + $0x898] sm:$0xff]
    %v1040 = vld [vmem:[#allocation6 + $0x8a0] sm:$0xff]
    %v1041 = vld [vmem:[#allocation6 + $0x8a8] sm:$0xff]
    %v1042 = vld [vmem:[#allocation6 + $0x8b0] sm:$0xff]
    %v1043 = vld [vmem:[#allocation6 + $0x8b8] sm:$0xff]
    %v1044 = vld [vmem:[#allocation6 + $0x8c0] sm:$0xff]
    %v1045 = vld [vmem:[#allocation6 + $0x8c8] sm:$0xff]
    %v1046 = vld [vmem:[#allocation6 + $0x8d0] sm:$0xff]
    %v1047 = vld [vmem:[#allocation6 + $0x8d8] sm:$0xff]
    %v1048 = vld [vmem:[#allocation6 + $0x8e0] sm:$0xff]
    %v1049 = vld [vmem:[#allocation6 + $0x8e8] sm:$0xff]
    %v1050 = vld [vmem:[#allocation6 + $0x8f0] sm:$0xff]
    %v1051 = vld [vmem:[#allocation6 + $0x8f8] sm:$0xff]
    %v1052 = vld [vmem:[#allocation6 + $0x900] sm:$0xff]
    %v1053 = vld [vmem:[#allocation6 + $0x908] sm:$0xff]
    %v1054 = vld [vmem:[#allocation6 + $0x910] sm:$0xff]
    %v1055 = vld [vmem:[#allocation6 + $0x918] sm:$0xff]
    %v1056 = vld [vmem:[#allocation6 + $0x920] sm:$0xff]
    %v1057 = vld [vmem:[#allocation6 + $0x928] sm:$0xff]
    %v1058 = vld [vmem:[#allocation6 + $0x930] sm:$0xff]
    %v1059 = vld [vmem:[#allocation6 + $0x938] sm:$0xff]
    %v1060 = vld [vmem:[#allocation6 + $0x940] sm:$0xff]
    %v1061 = vld [vmem:[#allocation6 + $0x948] sm:$0xff]
    %v1062 = vld [vmem:[#allocation6 + $0x950] sm:$0xff]
    %v1063 = vld [vmem:[#allocation6 + $0x958] sm:$0xff]
    %v1064 = vld [vmem:[#allocation6 + $0x960] sm:$0xff]
    %v1065 = vld [vmem:[#allocation6 + $0x968] sm:$0xff]
    %v1066 = vld [vmem:[#allocation6 + $0x970] sm:$0xff]
    %v1067 = vld [vmem:[#allocation6 + $0x978] sm:$0xff]
    %v1068 = vld [vmem:[#allocation6 + $0x980] sm:$0xff]
    %v1069 = vld [vmem:[#allocation6 + $0x988] sm:$0xff]
    %v1070 = vld [vmem:[#allocation6 + $0x990] sm:$0xff]
    %v1071 = vld [vmem:[#allocation6 + $0x998] sm:$0xff]
    %v1072 = vld [vmem:[#allocation6 + $0x9a0] sm:$0xff]
    %v1073 = vld [vmem:[#allocation6 + $0x9a8] sm:$0xff]
    %v1074 = vld [vmem:[#allocation6 + $0x9b0] sm:$0xff]
    %v1075 = vld [vmem:[#allocation6 + $0x9b8] sm:$0xff]
    %v1076 = vld [vmem:[#allocation6 + $0x9c0] sm:$0xff]
    %v1077 = vld [vmem:[#allocation6 + $0x9c8] sm:$0xff]
    %v1078 = vld [vmem:[#allocation6 + $0x9d0] sm:$0xff]
    %v1079 = vld [vmem:[#allocation6 + $0x9d8] sm:$0xff]
    %v1080 = vld [vmem:[#allocation6 + $0x9e0] sm:$0xff]
    %v1081 = vld [vmem:[#allocation6 + $0x9e8] sm:$0xff]
    %v1082 = vld [vmem:[#allocation6 + $0x9f0] sm:$0xff]
    %v1083 = vld [vmem:[#allocation6 + $0x9f8] sm:$0xff]
    %v1084 = vld [vmem:[#allocation6 + $0xa00] sm:$0xff]
    %v1085 = vld [vmem:[#allocation6 + $0xa08] sm:$0xff]
    %v1086 = vld [vmem:[#allocation6 + $0xa10] sm:$0xff]
    %v1087 = vld [vmem:[#allocation6 + $0xa18] sm:$0xff]
    %v1088 = vld [vmem:[#allocation6 + $0xa20] sm:$0xff]
    %v1089 = vld [vmem:[#allocation6 + $0xa28] sm:$0xff]
    %v1090 = vld [vmem:[#allocation6 + $0xa30] sm:$0xff]
    %v1091 = vld [vmem:[#allocation6 + $0xa38] sm:$0xff]
    %v1092 = vld [vmem:[#allocation6 + $0xa40] sm:$0xff]
    %v1093 = vld [vmem:[#allocation6 + $0xa48] sm:$0xff]
    %v1094 = vld [vmem:[#allocation6 + $0xa50] sm:$0xff]
    %v1095 = vld [vmem:[#allocation6 + $0xa58] sm:$0xff]
    %v1096 = vld [vmem:[#allocation6 + $0xa60] sm:$0xff]
    %v1097 = vld [vmem:[#allocation6 + $0xa68] sm:$0xff]
    %v1098 = vld [vmem:[#allocation6 + $0xa70] sm:$0xff]
    %v1099 = vld [vmem:[#allocation6 + $0xa78] sm:$0xff]
    %v1100 = vld [vmem:[#allocation6 + $0xa80] sm:$0xff]
    %v1101 = vld [vmem:[#allocation6 + $0xa88] sm:$0xff]
    %v1102 = vld [vmem:[#allocation6 + $0xa90] sm:$0xff]
    %v1103 = vld [vmem:[#allocation6 + $0xa98] sm:$0xff]
    %v1104 = vld [vmem:[#allocation6 + $0xaa0] sm:$0xff]
    %v1105 = vld [vmem:[#allocation6 + $0xaa8] sm:$0xff]
    %v1106 = vld [vmem:[#allocation6 + $0xab0] sm:$0xff]
    %v1107 = vld [vmem:[#allocation6 + $0xab8] sm:$0xff]
    %v1108 = vld [vmem:[#allocation6 + $0xac0] sm:$0xff]
    %v1109 = vld [vmem:[#allocation6 + $0xac8] sm:$0xff]
    %v1110 = vld [vmem:[#allocation6 + $0xad0] sm:$0xff]
    %v1111 = vld [vmem:[#allocation6 + $0xad8] sm:$0xff]
    %v1112 = vld [vmem:[#allocation6 + $0xae0] sm:$0xff]
    %v1113 = vld [vmem:[#allocation6 + $0xae8] sm:$0xff]
    %v1114 = vld [vmem:[#allocation6 + $0xaf0] sm:$0xff]
    %v1115 = vld [vmem:[#allocation6 + $0xaf8] sm:$0xff]
    %v1116 = vld [vmem:[#allocation6 + $0xb00] sm:$0xff]
    %v1117 = vld [vmem:[#allocation6 + $0xb08] sm:$0xff]
    %v1118 = vld [vmem:[#allocation6 + $0xb10] sm:$0xff]
    %v1119 = vld [vmem:[#allocation6 + $0xb18] sm:$0xff]
    %v1120 = vld [vmem:[#allocation6 + $0xb20] sm:$0xff]
    %v1121 = vld [vmem:[#allocation6 + $0xb28] sm:$0xff]
    %v1122 = vld [vmem:[#allocation6 + $0xb30] sm:$0xff]
    %v1123 = vld [vmem:[#allocation6 + $0xb38] sm:$0xff]
    %v1124 = vld [vmem:[#allocation6 + $0xb40] sm:$0xff]
    %v1125 = vld [vmem:[#allocation6 + $0xb48] sm:$0xff]
    %v1126 = vld [vmem:[#allocation6 + $0xb50] sm:$0xff]
    %v1127 = vld [vmem:[#allocation6 + $0xb58] sm:$0xff]
    %v1128 = vld [vmem:[#allocation6 + $0xb60] sm:$0xff]
    %v1129 = vld [vmem:[#allocation6 + $0xb68] sm:$0xff]
    %v1130 = vld [vmem:[#allocation6 + $0xb70] sm:$0xff]
    %v1131 = vld [vmem:[#allocation6 + $0xb78] sm:$0xff]
    %v1132 = vld [vmem:[#allocation6 + $0xb80] sm:$0xff]
    %v1133 = vld [vmem:[#allocation6 + $0xb88] sm:$0xff]
    %v1134 = vld [vmem:[#allocation6 + $0xb90] sm:$0xff]
    %v1135 = vld [vmem:[#allocation6 + $0xb98] sm:$0xff]
    %v1136 = vld [vmem:[#allocation6 + $0xba0] sm:$0xff]
    %v1137 = vld [vmem:[#allocation6 + $0xba8] sm:$0xff]
    %v1138 = vld [vmem:[#allocation6 + $0xbb0] sm:$0xff]
    %v1139 = vld [vmem:[#allocation6 + $0xbb8] sm:$0xff]
    %v1140 = vld [vmem:[#allocation6 + $0xbc0] sm:$0xff]
    %v1141 = vld [vmem:[#allocation6 + $0xbc8] sm:$0xff]
    %v1142 = vld [vmem:[#allocation6 + $0xbd0] sm:$0xff]
    %v1143 = vld [vmem:[#allocation6 + $0xbd8] sm:$0xff]
    %v1144 = vld [vmem:[#allocation6 + $0xbe0] sm:$0xff]
    %v1145 = vld [vmem:[#allocation6 + $0xbe8] sm:$0xff]
    %v1146 = vld [vmem:[#allocation6 + $0xbf0] sm:$0xff]
    %v1147 = vld [vmem:[#allocation6 + $0xbf8] sm:$0xff]
    %v1148 = vld [vmem:[#allocation6 + $0xc00] sm:$0xff]
    %v1149 = vld [vmem:[#allocation6 + $0xc08] sm:$0xff]
    %v1150 = vld [vmem:[#allocation6 + $0xc10] sm:$0xff]
    %v1151 = vld [vmem:[#allocation6 + $0xc18] sm:$0xff]
    %v1152 = vld [vmem:[#allocation6 + $0xc20] sm:$0xff]
    %v1153 = vld [vmem:[#allocation6 + $0xc28] sm:$0xff]
    %v1154 = vld [vmem:[#allocation6 + $0xc30] sm:$0xff]
    %v1155 = vld [vmem:[#allocation6 + $0xc38] sm:$0xff]
    %v1156 = vld [vmem:[#allocation6 + $0xc40] sm:$0xff]
    %v1157 = vld [vmem:[#allocation6 + $0xc48] sm:$0xff]
    %v1158 = vld [vmem:[#allocation6 + $0xc50] sm:$0xff]
    %v1159 = vld [vmem:[#allocation6 + $0xc58] sm:$0xff]
    %v1160 = vld [vmem:[#allocation6 + $0xc60] sm:$0xff]
    %v1161 = vld [vmem:[#allocation6 + $0xc68] sm:$0xff]
    %v1162 = vld [vmem:[#allocation6 + $0xc70] sm:$0xff]
    %v1163 = vld [vmem:[#allocation6 + $0xc78] sm:$0xff]
    %v1164 = vld [vmem:[#allocation6 + $0xc80] sm:$0xff]
    %v1165 = vld [vmem:[#allocation6 + $0xc88] sm:$0xff]
    %v1166 = vld [vmem:[#allocation6 + $0xc90] sm:$0xff]
    %v1167 = vld [vmem:[#allocation6 + $0xc98] sm:$0xff]
    %v1168 = vld [vmem:[#allocation6 + $0xca0] sm:$0xff]
    %v1169 = vld [vmem:[#allocation6 + $0xca8] sm:$0xff]
    %v1170 = vld [vmem:[#allocation6 + $0xcb0] sm:$0xff]
    %v1171 = vld [vmem:[#allocation6 + $0xcb8] sm:$0xff]
    %v1172 = vld [vmem:[#allocation6 + $0xcc0] sm:$0xff]
    %v1173 = vld [vmem:[#allocation6 + $0xcc8] sm:$0xff]
    %v1174 = vld [vmem:[#allocation6 + $0xcd0] sm:$0xff]
    %v1175 = vld [vmem:[#allocation6 + $0xcd8] sm:$0xff]
    %v1176 = vld [vmem:[#allocation6 + $0xce0] sm:$0xff]
    %v1177 = vld [vmem:[#allocation6 + $0xce8] sm:$0xff]
    %v1178 = vld [vmem:[#allocation6 + $0xcf0] sm:$0xff]
    %v1179 = vld [vmem:[#allocation6 + $0xcf8] sm:$0xff]
    %v1180 = vld [vmem:[#allocation6 + $0xd00] sm:$0xff]
    %v1181 = vld [vmem:[#allocation6 + $0xd08] sm:$0xff]
    %v1182 = vld [vmem:[#allocation6 + $0xd10] sm:$0xff]
    %v1183 = vld [vmem:[#allocation6 + $0xd18] sm:$0xff]
    %v1184 = vld [vmem:[#allocation6 + $0xd20] sm:$0xff]
    %v1185 = vld [vmem:[#allocation6 + $0xd28] sm:$0xff]
    %v1186 = vld [vmem:[#allocation6 + $0xd30] sm:$0xff]
    %v1187 = vld [vmem:[#allocation6 + $0xd38] sm:$0xff]
    %v1188 = vld [vmem:[#allocation6 + $0xd40] sm:$0xff]
    %v1189 = vld [vmem:[#allocation6 + $0xd48] sm:$0xff]
    %v1190 = vld [vmem:[#allocation6 + $0xd50] sm:$0xff]
    %v1191 = vld [vmem:[#allocation6 + $0xd58] sm:$0xff]
    %v1192 = vld [vmem:[#allocation6 + $0xd60] sm:$0xff]
    %v1193 = vld [vmem:[#allocation6 + $0xd68] sm:$0xff]
    %v1194 = vld [vmem:[#allocation6 + $0xd70] sm:$0xff]
    %v1195 = vld [vmem:[#allocation6 + $0xd78] sm:$0xff]
    %v1196 = vld [vmem:[#allocation6 + $0xd80] sm:$0xff]
    %v1197 = vld [vmem:[#allocation6 + $0xd88] sm:$0xff]
    %v1198 = vld [vmem:[#allocation6 + $0xd90] sm:$0xff]
    %v1199 = vld [vmem:[#allocation6 + $0xd98] sm:$0xff]
    %v1200 = vld [vmem:[#allocation6 + $0xda0] sm:$0xff]
    %v1201 = vld [vmem:[#allocation6 + $0xda8] sm:$0xff]
    %v1202 = vld [vmem:[#allocation6 + $0xdb0] sm:$0xff]
    %v1203 = vld [vmem:[#allocation6 + $0xdb8] sm:$0xff]
    %v1204 = vld [vmem:[#allocation6 + $0xdc0] sm:$0xff]
    %v1205 = vld [vmem:[#allocation6 + $0xdc8] sm:$0xff]
    %v1206 = vld [vmem:[#allocation6 + $0xdd0] sm:$0xff]
    %v1207 = vld [vmem:[#allocation6 + $0xdd8] sm:$0xff]
    %v1208 = vld [vmem:[#allocation6 + $0xde0] sm:$0xff]
    %v1209 = vld [vmem:[#allocation6 + $0xde8] sm:$0xff]
    %v1210 = vld [vmem:[#allocation6 + $0xdf0] sm:$0xff]
    %v1211 = vld [vmem:[#allocation6 + $0xdf8] sm:$0xff]
    %v1212 = vld [vmem:[#allocation6 + $0xe00] sm:$0xff]
    %v1213 = vld [vmem:[#allocation6 + $0xe08] sm:$0xff]
    %v1214 = vld [vmem:[#allocation6 + $0xe10] sm:$0xff]
    %v1215 = vld [vmem:[#allocation6 + $0xe18] sm:$0xff]
    %v1216 = vld [vmem:[#allocation6 + $0xe20] sm:$0xff]
    %v1217 = vld [vmem:[#allocation6 + $0xe28] sm:$0xff]
    %v1218 = vld [vmem:[#allocation6 + $0xe30] sm:$0xff]
    %v1219 = vld [vmem:[#allocation6 + $0xe38] sm:$0xff]
    %v1220 = vld [vmem:[#allocation6 + $0xe40] sm:$0xff]
    %v1221 = vld [vmem:[#allocation6 + $0xe48] sm:$0xff]
    %v1222 = vld [vmem:[#allocation6 + $0xe50] sm:$0xff]
    %v1223 = vld [vmem:[#allocation6 + $0xe58] sm:$0xff]
    %v1224 = vld [vmem:[#allocation6 + $0xe60] sm:$0xff]
    %v1225 = vld [vmem:[#allocation6 + $0xe68] sm:$0xff]
    %v1226 = vld [vmem:[#allocation6 + $0xe70] sm:$0xff]
    %v1227 = vld [vmem:[#allocation6 + $0xe78] sm:$0xff]
    %v1228 = vld [vmem:[#allocation6 + $0xe80] sm:$0xff]
    %v1229 = vld [vmem:[#allocation6 + $0xe88] sm:$0xff]
    %v1230 = vld [vmem:[#allocation6 + $0xe90] sm:$0xff]
    %v1231 = vld [vmem:[#allocation6 + $0xe98] sm:$0xff]
    %v1232 = vld [vmem:[#allocation6 + $0xea0] sm:$0xff]
    %v1233 = vld [vmem:[#allocation6 + $0xea8] sm:$0xff]
    %v1234 = vld [vmem:[#allocation6 + $0xeb0] sm:$0xff]
    %v1235 = vld [vmem:[#allocation6 + $0xeb8] sm:$0xff]
    %v1236 = vld [vmem:[#allocation6 + $0xec0] sm:$0xff]
    %v1237 = vld [vmem:[#allocation6 + $0xec8] sm:$0xff]
    %v1238 = vld [vmem:[#allocation6 + $0xed0] sm:$0xff]
    %v1239 = vld [vmem:[#allocation6 + $0xed8] sm:$0xff]
    %v1240 = vld [vmem:[#allocation6 + $0xee0] sm:$0xff]
    %v1241 = vld [vmem:[#allocation6 + $0xee8] sm:$0xff]
    %v1242 = vld [vmem:[#allocation6 + $0xef0] sm:$0xff]
    %v1243 = vld [vmem:[#allocation6 + $0xef8] sm:$0xff]
    %v1244 = vld [vmem:[#allocation6 + $0xf00] sm:$0xff]
    %v1245 = vld [vmem:[#allocation6 + $0xf08] sm:$0xff]
    %v1246 = vld [vmem:[#allocation6 + $0xf10] sm:$0xff]
    %v1247 = vld [vmem:[#allocation6 + $0xf18] sm:$0xff]
    %v1248 = vld [vmem:[#allocation6 + $0xf20] sm:$0xff]
    %v1249 = vld [vmem:[#allocation6 + $0xf28] sm:$0xff]
    %v1250 = vld [vmem:[#allocation6 + $0xf30] sm:$0xff]
    %v1251 = vld [vmem:[#allocation6 + $0xf38] sm:$0xff]
    %v1252 = vld [vmem:[#allocation6 + $0xf40] sm:$0xff]
    %v1253 = vld [vmem:[#allocation6 + $0xf48] sm:$0xff]
    %v1254 = vld [vmem:[#allocation6 + $0xf50] sm:$0xff]
    %v1255 = vld [vmem:[#allocation6 + $0xf58] sm:$0xff]
    %v1256 = vld [vmem:[#allocation6 + $0xf60] sm:$0xff]
    %v1257 = vld [vmem:[#allocation6 + $0xf68] sm:$0xff]
    %v1258 = vld [vmem:[#allocation6 + $0xf70] sm:$0xff]
    %v1259 = vld [vmem:[#allocation6 + $0xf78] sm:$0xff]
    %v1260 = vld [vmem:[#allocation6 + $0xf80] sm:$0xff]
    %v1261 = vld [vmem:[#allocation6 + $0xf88] sm:$0xff]
    %v1262 = vld [vmem:[#allocation6 + $0xf90] sm:$0xff]
    %v1263 = vld [vmem:[#allocation6 + $0xf98] sm:$0xff]
    %v1264 = vld [vmem:[#allocation6 + $0xfa0] sm:$0xff]
    %v1265 = vld [vmem:[#allocation6 + $0xfa8] sm:$0xff]
    %v1266 = vld [vmem:[#allocation6 + $0xfb0] sm:$0xff]
    %v1267 = vld [vmem:[#allocation6 + $0xfb8] sm:$0xff]
    %v1268 = vld [vmem:[#allocation6 + $0xfc0] sm:$0xff]
    %v1269 = vld [vmem:[#allocation6 + $0xfc8] sm:$0xff]
    %v1270 = vld [vmem:[#allocation6 + $0xfd0] sm:$0xff]
    %v1271 = vld [vmem:[#allocation6 + $0xfd8] sm:$0xff]
    %v1272 = vld [vmem:[#allocation6 + $0xfe0] sm:$0xff]
    %v1273 = vld [vmem:[#allocation6 + $0xfe8] sm:$0xff]
    %v1274 = vld [vmem:[#allocation6 + $0xff0] sm:$0xff]
    %v1275 = vld [vmem:[#allocation6 + $0xff8] sm:$0xff]
    %v1276 = vld [vmem:[#allocation7] sm:$0xff]
    %v1278 = vlaneseq
    %v1279 = vshrl.u32 %v1278, 7
    %v1280 = vsub.s32 0, %v1279
    %v1281 = vrot.slane %v1276, %v1280
    %v1282 = vlaneseq
    %v1283 = vshrl.u32 %v1282, 7
    %v1284 = vsub.s32 1, %v1283
    %v1285 = vrot.slane %v1276, %v1284
    %v1286 = vlaneseq
    %v1287 = vshrl.u32 %v1286, 7
    %v1288 = vsub.s32 2, %v1287
    %v1289 = vrot.slane %v1276, %v1288
    %v1290 = vlaneseq
    %v1291 = vshrl.u32 %v1290, 7
    %v1292 = vsub.s32 3, %v1291
    %v1293 = vrot.slane %v1276, %v1292
    %v1294 = vlaneseq
    %v1295 = vshrl.u32 %v1294, 7
    %v1296 = vsub.s32 4, %v1295
    %v1297 = vrot.slane %v1276, %v1296
    %v1298 = vlaneseq
    %v1299 = vshrl.u32 %v1298, 7
    %v1300 = vsub.s32 5, %v1299
    %v1301 = vrot.slane %v1276, %v1300
    %v1302 = vlaneseq
    %v1303 = vshrl.u32 %v1302, 7
    %v1304 = vsub.s32 6, %v1303
    %v1305 = vrot.slane %v1276, %v1304
    %v1306 = vlaneseq
    %v1307 = vshrl.u32 %v1306, 7
    %v1308 = vsub.s32 7, %v1307
    %v1309 = vrot.slane %v1276, %v1308
    %v1830 = vunpack.c.l.b16 %v764
    %v1831 = vunpack.c.h.b16 %v764
    %v1832 = vunpack.c.l.b16 %v765
    %v1833 = vunpack.c.h.b16 %v765
    %v1834 = vunpack.c.l.b16 %v766
    %v1835 = vunpack.c.h.b16 %v766
    %v1836 = vunpack.c.l.b16 %v767
    %v1837 = vunpack.c.h.b16 %v767
    %v1838 = vunpack.c.l.b16 %v768
    %v1839 = vunpack.c.h.b16 %v768
    %v1840 = vunpack.c.l.b16 %v769
    %v1841 = vunpack.c.h.b16 %v769
    %v1842 = vunpack.c.l.b16 %v770
    %v1843 = vunpack.c.h.b16 %v770
    %v1844 = vunpack.c.l.b16 %v771
    %v1845 = vunpack.c.h.b16 %v771
    %v1846 = vunpack.c.l.b16 %v772
    %v1847 = vunpack.c.h.b16 %v772
    %v1848 = vunpack.c.l.b16 %v773
    %v1849 = vunpack.c.h.b16 %v773
    %v1850 = vunpack.c.l.b16 %v774
    %v1851 = vunpack.c.h.b16 %v774
    %v1852 = vunpack.c.l.b16 %v775
    %v1853 = vunpack.c.h.b16 %v775
    %v1854 = vunpack.c.l.b16 %v776
    %v1855 = vunpack.c.h.b16 %v776
    %v1856 = vunpack.c.l.b16 %v777
    %v1857 = vunpack.c.h.b16 %v777
    %v1858 = vunpack.c.l.b16 %v778
    %v1859 = vunpack.c.h.b16 %v778
    %v1860 = vunpack.c.l.b16 %v779
    %v1861 = vunpack.c.h.b16 %v779
    %v1862 = vunpack.c.l.b16 %v780
    %v1863 = vunpack.c.h.b16 %v780
    %v1864 = vunpack.c.l.b16 %v781
    %v1865 = vunpack.c.h.b16 %v781
    %v1866 = vunpack.c.l.b16 %v782
    %v1867 = vunpack.c.h.b16 %v782
    %v1868 = vunpack.c.l.b16 %v783
    %v1869 = vunpack.c.h.b16 %v783
    %v1870 = vunpack.c.l.b16 %v784
    %v1871 = vunpack.c.h.b16 %v784
    %v1872 = vunpack.c.l.b16 %v785
    %v1873 = vunpack.c.h.b16 %v785
    %v1874 = vunpack.c.l.b16 %v786
    %v1875 = vunpack.c.h.b16 %v786
    %v1876 = vunpack.c.l.b16 %v787
    %v1877 = vunpack.c.h.b16 %v787
    %v1878 = vunpack.c.l.b16 %v788
    %v1879 = vunpack.c.h.b16 %v788
    %v1880 = vunpack.c.l.b16 %v789
    %v1881 = vunpack.c.h.b16 %v789
    %v1882 = vunpack.c.l.b16 %v790
    %v1883 = vunpack.c.h.b16 %v790
    %v1884 = vunpack.c.l.b16 %v791
    %v1885 = vunpack.c.h.b16 %v791
    %v1886 = vunpack.c.l.b16 %v792
    %v1887 = vunpack.c.h.b16 %v792
    %v1888 = vunpack.c.l.b16 %v793
    %v1889 = vunpack.c.h.b16 %v793
    %v1890 = vunpack.c.l.b16 %v794
    %v1891 = vunpack.c.h.b16 %v794
    %v1892 = vunpack.c.l.b16 %v795
    %v1893 = vunpack.c.h.b16 %v795
    %v1894 = vunpack.c.l.b16 %v796
    %v1895 = vunpack.c.h.b16 %v796
    %v1896 = vunpack.c.l.b16 %v797
    %v1897 = vunpack.c.h.b16 %v797
    %v1898 = vunpack.c.l.b16 %v798
    %v1899 = vunpack.c.h.b16 %v798
    %v1900 = vunpack.c.l.b16 %v799
    %v1901 = vunpack.c.h.b16 %v799
    %v1902 = vunpack.c.l.b16 %v800
    %v1903 = vunpack.c.h.b16 %v800
    %v1904 = vunpack.c.l.b16 %v801
    %v1905 = vunpack.c.h.b16 %v801
    %v1906 = vunpack.c.l.b16 %v802
    %v1907 = vunpack.c.h.b16 %v802
    %v1908 = vunpack.c.l.b16 %v803
    %v1909 = vunpack.c.h.b16 %v803
    %v1910 = vunpack.c.l.b16 %v804
    %v1911 = vunpack.c.h.b16 %v804
    %v1912 = vunpack.c.l.b16 %v805
    %v1913 = vunpack.c.h.b16 %v805
    %v1914 = vunpack.c.l.b16 %v806
    %v1915 = vunpack.c.h.b16 %v806
    %v1916 = vunpack.c.l.b16 %v807
    %v1917 = vunpack.c.h.b16 %v807
    %v1918 = vunpack.c.l.b16 %v808
    %v1919 = vunpack.c.h.b16 %v808
    %v1920 = vunpack.c.l.b16 %v809
    %v1921 = vunpack.c.h.b16 %v809
    %v1922 = vunpack.c.l.b16 %v810
    %v1923 = vunpack.c.h.b16 %v810
    %v1924 = vunpack.c.l.b16 %v811
    %v1925 = vunpack.c.h.b16 %v811
    %v1926 = vunpack.c.l.b16 %v812
    %v1927 = vunpack.c.h.b16 %v812
    %v1928 = vunpack.c.l.b16 %v813
    %v1929 = vunpack.c.h.b16 %v813
    %v1930 = vunpack.c.l.b16 %v814
    %v1931 = vunpack.c.h.b16 %v814
    %v1932 = vunpack.c.l.b16 %v815
    %v1933 = vunpack.c.h.b16 %v815
    %v1934 = vunpack.c.l.b16 %v816
    %v1935 = vunpack.c.h.b16 %v816
    %v1936 = vunpack.c.l.b16 %v817
    %v1937 = vunpack.c.h.b16 %v817
    %v1938 = vunpack.c.l.b16 %v818
    %v1939 = vunpack.c.h.b16 %v818
    %v1940 = vunpack.c.l.b16 %v819
    %v1941 = vunpack.c.h.b16 %v819
    %v1942 = vunpack.c.l.b16 %v820
    %v1943 = vunpack.c.h.b16 %v820
    %v1944 = vunpack.c.l.b16 %v821
    %v1945 = vunpack.c.h.b16 %v821
    %v1946 = vunpack.c.l.b16 %v822
    %v1947 = vunpack.c.h.b16 %v822
    %v1948 = vunpack.c.l.b16 %v823
    %v1949 = vunpack.c.h.b16 %v823
    %v1950 = vunpack.c.l.b16 %v824
    %v1951 = vunpack.c.h.b16 %v824
    %v1952 = vunpack.c.l.b16 %v825
    %v1953 = vunpack.c.h.b16 %v825
    %v1954 = vunpack.c.l.b16 %v826
    %v1955 = vunpack.c.h.b16 %v826
    %v1956 = vunpack.c.l.b16 %v827
    %v1957 = vunpack.c.h.b16 %v827
    %v1958 = vunpack.c.l.b16 %v828
    %v1959 = vunpack.c.h.b16 %v828
    %v1960 = vunpack.c.l.b16 %v829
    %v1961 = vunpack.c.h.b16 %v829
    %v1962 = vunpack.c.l.b16 %v830
    %v1963 = vunpack.c.h.b16 %v830
    %v1964 = vunpack.c.l.b16 %v831
    %v1965 = vunpack.c.h.b16 %v831
    %v1966 = vunpack.c.l.b16 %v832
    %v1967 = vunpack.c.h.b16 %v832
    %v1968 = vunpack.c.l.b16 %v833
    %v1969 = vunpack.c.h.b16 %v833
    %v1970 = vunpack.c.l.b16 %v834
    %v1971 = vunpack.c.h.b16 %v834
    %v1972 = vunpack.c.l.b16 %v835
    %v1973 = vunpack.c.h.b16 %v835
    %v1974 = vunpack.c.l.b16 %v836
    %v1975 = vunpack.c.h.b16 %v836
    %v1976 = vunpack.c.l.b16 %v837
    %v1977 = vunpack.c.h.b16 %v837
    %v1978 = vunpack.c.l.b16 %v838
    %v1979 = vunpack.c.h.b16 %v838
    %v1980 = vunpack.c.l.b16 %v839
    %v1981 = vunpack.c.h.b16 %v839
    %v1982 = vunpack.c.l.b16 %v840
    %v1983 = vunpack.c.h.b16 %v840
    %v1984 = vunpack.c.l.b16 %v841
    %v1985 = vunpack.c.h.b16 %v841
    %v1986 = vunpack.c.l.b16 %v842
    %v1987 = vunpack.c.h.b16 %v842
    %v1988 = vunpack.c.l.b16 %v843
    %v1989 = vunpack.c.h.b16 %v843
    %v1990 = vunpack.c.l.b16 %v844
    %v1991 = vunpack.c.h.b16 %v844
    %v1992 = vunpack.c.l.b16 %v845
    %v1993 = vunpack.c.h.b16 %v845
    %v1994 = vunpack.c.l.b16 %v846
    %v1995 = vunpack.c.h.b16 %v846
    %v1996 = vunpack.c.l.b16 %v847
    %v1997 = vunpack.c.h.b16 %v847
    %v1998 = vunpack.c.l.b16 %v848
    %v1999 = vunpack.c.h.b16 %v848
    %v2000 = vunpack.c.l.b16 %v849
    %v2001 = vunpack.c.h.b16 %v849
    %v2002 = vunpack.c.l.b16 %v850
    %v2003 = vunpack.c.h.b16 %v850
    %v2004 = vunpack.c.l.b16 %v851
    %v2005 = vunpack.c.h.b16 %v851
    %v2006 = vunpack.c.l.b16 %v852
    %v2007 = vunpack.c.h.b16 %v852
    %v2008 = vunpack.c.l.b16 %v853
    %v2009 = vunpack.c.h.b16 %v853
    %v2010 = vunpack.c.l.b16 %v854
    %v2011 = vunpack.c.h.b16 %v854
    %v2012 = vunpack.c.l.b16 %v855
    %v2013 = vunpack.c.h.b16 %v855
    %v2014 = vunpack.c.l.b16 %v856
    %v2015 = vunpack.c.h.b16 %v856
    %v2016 = vunpack.c.l.b16 %v857
    %v2017 = vunpack.c.h.b16 %v857
    %v2018 = vunpack.c.l.b16 %v858
    %v2019 = vunpack.c.h.b16 %v858
    %v2020 = vunpack.c.l.b16 %v859
    %v2021 = vunpack.c.h.b16 %v859
    %v2022 = vunpack.c.l.b16 %v860
    %v2023 = vunpack.c.h.b16 %v860
    %v2024 = vunpack.c.l.b16 %v861
    %v2025 = vunpack.c.h.b16 %v861
    %v2026 = vunpack.c.l.b16 %v862
    %v2027 = vunpack.c.h.b16 %v862
    %v2028 = vunpack.c.l.b16 %v863
    %v2029 = vunpack.c.h.b16 %v863
    %v2030 = vunpack.c.l.b16 %v864
    %v2031 = vunpack.c.h.b16 %v864
    %v2032 = vunpack.c.l.b16 %v865
    %v2033 = vunpack.c.h.b16 %v865
    %v2034 = vunpack.c.l.b16 %v866
    %v2035 = vunpack.c.h.b16 %v866
    %v2036 = vunpack.c.l.b16 %v867
    %v2037 = vunpack.c.h.b16 %v867
    %v2038 = vunpack.c.l.b16 %v868
    %v2039 = vunpack.c.h.b16 %v868
    %v2040 = vunpack.c.l.b16 %v869
    %v2041 = vunpack.c.h.b16 %v869
    %v2042 = vunpack.c.l.b16 %v870
    %v2043 = vunpack.c.h.b16 %v870
    %v2044 = vunpack.c.l.b16 %v871
    %v2045 = vunpack.c.h.b16 %v871
    %v2046 = vunpack.c.l.b16 %v872
    %v2047 = vunpack.c.h.b16 %v872
    %v2048 = vunpack.c.l.b16 %v873
    %v2049 = vunpack.c.h.b16 %v873
    %v2050 = vunpack.c.l.b16 %v874
    %v2051 = vunpack.c.h.b16 %v874
    %v2052 = vunpack.c.l.b16 %v875
    %v2053 = vunpack.c.h.b16 %v875
    %v2054 = vunpack.c.l.b16 %v876
    %v2055 = vunpack.c.h.b16 %v876
    %v2056 = vunpack.c.l.b16 %v877
    %v2057 = vunpack.c.h.b16 %v877
    %v2058 = vunpack.c.l.b16 %v878
    %v2059 = vunpack.c.h.b16 %v878
    %v2060 = vunpack.c.l.b16 %v879
    %v2061 = vunpack.c.h.b16 %v879
    %v2062 = vunpack.c.l.b16 %v880
    %v2063 = vunpack.c.h.b16 %v880
    %v2064 = vunpack.c.l.b16 %v881
    %v2065 = vunpack.c.h.b16 %v881
    %v2066 = vunpack.c.l.b16 %v882
    %v2067 = vunpack.c.h.b16 %v882
    %v2068 = vunpack.c.l.b16 %v883
    %v2069 = vunpack.c.h.b16 %v883
    %v2070 = vunpack.c.l.b16 %v884
    %v2071 = vunpack.c.h.b16 %v884
    %v2072 = vunpack.c.l.b16 %v885
    %v2073 = vunpack.c.h.b16 %v885
    %v2074 = vunpack.c.l.b16 %v886
    %v2075 = vunpack.c.h.b16 %v886
    %v2076 = vunpack.c.l.b16 %v887
    %v2077 = vunpack.c.h.b16 %v887
    %v2078 = vunpack.c.l.b16 %v888
    %v2079 = vunpack.c.h.b16 %v888
    %v2080 = vunpack.c.l.b16 %v889
    %v2081 = vunpack.c.h.b16 %v889
    %v2082 = vunpack.c.l.b16 %v890
    %v2083 = vunpack.c.h.b16 %v890
    %v2084 = vunpack.c.l.b16 %v891
    %v2085 = vunpack.c.h.b16 %v891
    %v2086 = vunpack.c.l.b16 %v892
    %v2087 = vunpack.c.h.b16 %v892
    %v2088 = vunpack.c.l.b16 %v893
    %v2089 = vunpack.c.h.b16 %v893
    %v2090 = vunpack.c.l.b16 %v894
    %v2091 = vunpack.c.h.b16 %v894
    %v2092 = vunpack.c.l.b16 %v895
    %v2093 = vunpack.c.h.b16 %v895
    %v2094 = vunpack.c.l.b16 %v896
    %v2095 = vunpack.c.h.b16 %v896
    %v2096 = vunpack.c.l.b16 %v897
    %v2097 = vunpack.c.h.b16 %v897
    %v2098 = vunpack.c.l.b16 %v898
    %v2099 = vunpack.c.h.b16 %v898
    %v2100 = vunpack.c.l.b16 %v899
    %v2101 = vunpack.c.h.b16 %v899
    %v2102 = vunpack.c.l.b16 %v900
    %v2103 = vunpack.c.h.b16 %v900
    %v2104 = vunpack.c.l.b16 %v901
    %v2105 = vunpack.c.h.b16 %v901
    %v2106 = vunpack.c.l.b16 %v902
    %v2107 = vunpack.c.h.b16 %v902
    %v2108 = vunpack.c.l.b16 %v903
    %v2109 = vunpack.c.h.b16 %v903
    %v2110 = vunpack.c.l.b16 %v904
    %v2111 = vunpack.c.h.b16 %v904
    %v2112 = vunpack.c.l.b16 %v905
    %v2113 = vunpack.c.h.b16 %v905
    %v2114 = vunpack.c.l.b16 %v906
    %v2115 = vunpack.c.h.b16 %v906
    %v2116 = vunpack.c.l.b16 %v907
    %v2117 = vunpack.c.h.b16 %v907
    %v2118 = vunpack.c.l.b16 %v908
    %v2119 = vunpack.c.h.b16 %v908
    %v2120 = vunpack.c.l.b16 %v909
    %v2121 = vunpack.c.h.b16 %v909
    %v2122 = vunpack.c.l.b16 %v910
    %v2123 = vunpack.c.h.b16 %v910
    %v2124 = vunpack.c.l.b16 %v911
    %v2125 = vunpack.c.h.b16 %v911
    %v2126 = vunpack.c.l.b16 %v912
    %v2127 = vunpack.c.h.b16 %v912
    %v2128 = vunpack.c.l.b16 %v913
    %v2129 = vunpack.c.h.b16 %v913
    %v2130 = vunpack.c.l.b16 %v914
    %v2131 = vunpack.c.h.b16 %v914
    %v2132 = vunpack.c.l.b16 %v915
    %v2133 = vunpack.c.h.b16 %v915
    %v2134 = vunpack.c.l.b16 %v916
    %v2135 = vunpack.c.h.b16 %v916
    %v2136 = vunpack.c.l.b16 %v917
    %v2137 = vunpack.c.h.b16 %v917
    %v2138 = vunpack.c.l.b16 %v918
    %v2139 = vunpack.c.h.b16 %v918
    %v2140 = vunpack.c.l.b16 %v919
    %v2141 = vunpack.c.h.b16 %v919
    %v2142 = vunpack.c.l.b16 %v920
    %v2143 = vunpack.c.h.b16 %v920
    %v2144 = vunpack.c.l.b16 %v921
    %v2145 = vunpack.c.h.b16 %v921
    %v2146 = vunpack.c.l.b16 %v922
    %v2147 = vunpack.c.h.b16 %v922
    %v2148 = vunpack.c.l.b16 %v923
    %v2149 = vunpack.c.h.b16 %v923
    %v2150 = vunpack.c.l.b16 %v924
    %v2151 = vunpack.c.h.b16 %v924
    %v2152 = vunpack.c.l.b16 %v925
    %v2153 = vunpack.c.h.b16 %v925
    %v2154 = vunpack.c.l.b16 %v926
    %v2155 = vunpack.c.h.b16 %v926
    %v2156 = vunpack.c.l.b16 %v927
    %v2157 = vunpack.c.h.b16 %v927
    %v2158 = vunpack.c.l.b16 %v928
    %v2159 = vunpack.c.h.b16 %v928
    %v2160 = vunpack.c.l.b16 %v929
    %v2161 = vunpack.c.h.b16 %v929
    %v2162 = vunpack.c.l.b16 %v930
    %v2163 = vunpack.c.h.b16 %v930
    %v2164 = vunpack.c.l.b16 %v931
    %v2165 = vunpack.c.h.b16 %v931
    %v2166 = vunpack.c.l.b16 %v932
    %v2167 = vunpack.c.h.b16 %v932
    %v2168 = vunpack.c.l.b16 %v933
    %v2169 = vunpack.c.h.b16 %v933
    %v2170 = vunpack.c.l.b16 %v934
    %v2171 = vunpack.c.h.b16 %v934
    %v2172 = vunpack.c.l.b16 %v935
    %v2173 = vunpack.c.h.b16 %v935
    %v2174 = vunpack.c.l.b16 %v936
    %v2175 = vunpack.c.h.b16 %v936
    %v2176 = vunpack.c.l.b16 %v937
    %v2177 = vunpack.c.h.b16 %v937
    %v2178 = vunpack.c.l.b16 %v938
    %v2179 = vunpack.c.h.b16 %v938
    %v2180 = vunpack.c.l.b16 %v939
    %v2181 = vunpack.c.h.b16 %v939
    %v2182 = vunpack.c.l.b16 %v940
    %v2183 = vunpack.c.h.b16 %v940
    %v2184 = vunpack.c.l.b16 %v941
    %v2185 = vunpack.c.h.b16 %v941
    %v2186 = vunpack.c.l.b16 %v942
    %v2187 = vunpack.c.h.b16 %v942
    %v2188 = vunpack.c.l.b16 %v943
    %v2189 = vunpack.c.h.b16 %v943
    %v2190 = vunpack.c.l.b16 %v944
    %v2191 = vunpack.c.h.b16 %v944
    %v2192 = vunpack.c.l.b16 %v945
    %v2193 = vunpack.c.h.b16 %v945
    %v2194 = vunpack.c.l.b16 %v946
    %v2195 = vunpack.c.h.b16 %v946
    %v2196 = vunpack.c.l.b16 %v947
    %v2197 = vunpack.c.h.b16 %v947
    %v2198 = vunpack.c.l.b16 %v948
    %v2199 = vunpack.c.h.b16 %v948
    %v2200 = vunpack.c.l.b16 %v949
    %v2201 = vunpack.c.h.b16 %v949
    %v2202 = vunpack.c.l.b16 %v950
    %v2203 = vunpack.c.h.b16 %v950
    %v2204 = vunpack.c.l.b16 %v951
    %v2205 = vunpack.c.h.b16 %v951
    %v2206 = vunpack.c.l.b16 %v952
    %v2207 = vunpack.c.h.b16 %v952
    %v2208 = vunpack.c.l.b16 %v953
    %v2209 = vunpack.c.h.b16 %v953
    %v2210 = vunpack.c.l.b16 %v954
    %v2211 = vunpack.c.h.b16 %v954
    %v2212 = vunpack.c.l.b16 %v955
    %v2213 = vunpack.c.h.b16 %v955
    %v2214 = vunpack.c.l.b16 %v956
    %v2215 = vunpack.c.h.b16 %v956
    %v2216 = vunpack.c.l.b16 %v957
    %v2217 = vunpack.c.h.b16 %v957
    %v2218 = vunpack.c.l.b16 %v958
    %v2219 = vunpack.c.h.b16 %v958
    %v2220 = vunpack.c.l.b16 %v959
    %v2221 = vunpack.c.h.b16 %v959
    %v2222 = vunpack.c.l.b16 %v960
    %v2223 = vunpack.c.h.b16 %v960
    %v2224 = vunpack.c.l.b16 %v961
    %v2225 = vunpack.c.h.b16 %v961
    %v2226 = vunpack.c.l.b16 %v962
    %v2227 = vunpack.c.h.b16 %v962
    %v2228 = vunpack.c.l.b16 %v963
    %v2229 = vunpack.c.h.b16 %v963
    %v2230 = vunpack.c.l.b16 %v964
    %v2231 = vunpack.c.h.b16 %v964
    %v2232 = vunpack.c.l.b16 %v965
    %v2233 = vunpack.c.h.b16 %v965
    %v2234 = vunpack.c.l.b16 %v966
    %v2235 = vunpack.c.h.b16 %v966
    %v2236 = vunpack.c.l.b16 %v967
    %v2237 = vunpack.c.h.b16 %v967
    %v2238 = vunpack.c.l.b16 %v968
    %v2239 = vunpack.c.h.b16 %v968
    %v2240 = vunpack.c.l.b16 %v969
    %v2241 = vunpack.c.h.b16 %v969
    %v2242 = vunpack.c.l.b16 %v970
    %v2243 = vunpack.c.h.b16 %v970
    %v2244 = vunpack.c.l.b16 %v971
    %v2245 = vunpack.c.h.b16 %v971
    %v2246 = vunpack.c.l.b16 %v972
    %v2247 = vunpack.c.h.b16 %v972
    %v2248 = vunpack.c.l.b16 %v973
    %v2249 = vunpack.c.h.b16 %v973
    %v2250 = vunpack.c.l.b16 %v974
    %v2251 = vunpack.c.h.b16 %v974
    %v2252 = vunpack.c.l.b16 %v975
    %v2253 = vunpack.c.h.b16 %v975
    %v2254 = vunpack.c.l.b16 %v976
    %v2255 = vunpack.c.h.b16 %v976
    %v2256 = vunpack.c.l.b16 %v977
    %v2257 = vunpack.c.h.b16 %v977
    %v2258 = vunpack.c.l.b16 %v978
    %v2259 = vunpack.c.h.b16 %v978
    %v2260 = vunpack.c.l.b16 %v979
    %v2261 = vunpack.c.h.b16 %v979
    %v2262 = vunpack.c.l.b16 %v980
    %v2263 = vunpack.c.h.b16 %v980
    %v2264 = vunpack.c.l.b16 %v981
    %v2265 = vunpack.c.h.b16 %v981
    %v2266 = vunpack.c.l.b16 %v982
    %v2267 = vunpack.c.h.b16 %v982
    %v2268 = vunpack.c.l.b16 %v983
    %v2269 = vunpack.c.h.b16 %v983
    %v2270 = vunpack.c.l.b16 %v984
    %v2271 = vunpack.c.h.b16 %v984
    %v2272 = vunpack.c.l.b16 %v985
    %v2273 = vunpack.c.h.b16 %v985
    %v2274 = vunpack.c.l.b16 %v986
    %v2275 = vunpack.c.h.b16 %v986
    %v2276 = vunpack.c.l.b16 %v987
    %v2277 = vunpack.c.h.b16 %v987
    %v2278 = vunpack.c.l.b16 %v988
    %v2279 = vunpack.c.h.b16 %v988
    %v2280 = vunpack.c.l.b16 %v989
    %v2281 = vunpack.c.h.b16 %v989
    %v2282 = vunpack.c.l.b16 %v990
    %v2283 = vunpack.c.h.b16 %v990
    %v2284 = vunpack.c.l.b16 %v991
    %v2285 = vunpack.c.h.b16 %v991
    %v2286 = vunpack.c.l.b16 %v992
    %v2287 = vunpack.c.h.b16 %v992
    %v2288 = vunpack.c.l.b16 %v993
    %v2289 = vunpack.c.h.b16 %v993
    %v2290 = vunpack.c.l.b16 %v994
    %v2291 = vunpack.c.h.b16 %v994
    %v2292 = vunpack.c.l.b16 %v995
    %v2293 = vunpack.c.h.b16 %v995
    %v2294 = vunpack.c.l.b16 %v996
    %v2295 = vunpack.c.h.b16 %v996
    %v2296 = vunpack.c.l.b16 %v997
    %v2297 = vunpack.c.h.b16 %v997
    %v2298 = vunpack.c.l.b16 %v998
    %v2299 = vunpack.c.h.b16 %v998
    %v2300 = vunpack.c.l.b16 %v999
    %v2301 = vunpack.c.h.b16 %v999
    %v2302 = vunpack.c.l.b16 %v1000
    %v2303 = vunpack.c.h.b16 %v1000
    %v2304 = vunpack.c.l.b16 %v1001
    %v2305 = vunpack.c.h.b16 %v1001
    %v2306 = vunpack.c.l.b16 %v1002
    %v2307 = vunpack.c.h.b16 %v1002
    %v2308 = vunpack.c.l.b16 %v1003
    %v2309 = vunpack.c.h.b16 %v1003
    %v2310 = vunpack.c.l.b16 %v1004
    %v2311 = vunpack.c.h.b16 %v1004
    %v2312 = vunpack.c.l.b16 %v1005
    %v2313 = vunpack.c.h.b16 %v1005
    %v2314 = vunpack.c.l.b16 %v1006
    %v2315 = vunpack.c.h.b16 %v1006
    %v2316 = vunpack.c.l.b16 %v1007
    %v2317 = vunpack.c.h.b16 %v1007
    %v2318 = vunpack.c.l.b16 %v1008
    %v2319 = vunpack.c.h.b16 %v1008
    %v2320 = vunpack.c.l.b16 %v1009
    %v2321 = vunpack.c.h.b16 %v1009
    %v2322 = vunpack.c.l.b16 %v1010
    %v2323 = vunpack.c.h.b16 %v1010
    %v2324 = vunpack.c.l.b16 %v1011
    %v2325 = vunpack.c.h.b16 %v1011
    %v2326 = vunpack.c.l.b16 %v1012
    %v2327 = vunpack.c.h.b16 %v1012
    %v2328 = vunpack.c.l.b16 %v1013
    %v2329 = vunpack.c.h.b16 %v1013
    %v2330 = vunpack.c.l.b16 %v1014
    %v2331 = vunpack.c.h.b16 %v1014
    %v2332 = vunpack.c.l.b16 %v1015
    %v2333 = vunpack.c.h.b16 %v1015
    %v2334 = vunpack.c.l.b16 %v1016
    %v2335 = vunpack.c.h.b16 %v1016
    %v2336 = vunpack.c.l.b16 %v1017
    %v2337 = vunpack.c.h.b16 %v1017
    %v2338 = vunpack.c.l.b16 %v1018
    %v2339 = vunpack.c.h.b16 %v1018
    %v2340 = vunpack.c.l.b16 %v1019
    %v2341 = vunpack.c.h.b16 %v1019
    %v2342 = vunpack.c.l.b16 %v1020
    %v2343 = vunpack.c.h.b16 %v1020
    %v2344 = vunpack.c.l.b16 %v1021
    %v2345 = vunpack.c.h.b16 %v1021
    %v2346 = vunpack.c.l.b16 %v1022
    %v2347 = vunpack.c.h.b16 %v1022
    %v2348 = vunpack.c.l.b16 %v1023
    %v2349 = vunpack.c.h.b16 %v1023
    %v2350 = vunpack.c.l.b16 %v1024
    %v2351 = vunpack.c.h.b16 %v1024
    %v2352 = vunpack.c.l.b16 %v1025
    %v2353 = vunpack.c.h.b16 %v1025
    %v2354 = vunpack.c.l.b16 %v1026
    %v2355 = vunpack.c.h.b16 %v1026
    %v2356 = vunpack.c.l.b16 %v1027
    %v2357 = vunpack.c.h.b16 %v1027
    %v2358 = vunpack.c.l.b16 %v1028
    %v2359 = vunpack.c.h.b16 %v1028
    %v2360 = vunpack.c.l.b16 %v1029
    %v2361 = vunpack.c.h.b16 %v1029
    %v2362 = vunpack.c.l.b16 %v1030
    %v2363 = vunpack.c.h.b16 %v1030
    %v2364 = vunpack.c.l.b16 %v1031
    %v2365 = vunpack.c.h.b16 %v1031
    %v2366 = vunpack.c.l.b16 %v1032
    %v2367 = vunpack.c.h.b16 %v1032
    %v2368 = vunpack.c.l.b16 %v1033
    %v2369 = vunpack.c.h.b16 %v1033
    %v2370 = vunpack.c.l.b16 %v1034
    %v2371 = vunpack.c.h.b16 %v1034
    %v2372 = vunpack.c.l.b16 %v1035
    %v2373 = vunpack.c.h.b16 %v1035
    %v2374 = vunpack.c.l.b16 %v1036
    %v2375 = vunpack.c.h.b16 %v1036
    %v2376 = vunpack.c.l.b16 %v1037
    %v2377 = vunpack.c.h.b16 %v1037
    %v2378 = vunpack.c.l.b16 %v1038
    %v2379 = vunpack.c.h.b16 %v1038
    %v2380 = vunpack.c.l.b16 %v1039
    %v2381 = vunpack.c.h.b16 %v1039
    %v2382 = vunpack.c.l.b16 %v1040
    %v2383 = vunpack.c.h.b16 %v1040
    %v2384 = vunpack.c.l.b16 %v1041
    %v2385 = vunpack.c.h.b16 %v1041
    %v2386 = vunpack.c.l.b16 %v1042
    %v2387 = vunpack.c.h.b16 %v1042
    %v2388 = vunpack.c.l.b16 %v1043
    %v2389 = vunpack.c.h.b16 %v1043
    %v2390 = vunpack.c.l.b16 %v1044
    %v2391 = vunpack.c.h.b16 %v1044
    %v2392 = vunpack.c.l.b16 %v1045
    %v2393 = vunpack.c.h.b16 %v1045
    %v2394 = vunpack.c.l.b16 %v1046
    %v2395 = vunpack.c.h.b16 %v1046
    %v2396 = vunpack.c.l.b16 %v1047
    %v2397 = vunpack.c.h.b16 %v1047
    %v2398 = vunpack.c.l.b16 %v1048
    %v2399 = vunpack.c.h.b16 %v1048
    %v2400 = vunpack.c.l.b16 %v1049
    %v2401 = vunpack.c.h.b16 %v1049
    %v2402 = vunpack.c.l.b16 %v1050
    %v2403 = vunpack.c.h.b16 %v1050
    %v2404 = vunpack.c.l.b16 %v1051
    %v2405 = vunpack.c.h.b16 %v1051
    %v2406 = vunpack.c.l.b16 %v1052
    %v2407 = vunpack.c.h.b16 %v1052
    %v2408 = vunpack.c.l.b16 %v1053
    %v2409 = vunpack.c.h.b16 %v1053
    %v2410 = vunpack.c.l.b16 %v1054
    %v2411 = vunpack.c.h.b16 %v1054
    %v2412 = vunpack.c.l.b16 %v1055
    %v2413 = vunpack.c.h.b16 %v1055
    %v2414 = vunpack.c.l.b16 %v1056
    %v2415 = vunpack.c.h.b16 %v1056
    %v2416 = vunpack.c.l.b16 %v1057
    %v2417 = vunpack.c.h.b16 %v1057
    %v2418 = vunpack.c.l.b16 %v1058
    %v2419 = vunpack.c.h.b16 %v1058
    %v2420 = vunpack.c.l.b16 %v1059
    %v2421 = vunpack.c.h.b16 %v1059
    %v2422 = vunpack.c.l.b16 %v1060
    %v2423 = vunpack.c.h.b16 %v1060
    %v2424 = vunpack.c.l.b16 %v1061
    %v2425 = vunpack.c.h.b16 %v1061
    %v2426 = vunpack.c.l.b16 %v1062
    %v2427 = vunpack.c.h.b16 %v1062
    %v2428 = vunpack.c.l.b16 %v1063
    %v2429 = vunpack.c.h.b16 %v1063
    %v2430 = vunpack.c.l.b16 %v1064
    %v2431 = vunpack.c.h.b16 %v1064
    %v2432 = vunpack.c.l.b16 %v1065
    %v2433 = vunpack.c.h.b16 %v1065
    %v2434 = vunpack.c.l.b16 %v1066
    %v2435 = vunpack.c.h.b16 %v1066
    %v2436 = vunpack.c.l.b16 %v1067
    %v2437 = vunpack.c.h.b16 %v1067
    %v2438 = vunpack.c.l.b16 %v1068
    %v2439 = vunpack.c.h.b16 %v1068
    %v2440 = vunpack.c.l.b16 %v1069
    %v2441 = vunpack.c.h.b16 %v1069
    %v2442 = vunpack.c.l.b16 %v1070
    %v2443 = vunpack.c.h.b16 %v1070
    %v2444 = vunpack.c.l.b16 %v1071
    %v2445 = vunpack.c.h.b16 %v1071
    %v2446 = vunpack.c.l.b16 %v1072
    %v2447 = vunpack.c.h.b16 %v1072
    %v2448 = vunpack.c.l.b16 %v1073
    %v2449 = vunpack.c.h.b16 %v1073
    %v2450 = vunpack.c.l.b16 %v1074
    %v2451 = vunpack.c.h.b16 %v1074
    %v2452 = vunpack.c.l.b16 %v1075
    %v2453 = vunpack.c.h.b16 %v1075
    %v2454 = vunpack.c.l.b16 %v1076
    %v2455 = vunpack.c.h.b16 %v1076
    %v2456 = vunpack.c.l.b16 %v1077
    %v2457 = vunpack.c.h.b16 %v1077
    %v2458 = vunpack.c.l.b16 %v1078
    %v2459 = vunpack.c.h.b16 %v1078
    %v2460 = vunpack.c.l.b16 %v1079
    %v2461 = vunpack.c.h.b16 %v1079
    %v2462 = vunpack.c.l.b16 %v1080
    %v2463 = vunpack.c.h.b16 %v1080
    %v2464 = vunpack.c.l.b16 %v1081
    %v2465 = vunpack.c.h.b16 %v1081
    %v2466 = vunpack.c.l.b16 %v1082
    %v2467 = vunpack.c.h.b16 %v1082
    %v2468 = vunpack.c.l.b16 %v1083
    %v2469 = vunpack.c.h.b16 %v1083
    %v2470 = vunpack.c.l.b16 %v1084
    %v2471 = vunpack.c.h.b16 %v1084
    %v2472 = vunpack.c.l.b16 %v1085
    %v2473 = vunpack.c.h.b16 %v1085
    %v2474 = vunpack.c.l.b16 %v1086
    %v2475 = vunpack.c.h.b16 %v1086
    %v2476 = vunpack.c.l.b16 %v1087
    %v2477 = vunpack.c.h.b16 %v1087
    %v2478 = vunpack.c.l.b16 %v1088
    %v2479 = vunpack.c.h.b16 %v1088
    %v2480 = vunpack.c.l.b16 %v1089
    %v2481 = vunpack.c.h.b16 %v1089
    %v2482 = vunpack.c.l.b16 %v1090
    %v2483 = vunpack.c.h.b16 %v1090
    %v2484 = vunpack.c.l.b16 %v1091
    %v2485 = vunpack.c.h.b16 %v1091
    %v2486 = vunpack.c.l.b16 %v1092
    %v2487 = vunpack.c.h.b16 %v1092
    %v2488 = vunpack.c.l.b16 %v1093
    %v2489 = vunpack.c.h.b16 %v1093
    %v2490 = vunpack.c.l.b16 %v1094
    %v2491 = vunpack.c.h.b16 %v1094
    %v2492 = vunpack.c.l.b16 %v1095
    %v2493 = vunpack.c.h.b16 %v1095
    %v2494 = vunpack.c.l.b16 %v1096
    %v2495 = vunpack.c.h.b16 %v1096
    %v2496 = vunpack.c.l.b16 %v1097
    %v2497 = vunpack.c.h.b16 %v1097
    %v2498 = vunpack.c.l.b16 %v1098
    %v2499 = vunpack.c.h.b16 %v1098
    %v2500 = vunpack.c.l.b16 %v1099
    %v2501 = vunpack.c.h.b16 %v1099
    %v2502 = vunpack.c.l.b16 %v1100
    %v2503 = vunpack.c.h.b16 %v1100
    %v2504 = vunpack.c.l.b16 %v1101
    %v2505 = vunpack.c.h.b16 %v1101
    %v2506 = vunpack.c.l.b16 %v1102
    %v2507 = vunpack.c.h.b16 %v1102
    %v2508 = vunpack.c.l.b16 %v1103
    %v2509 = vunpack.c.h.b16 %v1103
    %v2510 = vunpack.c.l.b16 %v1104
    %v2511 = vunpack.c.h.b16 %v1104
    %v2512 = vunpack.c.l.b16 %v1105
    %v2513 = vunpack.c.h.b16 %v1105
    %v2514 = vunpack.c.l.b16 %v1106
    %v2515 = vunpack.c.h.b16 %v1106
    %v2516 = vunpack.c.l.b16 %v1107
    %v2517 = vunpack.c.h.b16 %v1107
    %v2518 = vunpack.c.l.b16 %v1108
    %v2519 = vunpack.c.h.b16 %v1108
    %v2520 = vunpack.c.l.b16 %v1109
    %v2521 = vunpack.c.h.b16 %v1109
    %v2522 = vunpack.c.l.b16 %v1110
    %v2523 = vunpack.c.h.b16 %v1110
    %v2524 = vunpack.c.l.b16 %v1111
    %v2525 = vunpack.c.h.b16 %v1111
    %v2526 = vunpack.c.l.b16 %v1112
    %v2527 = vunpack.c.h.b16 %v1112
    %v2528 = vunpack.c.l.b16 %v1113
    %v2529 = vunpack.c.h.b16 %v1113
    %v2530 = vunpack.c.l.b16 %v1114
    %v2531 = vunpack.c.h.b16 %v1114
    %v2532 = vunpack.c.l.b16 %v1115
    %v2533 = vunpack.c.h.b16 %v1115
    %v2534 = vunpack.c.l.b16 %v1116
    %v2535 = vunpack.c.h.b16 %v1116
    %v2536 = vunpack.c.l.b16 %v1117
    %v2537 = vunpack.c.h.b16 %v1117
    %v2538 = vunpack.c.l.b16 %v1118
    %v2539 = vunpack.c.h.b16 %v1118
    %v2540 = vunpack.c.l.b16 %v1119
    %v2541 = vunpack.c.h.b16 %v1119
    %v2542 = vunpack.c.l.b16 %v1120
    %v2543 = vunpack.c.h.b16 %v1120
    %v2544 = vunpack.c.l.b16 %v1121
    %v2545 = vunpack.c.h.b16 %v1121
    %v2546 = vunpack.c.l.b16 %v1122
    %v2547 = vunpack.c.h.b16 %v1122
    %v2548 = vunpack.c.l.b16 %v1123
    %v2549 = vunpack.c.h.b16 %v1123
    %v2550 = vunpack.c.l.b16 %v1124
    %v2551 = vunpack.c.h.b16 %v1124
    %v2552 = vunpack.c.l.b16 %v1125
    %v2553 = vunpack.c.h.b16 %v1125
    %v2554 = vunpack.c.l.b16 %v1126
    %v2555 = vunpack.c.h.b16 %v1126
    %v2556 = vunpack.c.l.b16 %v1127
    %v2557 = vunpack.c.h.b16 %v1127
    %v2558 = vunpack.c.l.b16 %v1128
    %v2559 = vunpack.c.h.b16 %v1128
    %v2560 = vunpack.c.l.b16 %v1129
    %v2561 = vunpack.c.h.b16 %v1129
    %v2562 = vunpack.c.l.b16 %v1130
    %v2563 = vunpack.c.h.b16 %v1130
    %v2564 = vunpack.c.l.b16 %v1131
    %v2565 = vunpack.c.h.b16 %v1131
    %v2566 = vunpack.c.l.b16 %v1132
    %v2567 = vunpack.c.h.b16 %v1132
    %v2568 = vunpack.c.l.b16 %v1133
    %v2569 = vunpack.c.h.b16 %v1133
    %v2570 = vunpack.c.l.b16 %v1134
    %v2571 = vunpack.c.h.b16 %v1134
    %v2572 = vunpack.c.l.b16 %v1135
    %v2573 = vunpack.c.h.b16 %v1135
    %v2574 = vunpack.c.l.b16 %v1136
    %v2575 = vunpack.c.h.b16 %v1136
    %v2576 = vunpack.c.l.b16 %v1137
    %v2577 = vunpack.c.h.b16 %v1137
    %v2578 = vunpack.c.l.b16 %v1138
    %v2579 = vunpack.c.h.b16 %v1138
    %v2580 = vunpack.c.l.b16 %v1139
    %v2581 = vunpack.c.h.b16 %v1139
    %v2582 = vunpack.c.l.b16 %v1140
    %v2583 = vunpack.c.h.b16 %v1140
    %v2584 = vunpack.c.l.b16 %v1141
    %v2585 = vunpack.c.h.b16 %v1141
    %v2586 = vunpack.c.l.b16 %v1142
    %v2587 = vunpack.c.h.b16 %v1142
    %v2588 = vunpack.c.l.b16 %v1143
    %v2589 = vunpack.c.h.b16 %v1143
    %v2590 = vunpack.c.l.b16 %v1144
    %v2591 = vunpack.c.h.b16 %v1144
    %v2592 = vunpack.c.l.b16 %v1145
    %v2593 = vunpack.c.h.b16 %v1145
    %v2594 = vunpack.c.l.b16 %v1146
    %v2595 = vunpack.c.h.b16 %v1146
    %v2596 = vunpack.c.l.b16 %v1147
    %v2597 = vunpack.c.h.b16 %v1147
    %v2598 = vunpack.c.l.b16 %v1148
    %v2599 = vunpack.c.h.b16 %v1148
    %v2600 = vunpack.c.l.b16 %v1149
    %v2601 = vunpack.c.h.b16 %v1149
    %v2602 = vunpack.c.l.b16 %v1150
    %v2603 = vunpack.c.h.b16 %v1150
    %v2604 = vunpack.c.l.b16 %v1151
    %v2605 = vunpack.c.h.b16 %v1151
    %v2606 = vunpack.c.l.b16 %v1152
    %v2607 = vunpack.c.h.b16 %v1152
    %v2608 = vunpack.c.l.b16 %v1153
    %v2609 = vunpack.c.h.b16 %v1153
    %v2610 = vunpack.c.l.b16 %v1154
    %v2611 = vunpack.c.h.b16 %v1154
    %v2612 = vunpack.c.l.b16 %v1155
    %v2613 = vunpack.c.h.b16 %v1155
    %v2614 = vunpack.c.l.b16 %v1156
    %v2615 = vunpack.c.h.b16 %v1156
    %v2616 = vunpack.c.l.b16 %v1157
    %v2617 = vunpack.c.h.b16 %v1157
    %v2618 = vunpack.c.l.b16 %v1158
    %v2619 = vunpack.c.h.b16 %v1158
    %v2620 = vunpack.c.l.b16 %v1159
    %v2621 = vunpack.c.h.b16 %v1159
    %v2622 = vunpack.c.l.b16 %v1160
    %v2623 = vunpack.c.h.b16 %v1160
    %v2624 = vunpack.c.l.b16 %v1161
    %v2625 = vunpack.c.h.b16 %v1161
    %v2626 = vunpack.c.l.b16 %v1162
    %v2627 = vunpack.c.h.b16 %v1162
    %v2628 = vunpack.c.l.b16 %v1163
    %v2629 = vunpack.c.h.b16 %v1163
    %v2630 = vunpack.c.l.b16 %v1164
    %v2631 = vunpack.c.h.b16 %v1164
    %v2632 = vunpack.c.l.b16 %v1165
    %v2633 = vunpack.c.h.b16 %v1165
    %v2634 = vunpack.c.l.b16 %v1166
    %v2635 = vunpack.c.h.b16 %v1166
    %v2636 = vunpack.c.l.b16 %v1167
    %v2637 = vunpack.c.h.b16 %v1167
    %v2638 = vunpack.c.l.b16 %v1168
    %v2639 = vunpack.c.h.b16 %v1168
    %v2640 = vunpack.c.l.b16 %v1169
    %v2641 = vunpack.c.h.b16 %v1169
    %v2642 = vunpack.c.l.b16 %v1170
    %v2643 = vunpack.c.h.b16 %v1170
    %v2644 = vunpack.c.l.b16 %v1171
    %v2645 = vunpack.c.h.b16 %v1171
    %v2646 = vunpack.c.l.b16 %v1172
    %v2647 = vunpack.c.h.b16 %v1172
    %v2648 = vunpack.c.l.b16 %v1173
    %v2649 = vunpack.c.h.b16 %v1173
    %v2650 = vunpack.c.l.b16 %v1174
    %v2651 = vunpack.c.h.b16 %v1174
    %v2652 = vunpack.c.l.b16 %v1175
    %v2653 = vunpack.c.h.b16 %v1175
    %v2654 = vunpack.c.l.b16 %v1176
    %v2655 = vunpack.c.h.b16 %v1176
    %v2656 = vunpack.c.l.b16 %v1177
    %v2657 = vunpack.c.h.b16 %v1177
    %v2658 = vunpack.c.l.b16 %v1178
    %v2659 = vunpack.c.h.b16 %v1178
    %v2660 = vunpack.c.l.b16 %v1179
    %v2661 = vunpack.c.h.b16 %v1179
    %v2662 = vunpack.c.l.b16 %v1180
    %v2663 = vunpack.c.h.b16 %v1180
    %v2664 = vunpack.c.l.b16 %v1181
    %v2665 = vunpack.c.h.b16 %v1181
    %v2666 = vunpack.c.l.b16 %v1182
    %v2667 = vunpack.c.h.b16 %v1182
    %v2668 = vunpack.c.l.b16 %v1183
    %v2669 = vunpack.c.h.b16 %v1183
    %v2670 = vunpack.c.l.b16 %v1184
    %v2671 = vunpack.c.h.b16 %v1184
    %v2672 = vunpack.c.l.b16 %v1185
    %v2673 = vunpack.c.h.b16 %v1185
    %v2674 = vunpack.c.l.b16 %v1186
    %v2675 = vunpack.c.h.b16 %v1186
    %v2676 = vunpack.c.l.b16 %v1187
    %v2677 = vunpack.c.h.b16 %v1187
    %v2678 = vunpack.c.l.b16 %v1188
    %v2679 = vunpack.c.h.b16 %v1188
    %v2680 = vunpack.c.l.b16 %v1189
    %v2681 = vunpack.c.h.b16 %v1189
    %v2682 = vunpack.c.l.b16 %v1190
    %v2683 = vunpack.c.h.b16 %v1190
    %v2684 = vunpack.c.l.b16 %v1191
    %v2685 = vunpack.c.h.b16 %v1191
    %v2686 = vunpack.c.l.b16 %v1192
    %v2687 = vunpack.c.h.b16 %v1192
    %v2688 = vunpack.c.l.b16 %v1193
    %v2689 = vunpack.c.h.b16 %v1193
    %v2690 = vunpack.c.l.b16 %v1194
    %v2691 = vunpack.c.h.b16 %v1194
    %v2692 = vunpack.c.l.b16 %v1195
    %v2693 = vunpack.c.h.b16 %v1195
    %v2694 = vunpack.c.l.b16 %v1196
    %v2695 = vunpack.c.h.b16 %v1196
    %v2696 = vunpack.c.l.b16 %v1197
    %v2697 = vunpack.c.h.b16 %v1197
    %v2698 = vunpack.c.l.b16 %v1198
    %v2699 = vunpack.c.h.b16 %v1198
    %v2700 = vunpack.c.l.b16 %v1199
    %v2701 = vunpack.c.h.b16 %v1199
    %v2702 = vunpack.c.l.b16 %v1200
    %v2703 = vunpack.c.h.b16 %v1200
    %v2704 = vunpack.c.l.b16 %v1201
    %v2705 = vunpack.c.h.b16 %v1201
    %v2706 = vunpack.c.l.b16 %v1202
    %v2707 = vunpack.c.h.b16 %v1202
    %v2708 = vunpack.c.l.b16 %v1203
    %v2709 = vunpack.c.h.b16 %v1203
    %v2710 = vunpack.c.l.b16 %v1204
    %v2711 = vunpack.c.h.b16 %v1204
    %v2712 = vunpack.c.l.b16 %v1205
    %v2713 = vunpack.c.h.b16 %v1205
    %v2714 = vunpack.c.l.b16 %v1206
    %v2715 = vunpack.c.h.b16 %v1206
    %v2716 = vunpack.c.l.b16 %v1207
    %v2717 = vunpack.c.h.b16 %v1207
    %v2718 = vunpack.c.l.b16 %v1208
    %v2719 = vunpack.c.h.b16 %v1208
    %v2720 = vunpack.c.l.b16 %v1209
    %v2721 = vunpack.c.h.b16 %v1209
    %v2722 = vunpack.c.l.b16 %v1210
    %v2723 = vunpack.c.h.b16 %v1210
    %v2724 = vunpack.c.l.b16 %v1211
    %v2725 = vunpack.c.h.b16 %v1211
    %v2726 = vunpack.c.l.b16 %v1212
    %v2727 = vunpack.c.h.b16 %v1212
    %v2728 = vunpack.c.l.b16 %v1213
    %v2729 = vunpack.c.h.b16 %v1213
    %v2730 = vunpack.c.l.b16 %v1214
    %v2731 = vunpack.c.h.b16 %v1214
    %v2732 = vunpack.c.l.b16 %v1215
    %v2733 = vunpack.c.h.b16 %v1215
    %v2734 = vunpack.c.l.b16 %v1216
    %v2735 = vunpack.c.h.b16 %v1216
    %v2736 = vunpack.c.l.b16 %v1217
    %v2737 = vunpack.c.h.b16 %v1217
    %v2738 = vunpack.c.l.b16 %v1218
    %v2739 = vunpack.c.h.b16 %v1218
    %v2740 = vunpack.c.l.b16 %v1219
    %v2741 = vunpack.c.h.b16 %v1219
    %v2742 = vunpack.c.l.b16 %v1220
    %v2743 = vunpack.c.h.b16 %v1220
    %v2744 = vunpack.c.l.b16 %v1221
    %v2745 = vunpack.c.h.b16 %v1221
    %v2746 = vunpack.c.l.b16 %v1222
    %v2747 = vunpack.c.h.b16 %v1222
    %v2748 = vunpack.c.l.b16 %v1223
    %v2749 = vunpack.c.h.b16 %v1223
    %v2750 = vunpack.c.l.b16 %v1224
    %v2751 = vunpack.c.h.b16 %v1224
    %v2752 = vunpack.c.l.b16 %v1225
    %v2753 = vunpack.c.h.b16 %v1225
    %v2754 = vunpack.c.l.b16 %v1226
    %v2755 = vunpack.c.h.b16 %v1226
    %v2756 = vunpack.c.l.b16 %v1227
    %v2757 = vunpack.c.h.b16 %v1227
    %v2758 = vunpack.c.l.b16 %v1228
    %v2759 = vunpack.c.h.b16 %v1228
    %v2760 = vunpack.c.l.b16 %v1229
    %v2761 = vunpack.c.h.b16 %v1229
    %v2762 = vunpack.c.l.b16 %v1230
    %v2763 = vunpack.c.h.b16 %v1230
    %v2764 = vunpack.c.l.b16 %v1231
    %v2765 = vunpack.c.h.b16 %v1231
    %v2766 = vunpack.c.l.b16 %v1232
    %v2767 = vunpack.c.h.b16 %v1232
    %v2768 = vunpack.c.l.b16 %v1233
    %v2769 = vunpack.c.h.b16 %v1233
    %v2770 = vunpack.c.l.b16 %v1234
    %v2771 = vunpack.c.h.b16 %v1234
    %v2772 = vunpack.c.l.b16 %v1235
    %v2773 = vunpack.c.h.b16 %v1235
    %v2774 = vunpack.c.l.b16 %v1236
    %v2775 = vunpack.c.h.b16 %v1236
    %v2776 = vunpack.c.l.b16 %v1237
    %v2777 = vunpack.c.h.b16 %v1237
    %v2778 = vunpack.c.l.b16 %v1238
    %v2779 = vunpack.c.h.b16 %v1238
    %v2780 = vunpack.c.l.b16 %v1239
    %v2781 = vunpack.c.h.b16 %v1239
    %v2782 = vunpack.c.l.b16 %v1240
    %v2783 = vunpack.c.h.b16 %v1240
    %v2784 = vunpack.c.l.b16 %v1241
    %v2785 = vunpack.c.h.b16 %v1241
    %v2786 = vunpack.c.l.b16 %v1242
    %v2787 = vunpack.c.h.b16 %v1242
    %v2788 = vunpack.c.l.b16 %v1243
    %v2789 = vunpack.c.h.b16 %v1243
    %v2790 = vunpack.c.l.b16 %v1244
    %v2791 = vunpack.c.h.b16 %v1244
    %v2792 = vunpack.c.l.b16 %v1245
    %v2793 = vunpack.c.h.b16 %v1245
    %v2794 = vunpack.c.l.b16 %v1246
    %v2795 = vunpack.c.h.b16 %v1246
    %v2796 = vunpack.c.l.b16 %v1247
    %v2797 = vunpack.c.h.b16 %v1247
    %v2798 = vunpack.c.l.b16 %v1248
    %v2799 = vunpack.c.h.b16 %v1248
    %v2800 = vunpack.c.l.b16 %v1249
    %v2801 = vunpack.c.h.b16 %v1249
    %v2802 = vunpack.c.l.b16 %v1250
    %v2803 = vunpack.c.h.b16 %v1250
    %v2804 = vunpack.c.l.b16 %v1251
    %v2805 = vunpack.c.h.b16 %v1251
    %v2806 = vunpack.c.l.b16 %v1252
    %v2807 = vunpack.c.h.b16 %v1252
    %v2808 = vunpack.c.l.b16 %v1253
    %v2809 = vunpack.c.h.b16 %v1253
    %v2810 = vunpack.c.l.b16 %v1254
    %v2811 = vunpack.c.h.b16 %v1254
    %v2812 = vunpack.c.l.b16 %v1255
    %v2813 = vunpack.c.h.b16 %v1255
    %v2814 = vunpack.c.l.b16 %v1256
    %v2815 = vunpack.c.h.b16 %v1256
    %v2816 = vunpack.c.l.b16 %v1257
    %v2817 = vunpack.c.h.b16 %v1257
    %v2818 = vunpack.c.l.b16 %v1258
    %v2819 = vunpack.c.h.b16 %v1258
    %v2820 = vunpack.c.l.b16 %v1259
    %v2821 = vunpack.c.h.b16 %v1259
    %v2822 = vunpack.c.l.b16 %v1260
    %v2823 = vunpack.c.h.b16 %v1260
    %v2824 = vunpack.c.l.b16 %v1261
    %v2825 = vunpack.c.h.b16 %v1261
    %v2826 = vunpack.c.l.b16 %v1262
    %v2827 = vunpack.c.h.b16 %v1262
    %v2828 = vunpack.c.l.b16 %v1263
    %v2829 = vunpack.c.h.b16 %v1263
    %v2830 = vunpack.c.l.b16 %v1264
    %v2831 = vunpack.c.h.b16 %v1264
    %v2832 = vunpack.c.l.b16 %v1265
    %v2833 = vunpack.c.h.b16 %v1265
    %v2834 = vunpack.c.l.b16 %v1266
    %v2835 = vunpack.c.h.b16 %v1266
    %v2836 = vunpack.c.l.b16 %v1267
    %v2837 = vunpack.c.h.b16 %v1267
    %v2838 = vunpack.c.l.b16 %v1268
    %v2839 = vunpack.c.h.b16 %v1268
    %v2840 = vunpack.c.l.b16 %v1269
    %v2841 = vunpack.c.h.b16 %v1269
    %v2842 = vunpack.c.l.b16 %v1270
    %v2843 = vunpack.c.h.b16 %v1270
    %v2844 = vunpack.c.l.b16 %v1271
    %v2845 = vunpack.c.h.b16 %v1271
    %v2846 = vunpack.c.l.b16 %v1272
    %v2847 = vunpack.c.h.b16 %v1272
    %v2848 = vunpack.c.l.b16 %v1273
    %v2849 = vunpack.c.h.b16 %v1273
    %v2850 = vunpack.c.l.b16 %v1274
    %v2851 = vunpack.c.h.b16 %v1274
    %v2852 = vunpack.c.l.b16 %v1275
    %v2853 = vunpack.c.h.b16 %v1275
    %v2854 = vpack.c.b16 %v1838, %v1830
    %v2855 = vpack.c.b16 %v1839, %v1831
    %v2856 = vpack.c.b16 %v1840, %v1832
    %v2857 = vpack.c.b16 %v1841, %v1833
    %v2858 = vpack.c.b16 %v1842, %v1834
    %v2859 = vpack.c.b16 %v1843, %v1835
    %v2860 = vpack.c.b16 %v1844, %v1836
    %v2861 = vpack.c.b16 %v1845, %v1837
    %v2862 = vpack.c.b16 %v1854, %v1846
    %v2863 = vpack.c.b16 %v1855, %v1847
    %v2864 = vpack.c.b16 %v1856, %v1848
    %v2865 = vpack.c.b16 %v1857, %v1849
    %v2866 = vpack.c.b16 %v1858, %v1850
    %v2867 = vpack.c.b16 %v1859, %v1851
    %v2868 = vpack.c.b16 %v1860, %v1852
    %v2869 = vpack.c.b16 %v1861, %v1853
    %v2870 = vpack.c.b16 %v1870, %v1862
    %v2871 = vpack.c.b16 %v1871, %v1863
    %v2872 = vpack.c.b16 %v1872, %v1864
    %v2873 = vpack.c.b16 %v1873, %v1865
    %v2874 = vpack.c.b16 %v1874, %v1866
    %v2875 = vpack.c.b16 %v1875, %v1867
    %v2876 = vpack.c.b16 %v1876, %v1868
    %v2877 = vpack.c.b16 %v1877, %v1869
    %v2878 = vpack.c.b16 %v1886, %v1878
    %v2879 = vpack.c.b16 %v1887, %v1879
    %v2880 = vpack.c.b16 %v1888, %v1880
    %v2881 = vpack.c.b16 %v1889, %v1881
    %v2882 = vpack.c.b16 %v1890, %v1882
    %v2883 = vpack.c.b16 %v1891, %v1883
    %v2884 = vpack.c.b16 %v1892, %v1884
    %v2885 = vpack.c.b16 %v1893, %v1885
    %v2886 = vpack.c.b16 %v1902, %v1894
    %v2887 = vpack.c.b16 %v1903, %v1895
    %v2888 = vpack.c.b16 %v1904, %v1896
    %v2889 = vpack.c.b16 %v1905, %v1897
    %v2890 = vpack.c.b16 %v1906, %v1898
    %v2891 = vpack.c.b16 %v1907, %v1899
    %v2892 = vpack.c.b16 %v1908, %v1900
    %v2893 = vpack.c.b16 %v1909, %v1901
    %v2894 = vpack.c.b16 %v1918, %v1910
    %v2895 = vpack.c.b16 %v1919, %v1911
    %v2896 = vpack.c.b16 %v1920, %v1912
    %v2897 = vpack.c.b16 %v1921, %v1913
    %v2898 = vpack.c.b16 %v1922, %v1914
    %v2899 = vpack.c.b16 %v1923, %v1915
    %v2900 = vpack.c.b16 %v1924, %v1916
    %v2901 = vpack.c.b16 %v1925, %v1917
    %v2902 = vpack.c.b16 %v1934, %v1926
    %v2903 = vpack.c.b16 %v1935, %v1927
    %v2904 = vpack.c.b16 %v1936, %v1928
    %v2905 = vpack.c.b16 %v1937, %v1929
    %v2906 = vpack.c.b16 %v1938, %v1930
    %v2907 = vpack.c.b16 %v1939, %v1931
    %v2908 = vpack.c.b16 %v1940, %v1932
    %v2909 = vpack.c.b16 %v1941, %v1933
    %v2910 = vpack.c.b16 %v1950, %v1942
    %v2911 = vpack.c.b16 %v1951, %v1943
    %v2912 = vpack.c.b16 %v1952, %v1944
    %v2913 = vpack.c.b16 %v1953, %v1945
    %v2914 = vpack.c.b16 %v1954, %v1946
    %v2915 = vpack.c.b16 %v1955, %v1947
    %v2916 = vpack.c.b16 %v1956, %v1948
    %v2917 = vpack.c.b16 %v1957, %v1949
    %v2918 = vpack.c.b16 %v1966, %v1958
    %v2919 = vpack.c.b16 %v1967, %v1959
    %v2920 = vpack.c.b16 %v1968, %v1960
    %v2921 = vpack.c.b16 %v1969, %v1961
    %v2922 = vpack.c.b16 %v1970, %v1962
    %v2923 = vpack.c.b16 %v1971, %v1963
    %v2924 = vpack.c.b16 %v1972, %v1964
    %v2925 = vpack.c.b16 %v1973, %v1965
    %v2926 = vpack.c.b16 %v1982, %v1974
    %v2927 = vpack.c.b16 %v1983, %v1975
    %v2928 = vpack.c.b16 %v1984, %v1976
    %v2929 = vpack.c.b16 %v1985, %v1977
    %v2930 = vpack.c.b16 %v1986, %v1978
    %v2931 = vpack.c.b16 %v1987, %v1979
    %v2932 = vpack.c.b16 %v1988, %v1980
    %v2933 = vpack.c.b16 %v1989, %v1981
    %v2934 = vpack.c.b16 %v1998, %v1990
    %v2935 = vpack.c.b16 %v1999, %v1991
    %v2936 = vpack.c.b16 %v2000, %v1992
    %v2937 = vpack.c.b16 %v2001, %v1993
    %v2938 = vpack.c.b16 %v2002, %v1994
    %v2939 = vpack.c.b16 %v2003, %v1995
    %v2940 = vpack.c.b16 %v2004, %v1996
    %v2941 = vpack.c.b16 %v2005, %v1997
    %v2942 = vpack.c.b16 %v2014, %v2006
    %v2943 = vpack.c.b16 %v2015, %v2007
    %v2944 = vpack.c.b16 %v2016, %v2008
    %v2945 = vpack.c.b16 %v2017, %v2009
    %v2946 = vpack.c.b16 %v2018, %v2010
    %v2947 = vpack.c.b16 %v2019, %v2011
    %v2948 = vpack.c.b16 %v2020, %v2012
    %v2949 = vpack.c.b16 %v2021, %v2013
    %v2950 = vpack.c.b16 %v2030, %v2022
    %v2951 = vpack.c.b16 %v2031, %v2023
    %v2952 = vpack.c.b16 %v2032, %v2024
    %v2953 = vpack.c.b16 %v2033, %v2025
    %v2954 = vpack.c.b16 %v2034, %v2026
    %v2955 = vpack.c.b16 %v2035, %v2027
    %v2956 = vpack.c.b16 %v2036, %v2028
    %v2957 = vpack.c.b16 %v2037, %v2029
    %v2958 = vpack.c.b16 %v2046, %v2038
    %v2959 = vpack.c.b16 %v2047, %v2039
    %v2960 = vpack.c.b16 %v2048, %v2040
    %v2961 = vpack.c.b16 %v2049, %v2041
    %v2962 = vpack.c.b16 %v2050, %v2042
    %v2963 = vpack.c.b16 %v2051, %v2043
    %v2964 = vpack.c.b16 %v2052, %v2044
    %v2965 = vpack.c.b16 %v2053, %v2045
    %v2966 = vpack.c.b16 %v2062, %v2054
    %v2967 = vpack.c.b16 %v2063, %v2055
    %v2968 = vpack.c.b16 %v2064, %v2056
    %v2969 = vpack.c.b16 %v2065, %v2057
    %v2970 = vpack.c.b16 %v2066, %v2058
    %v2971 = vpack.c.b16 %v2067, %v2059
    %v2972 = vpack.c.b16 %v2068, %v2060
    %v2973 = vpack.c.b16 %v2069, %v2061
    %v2974 = vpack.c.b16 %v2078, %v2070
    %v2975 = vpack.c.b16 %v2079, %v2071
    %v2976 = vpack.c.b16 %v2080, %v2072
    %v2977 = vpack.c.b16 %v2081, %v2073
    %v2978 = vpack.c.b16 %v2082, %v2074
    %v2979 = vpack.c.b16 %v2083, %v2075
    %v2980 = vpack.c.b16 %v2084, %v2076
    %v2981 = vpack.c.b16 %v2085, %v2077
    %v2982 = vpack.c.b16 %v2094, %v2086
    %v2983 = vpack.c.b16 %v2095, %v2087
    %v2984 = vpack.c.b16 %v2096, %v2088
    %v2985 = vpack.c.b16 %v2097, %v2089
    %v2986 = vpack.c.b16 %v2098, %v2090
    %v2987 = vpack.c.b16 %v2099, %v2091
    %v2988 = vpack.c.b16 %v2100, %v2092
    %v2989 = vpack.c.b16 %v2101, %v2093
    %v2990 = vpack.c.b16 %v2110, %v2102
    %v2991 = vpack.c.b16 %v2111, %v2103
    %v2992 = vpack.c.b16 %v2112, %v2104
    %v2993 = vpack.c.b16 %v2113, %v2105
    %v2994 = vpack.c.b16 %v2114, %v2106
    %v2995 = vpack.c.b16 %v2115, %v2107
    %v2996 = vpack.c.b16 %v2116, %v2108
    %v2997 = vpack.c.b16 %v2117, %v2109
    %v2998 = vpack.c.b16 %v2126, %v2118
    %v2999 = vpack.c.b16 %v2127, %v2119
    %v3000 = vpack.c.b16 %v2128, %v2120
    %v3001 = vpack.c.b16 %v2129, %v2121
    %v3002 = vpack.c.b16 %v2130, %v2122
    %v3003 = vpack.c.b16 %v2131, %v2123
    %v3004 = vpack.c.b16 %v2132, %v2124
    %v3005 = vpack.c.b16 %v2133, %v2125
    %v3006 = vpack.c.b16 %v2142, %v2134
    %v3007 = vpack.c.b16 %v2143, %v2135
    %v3008 = vpack.c.b16 %v2144, %v2136
    %v3009 = vpack.c.b16 %v2145, %v2137
    %v3010 = vpack.c.b16 %v2146, %v2138
    %v3011 = vpack.c.b16 %v2147, %v2139
    %v3012 = vpack.c.b16 %v2148, %v2140
    %v3013 = vpack.c.b16 %v2149, %v2141
    %v3014 = vpack.c.b16 %v2158, %v2150
    %v3015 = vpack.c.b16 %v2159, %v2151
    %v3016 = vpack.c.b16 %v2160, %v2152
    %v3017 = vpack.c.b16 %v2161, %v2153
    %v3018 = vpack.c.b16 %v2162, %v2154
    %v3019 = vpack.c.b16 %v2163, %v2155
    %v3020 = vpack.c.b16 %v2164, %v2156
    %v3021 = vpack.c.b16 %v2165, %v2157
    %v3022 = vpack.c.b16 %v2174, %v2166
    %v3023 = vpack.c.b16 %v2175, %v2167
    %v3024 = vpack.c.b16 %v2176, %v2168
    %v3025 = vpack.c.b16 %v2177, %v2169
    %v3026 = vpack.c.b16 %v2178, %v2170
    %v3027 = vpack.c.b16 %v2179, %v2171
    %v3028 = vpack.c.b16 %v2180, %v2172
    %v3029 = vpack.c.b16 %v2181, %v2173
    %v3030 = vpack.c.b16 %v2190, %v2182
    %v3031 = vpack.c.b16 %v2191, %v2183
    %v3032 = vpack.c.b16 %v2192, %v2184
    %v3033 = vpack.c.b16 %v2193, %v2185
    %v3034 = vpack.c.b16 %v2194, %v2186
    %v3035 = vpack.c.b16 %v2195, %v2187
    %v3036 = vpack.c.b16 %v2196, %v2188
    %v3037 = vpack.c.b16 %v2197, %v2189
    %v3038 = vpack.c.b16 %v2206, %v2198
    %v3039 = vpack.c.b16 %v2207, %v2199
    %v3040 = vpack.c.b16 %v2208, %v2200
    %v3041 = vpack.c.b16 %v2209, %v2201
    %v3042 = vpack.c.b16 %v2210, %v2202
    %v3043 = vpack.c.b16 %v2211, %v2203
    %v3044 = vpack.c.b16 %v2212, %v2204
    %v3045 = vpack.c.b16 %v2213, %v2205
    %v3046 = vpack.c.b16 %v2222, %v2214
    %v3047 = vpack.c.b16 %v2223, %v2215
    %v3048 = vpack.c.b16 %v2224, %v2216
    %v3049 = vpack.c.b16 %v2225, %v2217
    %v3050 = vpack.c.b16 %v2226, %v2218
    %v3051 = vpack.c.b16 %v2227, %v2219
    %v3052 = vpack.c.b16 %v2228, %v2220
    %v3053 = vpack.c.b16 %v2229, %v2221
    %v3054 = vpack.c.b16 %v2238, %v2230
    %v3055 = vpack.c.b16 %v2239, %v2231
    %v3056 = vpack.c.b16 %v2240, %v2232
    %v3057 = vpack.c.b16 %v2241, %v2233
    %v3058 = vpack.c.b16 %v2242, %v2234
    %v3059 = vpack.c.b16 %v2243, %v2235
    %v3060 = vpack.c.b16 %v2244, %v2236
    %v3061 = vpack.c.b16 %v2245, %v2237
    %v3062 = vpack.c.b16 %v2254, %v2246
    %v3063 = vpack.c.b16 %v2255, %v2247
    %v3064 = vpack.c.b16 %v2256, %v2248
    %v3065 = vpack.c.b16 %v2257, %v2249
    %v3066 = vpack.c.b16 %v2258, %v2250
    %v3067 = vpack.c.b16 %v2259, %v2251
    %v3068 = vpack.c.b16 %v2260, %v2252
    %v3069 = vpack.c.b16 %v2261, %v2253
    %v3070 = vpack.c.b16 %v2270, %v2262
    %v3071 = vpack.c.b16 %v2271, %v2263
    %v3072 = vpack.c.b16 %v2272, %v2264
    %v3073 = vpack.c.b16 %v2273, %v2265
    %v3074 = vpack.c.b16 %v2274, %v2266
    %v3075 = vpack.c.b16 %v2275, %v2267
    %v3076 = vpack.c.b16 %v2276, %v2268
    %v3077 = vpack.c.b16 %v2277, %v2269
    %v3078 = vpack.c.b16 %v2286, %v2278
    %v3079 = vpack.c.b16 %v2287, %v2279
    %v3080 = vpack.c.b16 %v2288, %v2280
    %v3081 = vpack.c.b16 %v2289, %v2281
    %v3082 = vpack.c.b16 %v2290, %v2282
    %v3083 = vpack.c.b16 %v2291, %v2283
    %v3084 = vpack.c.b16 %v2292, %v2284
    %v3085 = vpack.c.b16 %v2293, %v2285
    %v3086 = vpack.c.b16 %v2302, %v2294
    %v3087 = vpack.c.b16 %v2303, %v2295
    %v3088 = vpack.c.b16 %v2304, %v2296
    %v3089 = vpack.c.b16 %v2305, %v2297
    %v3090 = vpack.c.b16 %v2306, %v2298
    %v3091 = vpack.c.b16 %v2307, %v2299
    %v3092 = vpack.c.b16 %v2308, %v2300
    %v3093 = vpack.c.b16 %v2309, %v2301
    %v3094 = vpack.c.b16 %v2318, %v2310
    %v3095 = vpack.c.b16 %v2319, %v2311
    %v3096 = vpack.c.b16 %v2320, %v2312
    %v3097 = vpack.c.b16 %v2321, %v2313
    %v3098 = vpack.c.b16 %v2322, %v2314
    %v3099 = vpack.c.b16 %v2323, %v2315
    %v3100 = vpack.c.b16 %v2324, %v2316
    %v3101 = vpack.c.b16 %v2325, %v2317
    %v3102 = vpack.c.b16 %v2334, %v2326
    %v3103 = vpack.c.b16 %v2335, %v2327
    %v3104 = vpack.c.b16 %v2336, %v2328
    %v3105 = vpack.c.b16 %v2337, %v2329
    %v3106 = vpack.c.b16 %v2338, %v2330
    %v3107 = vpack.c.b16 %v2339, %v2331
    %v3108 = vpack.c.b16 %v2340, %v2332
    %v3109 = vpack.c.b16 %v2341, %v2333
    %v3110 = vpack.c.b16 %v2350, %v2342
    %v3111 = vpack.c.b16 %v2351, %v2343
    %v3112 = vpack.c.b16 %v2352, %v2344
    %v3113 = vpack.c.b16 %v2353, %v2345
    %v3114 = vpack.c.b16 %v2354, %v2346
    %v3115 = vpack.c.b16 %v2355, %v2347
    %v3116 = vpack.c.b16 %v2356, %v2348
    %v3117 = vpack.c.b16 %v2357, %v2349
    %v3118 = vpack.c.b16 %v2366, %v2358
    %v3119 = vpack.c.b16 %v2367, %v2359
    %v3120 = vpack.c.b16 %v2368, %v2360
    %v3121 = vpack.c.b16 %v2369, %v2361
    %v3122 = vpack.c.b16 %v2370, %v2362
    %v3123 = vpack.c.b16 %v2371, %v2363
    %v3124 = vpack.c.b16 %v2372, %v2364
    %v3125 = vpack.c.b16 %v2373, %v2365
    %v3126 = vpack.c.b16 %v2382, %v2374
    %v3127 = vpack.c.b16 %v2383, %v2375
    %v3128 = vpack.c.b16 %v2384, %v2376
    %v3129 = vpack.c.b16 %v2385, %v2377
    %v3130 = vpack.c.b16 %v2386, %v2378
    %v3131 = vpack.c.b16 %v2387, %v2379
    %v3132 = vpack.c.b16 %v2388, %v2380
    %v3133 = vpack.c.b16 %v2389, %v2381
    %v3134 = vpack.c.b16 %v2398, %v2390
    %v3135 = vpack.c.b16 %v2399, %v2391
    %v3136 = vpack.c.b16 %v2400, %v2392
    %v3137 = vpack.c.b16 %v2401, %v2393
    %v3138 = vpack.c.b16 %v2402, %v2394
    %v3139 = vpack.c.b16 %v2403, %v2395
    %v3140 = vpack.c.b16 %v2404, %v2396
    %v3141 = vpack.c.b16 %v2405, %v2397
    %v3142 = vpack.c.b16 %v2414, %v2406
    %v3143 = vpack.c.b16 %v2415, %v2407
    %v3144 = vpack.c.b16 %v2416, %v2408
    %v3145 = vpack.c.b16 %v2417, %v2409
    %v3146 = vpack.c.b16 %v2418, %v2410
    %v3147 = vpack.c.b16 %v2419, %v2411
    %v3148 = vpack.c.b16 %v2420, %v2412
    %v3149 = vpack.c.b16 %v2421, %v2413
    %v3150 = vpack.c.b16 %v2430, %v2422
    %v3151 = vpack.c.b16 %v2431, %v2423
    %v3152 = vpack.c.b16 %v2432, %v2424
    %v3153 = vpack.c.b16 %v2433, %v2425
    %v3154 = vpack.c.b16 %v2434, %v2426
    %v3155 = vpack.c.b16 %v2435, %v2427
    %v3156 = vpack.c.b16 %v2436, %v2428
    %v3157 = vpack.c.b16 %v2437, %v2429
    %v3158 = vpack.c.b16 %v2446, %v2438
    %v3159 = vpack.c.b16 %v2447, %v2439
    %v3160 = vpack.c.b16 %v2448, %v2440
    %v3161 = vpack.c.b16 %v2449, %v2441
    %v3162 = vpack.c.b16 %v2450, %v2442
    %v3163 = vpack.c.b16 %v2451, %v2443
    %v3164 = vpack.c.b16 %v2452, %v2444
    %v3165 = vpack.c.b16 %v2453, %v2445
    %v3166 = vpack.c.b16 %v2462, %v2454
    %v3167 = vpack.c.b16 %v2463, %v2455
    %v3168 = vpack.c.b16 %v2464, %v2456
    %v3169 = vpack.c.b16 %v2465, %v2457
    %v3170 = vpack.c.b16 %v2466, %v2458
    %v3171 = vpack.c.b16 %v2467, %v2459
    %v3172 = vpack.c.b16 %v2468, %v2460
    %v3173 = vpack.c.b16 %v2469, %v2461
    %v3174 = vpack.c.b16 %v2478, %v2470
    %v3175 = vpack.c.b16 %v2479, %v2471
    %v3176 = vpack.c.b16 %v2480, %v2472
    %v3177 = vpack.c.b16 %v2481, %v2473
    %v3178 = vpack.c.b16 %v2482, %v2474
    %v3179 = vpack.c.b16 %v2483, %v2475
    %v3180 = vpack.c.b16 %v2484, %v2476
    %v3181 = vpack.c.b16 %v2485, %v2477
    %v3182 = vpack.c.b16 %v2494, %v2486
    %v3183 = vpack.c.b16 %v2495, %v2487
    %v3184 = vpack.c.b16 %v2496, %v2488
    %v3185 = vpack.c.b16 %v2497, %v2489
    %v3186 = vpack.c.b16 %v2498, %v2490
    %v3187 = vpack.c.b16 %v2499, %v2491
    %v3188 = vpack.c.b16 %v2500, %v2492
    %v3189 = vpack.c.b16 %v2501, %v2493
    %v3190 = vpack.c.b16 %v2510, %v2502
    %v3191 = vpack.c.b16 %v2511, %v2503
    %v3192 = vpack.c.b16 %v2512, %v2504
    %v3193 = vpack.c.b16 %v2513, %v2505
    %v3194 = vpack.c.b16 %v2514, %v2506
    %v3195 = vpack.c.b16 %v2515, %v2507
    %v3196 = vpack.c.b16 %v2516, %v2508
    %v3197 = vpack.c.b16 %v2517, %v2509
    %v3198 = vpack.c.b16 %v2526, %v2518
    %v3199 = vpack.c.b16 %v2527, %v2519
    %v3200 = vpack.c.b16 %v2528, %v2520
    %v3201 = vpack.c.b16 %v2529, %v2521
    %v3202 = vpack.c.b16 %v2530, %v2522
    %v3203 = vpack.c.b16 %v2531, %v2523
    %v3204 = vpack.c.b16 %v2532, %v2524
    %v3205 = vpack.c.b16 %v2533, %v2525
    %v3206 = vpack.c.b16 %v2542, %v2534
    %v3207 = vpack.c.b16 %v2543, %v2535
    %v3208 = vpack.c.b16 %v2544, %v2536
    %v3209 = vpack.c.b16 %v2545, %v2537
    %v3210 = vpack.c.b16 %v2546, %v2538
    %v3211 = vpack.c.b16 %v2547, %v2539
    %v3212 = vpack.c.b16 %v2548, %v2540
    %v3213 = vpack.c.b16 %v2549, %v2541
    %v3214 = vpack.c.b16 %v2558, %v2550
    %v3215 = vpack.c.b16 %v2559, %v2551
    %v3216 = vpack.c.b16 %v2560, %v2552
    %v3217 = vpack.c.b16 %v2561, %v2553
    %v3218 = vpack.c.b16 %v2562, %v2554
    %v3219 = vpack.c.b16 %v2563, %v2555
    %v3220 = vpack.c.b16 %v2564, %v2556
    %v3221 = vpack.c.b16 %v2565, %v2557
    %v3222 = vpack.c.b16 %v2574, %v2566
    %v3223 = vpack.c.b16 %v2575, %v2567
    %v3224 = vpack.c.b16 %v2576, %v2568
    %v3225 = vpack.c.b16 %v2577, %v2569
    %v3226 = vpack.c.b16 %v2578, %v2570
    %v3227 = vpack.c.b16 %v2579, %v2571
    %v3228 = vpack.c.b16 %v2580, %v2572
    %v3229 = vpack.c.b16 %v2581, %v2573
    %v3230 = vpack.c.b16 %v2590, %v2582
    %v3231 = vpack.c.b16 %v2591, %v2583
    %v3232 = vpack.c.b16 %v2592, %v2584
    %v3233 = vpack.c.b16 %v2593, %v2585
    %v3234 = vpack.c.b16 %v2594, %v2586
    %v3235 = vpack.c.b16 %v2595, %v2587
    %v3236 = vpack.c.b16 %v2596, %v2588
    %v3237 = vpack.c.b16 %v2597, %v2589
    %v3238 = vpack.c.b16 %v2606, %v2598
    %v3239 = vpack.c.b16 %v2607, %v2599
    %v3240 = vpack.c.b16 %v2608, %v2600
    %v3241 = vpack.c.b16 %v2609, %v2601
    %v3242 = vpack.c.b16 %v2610, %v2602
    %v3243 = vpack.c.b16 %v2611, %v2603
    %v3244 = vpack.c.b16 %v2612, %v2604
    %v3245 = vpack.c.b16 %v2613, %v2605
    %v3246 = vpack.c.b16 %v2622, %v2614
    %v3247 = vpack.c.b16 %v2623, %v2615
    %v3248 = vpack.c.b16 %v2624, %v2616
    %v3249 = vpack.c.b16 %v2625, %v2617
    %v3250 = vpack.c.b16 %v2626, %v2618
    %v3251 = vpack.c.b16 %v2627, %v2619
    %v3252 = vpack.c.b16 %v2628, %v2620
    %v3253 = vpack.c.b16 %v2629, %v2621
    %v3254 = vpack.c.b16 %v2638, %v2630
    %v3255 = vpack.c.b16 %v2639, %v2631
    %v3256 = vpack.c.b16 %v2640, %v2632
    %v3257 = vpack.c.b16 %v2641, %v2633
    %v3258 = vpack.c.b16 %v2642, %v2634
    %v3259 = vpack.c.b16 %v2643, %v2635
    %v3260 = vpack.c.b16 %v2644, %v2636
    %v3261 = vpack.c.b16 %v2645, %v2637
    %v3262 = vpack.c.b16 %v2654, %v2646
    %v3263 = vpack.c.b16 %v2655, %v2647
    %v3264 = vpack.c.b16 %v2656, %v2648
    %v3265 = vpack.c.b16 %v2657, %v2649
    %v3266 = vpack.c.b16 %v2658, %v2650
    %v3267 = vpack.c.b16 %v2659, %v2651
    %v3268 = vpack.c.b16 %v2660, %v2652
    %v3269 = vpack.c.b16 %v2661, %v2653
    %v3270 = vpack.c.b16 %v2670, %v2662
    %v3271 = vpack.c.b16 %v2671, %v2663
    %v3272 = vpack.c.b16 %v2672, %v2664
    %v3273 = vpack.c.b16 %v2673, %v2665
    %v3274 = vpack.c.b16 %v2674, %v2666
    %v3275 = vpack.c.b16 %v2675, %v2667
    %v3276 = vpack.c.b16 %v2676, %v2668
    %v3277 = vpack.c.b16 %v2677, %v2669
    %v3278 = vpack.c.b16 %v2686, %v2678
    %v3279 = vpack.c.b16 %v2687, %v2679
    %v3280 = vpack.c.b16 %v2688, %v2680
    %v3281 = vpack.c.b16 %v2689, %v2681
    %v3282 = vpack.c.b16 %v2690, %v2682
    %v3283 = vpack.c.b16 %v2691, %v2683
    %v3284 = vpack.c.b16 %v2692, %v2684
    %v3285 = vpack.c.b16 %v2693, %v2685
    %v3286 = vpack.c.b16 %v2702, %v2694
    %v3287 = vpack.c.b16 %v2703, %v2695
    %v3288 = vpack.c.b16 %v2704, %v2696
    %v3289 = vpack.c.b16 %v2705, %v2697
    %v3290 = vpack.c.b16 %v2706, %v2698
    %v3291 = vpack.c.b16 %v2707, %v2699
    %v3292 = vpack.c.b16 %v2708, %v2700
    %v3293 = vpack.c.b16 %v2709, %v2701
    %v3294 = vpack.c.b16 %v2718, %v2710
    %v3295 = vpack.c.b16 %v2719, %v2711
    %v3296 = vpack.c.b16 %v2720, %v2712
    %v3297 = vpack.c.b16 %v2721, %v2713
    %v3298 = vpack.c.b16 %v2722, %v2714
    %v3299 = vpack.c.b16 %v2723, %v2715
    %v3300 = vpack.c.b16 %v2724, %v2716
    %v3301 = vpack.c.b16 %v2725, %v2717
    %v3302 = vpack.c.b16 %v2734, %v2726
    %v3303 = vpack.c.b16 %v2735, %v2727
    %v3304 = vpack.c.b16 %v2736, %v2728
    %v3305 = vpack.c.b16 %v2737, %v2729
    %v3306 = vpack.c.b16 %v2738, %v2730
    %v3307 = vpack.c.b16 %v2739, %v2731
    %v3308 = vpack.c.b16 %v2740, %v2732
    %v3309 = vpack.c.b16 %v2741, %v2733
    %v3310 = vpack.c.b16 %v2750, %v2742
    %v3311 = vpack.c.b16 %v2751, %v2743
    %v3312 = vpack.c.b16 %v2752, %v2744
    %v3313 = vpack.c.b16 %v2753, %v2745
    %v3314 = vpack.c.b16 %v2754, %v2746
    %v3315 = vpack.c.b16 %v2755, %v2747
    %v3316 = vpack.c.b16 %v2756, %v2748
    %v3317 = vpack.c.b16 %v2757, %v2749
    %v3318 = vpack.c.b16 %v2766, %v2758
    %v3319 = vpack.c.b16 %v2767, %v2759
    %v3320 = vpack.c.b16 %v2768, %v2760
    %v3321 = vpack.c.b16 %v2769, %v2761
    %v3322 = vpack.c.b16 %v2770, %v2762
    %v3323 = vpack.c.b16 %v2771, %v2763
    %v3324 = vpack.c.b16 %v2772, %v2764
    %v3325 = vpack.c.b16 %v2773, %v2765
    %v3326 = vpack.c.b16 %v2782, %v2774
    %v3327 = vpack.c.b16 %v2783, %v2775
    %v3328 = vpack.c.b16 %v2784, %v2776
    %v3329 = vpack.c.b16 %v2785, %v2777
    %v3330 = vpack.c.b16 %v2786, %v2778
    %v3331 = vpack.c.b16 %v2787, %v2779
    %v3332 = vpack.c.b16 %v2788, %v2780
    %v3333 = vpack.c.b16 %v2789, %v2781
    %v3334 = vpack.c.b16 %v2798, %v2790
    %v3335 = vpack.c.b16 %v2799, %v2791
    %v3336 = vpack.c.b16 %v2800, %v2792
    %v3337 = vpack.c.b16 %v2801, %v2793
    %v3338 = vpack.c.b16 %v2802, %v2794
    %v3339 = vpack.c.b16 %v2803, %v2795
    %v3340 = vpack.c.b16 %v2804, %v2796
    %v3341 = vpack.c.b16 %v2805, %v2797
    %v3342 = vpack.c.b16 %v2814, %v2806
    %v3343 = vpack.c.b16 %v2815, %v2807
    %v3344 = vpack.c.b16 %v2816, %v2808
    %v3345 = vpack.c.b16 %v2817, %v2809
    %v3346 = vpack.c.b16 %v2818, %v2810
    %v3347 = vpack.c.b16 %v2819, %v2811
    %v3348 = vpack.c.b16 %v2820, %v2812
    %v3349 = vpack.c.b16 %v2821, %v2813
    %v3350 = vpack.c.b16 %v2830, %v2822
    %v3351 = vpack.c.b16 %v2831, %v2823
    %v3352 = vpack.c.b16 %v2832, %v2824
    %v3353 = vpack.c.b16 %v2833, %v2825
    %v3354 = vpack.c.b16 %v2834, %v2826
    %v3355 = vpack.c.b16 %v2835, %v2827
    %v3356 = vpack.c.b16 %v2836, %v2828
    %v3357 = vpack.c.b16 %v2837, %v2829
    %v3358 = vpack.c.b16 %v2846, %v2838
    %v3359 = vpack.c.b16 %v2847, %v2839
    %v3360 = vpack.c.b16 %v2848, %v2840
    %v3361 = vpack.c.b16 %v2849, %v2841
    %v3362 = vpack.c.b16 %v2850, %v2842
    %v3363 = vpack.c.b16 %v2851, %v2843
    %v3364 = vpack.c.b16 %v2852, %v2844
    %v3365 = vpack.c.b16 %v2853, %v2845
    %3878 = vmatprep.subr.bf16.mxu0 %v2911
    %3879 = vmatpush1.bf16.msra.mxu0 %v2910
    %3880 = vmatprep.subr.bf16.mxu0 %v2903
    %3881 = vmatpush1.bf16.msra.mxu0 %v2902
    %3882 = vmatprep.subr.bf16.mxu0 %v2895
    %3883 = vmatpush1.bf16.msra.mxu0 %v2894
    %3884 = vmatprep.subr.bf16.mxu0 %v2887
    %3885 = vmatpush1.bf16.msra.mxu0 %v2886
    %3886 = vmatprep.subr.bf16.mxu0 %v2879
    %3887 = vmatpush1.bf16.msra.mxu0 %v2878
    %3888 = vmatprep.subr.bf16.mxu0 %v2871
    %3889 = vmatpush1.bf16.msra.mxu0 %v2870
    %3890 = vmatprep.subr.bf16.mxu0 %v2863
    %3891 = vmatpush1.bf16.msra.mxu0 %v2862
    %3892 = vmatprep.subr.bf16.mxu0 %v2855
    %3893 = vmatpush1.bf16.msra.mxu0 %v2854
    %3894 = vmatprep.subr.bf16.mxu0 %v2975
    %3895 = vmatpush2.bf16.msra.mxu0 %v2974
    %3896 = vmatprep.subr.bf16.mxu0 %v2967
    %3897 = vmatpush2.bf16.msra.mxu0 %v2966
    %3898 = vmatprep.subr.bf16.mxu0 %v2959
    %3899 = vmatpush2.bf16.msra.mxu0 %v2958
    %3900 = vmatprep.subr.bf16.mxu0 %v2951
    %3901 = vmatpush2.bf16.msra.mxu0 %v2950
    %3902 = vmatprep.subr.bf16.mxu0 %v2943
    %3903 = vmatpush2.bf16.msra.mxu0 %v2942
    %3904 = vmatprep.subr.bf16.mxu0 %v2935
    %3905 = vmatpush2.bf16.msra.mxu0 %v2934
    %3906 = vmatprep.subr.bf16.mxu0 %v2927
    %3907 = vmatpush2.bf16.msra.mxu0 %v2926
    %3908 = vmatprep.subr.bf16.mxu0 %v2919
    %3909 = vmatpush2.bf16.msra.mxu0 %v2918
    %3910 = vmatprep.mubr.bf16.mxu0 %v757
    %3911 = vmatmul.mubr.bf16.gmra.mxu0 %v756
    %v3912 = vpop.f32.mrf.mxu0
    %v3913 = vadd.f32 %v1281, %v3912
    %v3914 = vpop.f32.mrf.mxu0
    %v3915 = vadd.f32 %v1285, %v3914
    %v3916 = vpop.f32.mrf.mxu0
    %v3917 = vadd.f32 %v1281, %v3916
    %v3918 = vpop.f32.mrf.mxu0
    %v3919 = vadd.f32 %v1285, %v3918
    %3920 = vdwg.mxu0
    %3921 = vmatprep.subr.bf16.mxu0 %v3039
    %3922 = vmatpush1.bf16.msra.mxu0 %v3038
    %3923 = vmatprep.subr.bf16.mxu0 %v3031
    %3924 = vmatpush1.bf16.msra.mxu0 %v3030
    %3925 = vmatprep.subr.bf16.mxu0 %v3023
    %3926 = vmatpush1.bf16.msra.mxu0 %v3022
    %3927 = vmatprep.subr.bf16.mxu0 %v3015
    %3928 = vmatpush1.bf16.msra.mxu0 %v3014
    %3929 = vmatprep.subr.bf16.mxu0 %v3007
    %3930 = vmatpush1.bf16.msra.mxu0 %v3006
    %3931 = vmatprep.subr.bf16.mxu0 %v2999
    %3932 = vmatpush1.bf16.msra.mxu0 %v2998
    %3933 = vmatprep.subr.bf16.mxu0 %v2991
    %3934 = vmatpush1.bf16.msra.mxu0 %v2990
    %3935 = vmatprep.subr.bf16.mxu0 %v2983
    %3936 = vmatpush1.bf16.msra.mxu0 %v2982
    %3937 = vmatprep.subr.bf16.mxu0 %v3103
    %3938 = vmatpush2.bf16.msra.mxu0 %v3102
    %3939 = vmatprep.subr.bf16.mxu0 %v3095
    %3940 = vmatpush2.bf16.msra.mxu0 %v3094
    %3941 = vmatprep.subr.bf16.mxu0 %v3087
    %3942 = vmatpush2.bf16.msra.mxu0 %v3086
    %3943 = vmatprep.subr.bf16.mxu0 %v3079
    %3944 = vmatpush2.bf16.msra.mxu0 %v3078
    %3945 = vmatprep.subr.bf16.mxu0 %v3071
    %3946 = vmatpush2.bf16.msra.mxu0 %v3070
    %3947 = vmatprep.subr.bf16.mxu0 %v3063
    %3948 = vmatpush2.bf16.msra.mxu0 %v3062
    %3949 = vmatprep.subr.bf16.mxu0 %v3055
    %3950 = vmatpush2.bf16.msra.mxu0 %v3054
    %3951 = vmatprep.subr.bf16.mxu0 %v3047
    %3952 = vmatpush2.bf16.msra.mxu0 %v3046
    %3953 = vmatprep.mubr.bf16.mxu0 %v759
    %3954 = vmatmul.mubr.bf16.gmra.mxu0 %v758
    %v3955 = vpop.f32.mrf.mxu0
    %v3956 = vadd.f32 %v3913, %v3955
    %v3957 = vpop.f32.mrf.mxu0
    %v3958 = vadd.f32 %v3915, %v3957
    %v3959 = vpop.f32.mrf.mxu0
    %v3960 = vadd.f32 %v3917, %v3959
    %v3961 = vpop.f32.mrf.mxu0
    %v3962 = vadd.f32 %v3919, %v3961
    %3963 = vdwg.mxu0
    %3964 = vmatprep.subr.bf16.mxu0 %v3167
    %3965 = vmatpush1.bf16.msra.mxu0 %v3166
    %3966 = vmatprep.subr.bf16.mxu0 %v3159
    %3967 = vmatpush1.bf16.msra.mxu0 %v3158
    %3968 = vmatprep.subr.bf16.mxu0 %v3151
    %3969 = vmatpush1.bf16.msra.mxu0 %v3150
    %3970 = vmatprep.subr.bf16.mxu0 %v3143
    %3971 = vmatpush1.bf16.msra.mxu0 %v3142
    %3972 = vmatprep.subr.bf16.mxu0 %v3135
    %3973 = vmatpush1.bf16.msra.mxu0 %v3134
    %3974 = vmatprep.subr.bf16.mxu0 %v3127
    %3975 = vmatpush1.bf16.msra.mxu0 %v3126
    %3976 = vmatprep.subr.bf16.mxu0 %v3119
    %3977 = vmatpush1.bf16.msra.mxu0 %v3118
    %3978 = vmatprep.subr.bf16.mxu0 %v3111
    %3979 = vmatpush1.bf16.msra.mxu0 %v3110
    %3980 = vmatprep.subr.bf16.mxu0 %v3231
    %3981 = vmatpush2.bf16.msra.mxu0 %v3230
    %3982 = vmatprep.subr.bf16.mxu0 %v3223
    %3983 = vmatpush2.bf16.msra.mxu0 %v3222
    %3984 = vmatprep.subr.bf16.mxu0 %v3215
    %3985 = vmatpush2.bf16.msra.mxu0 %v3214
    %3986 = vmatprep.subr.bf16.mxu0 %v3207
    %3987 = vmatpush2.bf16.msra.mxu0 %v3206
    %3988 = vmatprep.subr.bf16.mxu0 %v3199
    %3989 = vmatpush2.bf16.msra.mxu0 %v3198
    %3990 = vmatprep.subr.bf16.mxu0 %v3191
    %3991 = vmatpush2.bf16.msra.mxu0 %v3190
    %3992 = vmatprep.subr.bf16.mxu0 %v3183
    %3993 = vmatpush2.bf16.msra.mxu0 %v3182
    %3994 = vmatprep.subr.bf16.mxu0 %v3175
    %3995 = vmatpush2.bf16.msra.mxu0 %v3174
    %3996 = vmatprep.mubr.bf16.mxu0 %v761
    %3997 = vmatmul.mubr.bf16.gmra.mxu0 %v760
    %v3998 = vpop.f32.mrf.mxu0
    %v3999 = vadd.f32 %v3956, %v3998
    %v4000 = vpop.f32.mrf.mxu0
    %v4001 = vadd.f32 %v3958, %v4000
    %v4002 = vpop.f32.mrf.mxu0
    %v4003 = vadd.f32 %v3960, %v4002
    %v4004 = vpop.f32.mrf.mxu0
    %v4005 = vadd.f32 %v3962, %v4004
    %4006 = vdwg.mxu0
    %4007 = vmatprep.subr.bf16.mxu0 %v3295
    %4008 = vmatpush1.bf16.msra.mxu0 %v3294
    %4009 = vmatprep.subr.bf16.mxu0 %v3287
    %4010 = vmatpush1.bf16.msra.mxu0 %v3286
    %4011 = vmatprep.subr.bf16.mxu0 %v3279
    %4012 = vmatpush1.bf16.msra.mxu0 %v3278
    %4013 = vmatprep.subr.bf16.mxu0 %v3271
    %4014 = vmatpush1.bf16.msra.mxu0 %v3270
    %4015 = vmatprep.subr.bf16.mxu0 %v3263
    %4016 = vmatpush1.bf16.msra.mxu0 %v3262
    %4017 = vmatprep.subr.bf16.mxu0 %v3255
    %4018 = vmatpush1.bf16.msra.mxu0 %v3254
    %4019 = vmatprep.subr.bf16.mxu0 %v3247
    %4020 = vmatpush1.bf16.msra.mxu0 %v3246
    %4021 = vmatprep.subr.bf16.mxu0 %v3239
    %4022 = vmatpush1.bf16.msra.mxu0 %v3238
    %4023 = vmatprep.subr.bf16.mxu0 %v3359
    %4024 = vmatpush2.bf16.msra.mxu0 %v3358
    %4025 = vmatprep.subr.bf16.mxu0 %v3351
    %4026 = vmatpush2.bf16.msra.mxu0 %v3350
    %4027 = vmatprep.subr.bf16.mxu0 %v3343
    %4028 = vmatpush2.bf16.msra.mxu0 %v3342
    %4029 = vmatprep.subr.bf16.mxu0 %v3335
    %4030 = vmatpush2.bf16.msra.mxu0 %v3334
    %4031 = vmatprep.subr.bf16.mxu0 %v3327
    %4032 = vmatpush2.bf16.msra.mxu0 %v3326
    %4033 = vmatprep.subr.bf16.mxu0 %v3319
    %4034 = vmatpush2.bf16.msra.mxu0 %v3318
    %4035 = vmatprep.subr.bf16.mxu0 %v3311
    %4036 = vmatpush2.bf16.msra.mxu0 %v3310
    %4037 = vmatprep.subr.bf16.mxu0 %v3303
    %4038 = vmatpush2.bf16.msra.mxu0 %v3302
    %4039 = vmatprep.mubr.bf16.mxu0 %v763
    %4040 = vmatmul.mubr.bf16.gmra.mxu0 %v762
    %v4041 = vpop.f32.mrf.mxu0
    %v4042 = vadd.f32 %v3999, %v4041
    %v4043 = vpop.f32.mrf.mxu0
    %v4044 = vadd.f32 %v4001, %v4043
    %v4045 = vpop.f32.mrf.mxu0
    %v4046 = vadd.f32 %v4003, %v4045
    %v4047 = vpop.f32.mrf.mxu0
    %v4048 = vadd.f32 %v4005, %v4047
    %4049 = vdwg.mxu0
    %4050 = vmatprep.subr.bf16.mxu0 %v2913
    %4051 = vmatpush1.bf16.msra.mxu0 %v2912
    %4052 = vmatprep.subr.bf16.mxu0 %v2905
    %4053 = vmatpush1.bf16.msra.mxu0 %v2904
    %4054 = vmatprep.subr.bf16.mxu0 %v2897
    %4055 = vmatpush1.bf16.msra.mxu0 %v2896
    %4056 = vmatprep.subr.bf16.mxu0 %v2889
    %4057 = vmatpush1.bf16.msra.mxu0 %v2888
    %4058 = vmatprep.subr.bf16.mxu0 %v2881
    %4059 = vmatpush1.bf16.msra.mxu0 %v2880
    %4060 = vmatprep.subr.bf16.mxu0 %v2873
    %4061 = vmatpush1.bf16.msra.mxu0 %v2872
    %4062 = vmatprep.subr.bf16.mxu0 %v2865
    %4063 = vmatpush1.bf16.msra.mxu0 %v2864
    %4064 = vmatprep.subr.bf16.mxu0 %v2857
    %4065 = vmatpush1.bf16.msra.mxu0 %v2856
    %4066 = vmatprep.subr.bf16.mxu0 %v2977
    %4067 = vmatpush2.bf16.msra.mxu0 %v2976
    %4068 = vmatprep.subr.bf16.mxu0 %v2969
    %4069 = vmatpush2.bf16.msra.mxu0 %v2968
    %4070 = vmatprep.subr.bf16.mxu0 %v2961
    %4071 = vmatpush2.bf16.msra.mxu0 %v2960
    %4072 = vmatprep.subr.bf16.mxu0 %v2953
    %4073 = vmatpush2.bf16.msra.mxu0 %v2952
    %4074 = vmatprep.subr.bf16.mxu0 %v2945
    %4075 = vmatpush2.bf16.msra.mxu0 %v2944
    %4076 = vmatprep.subr.bf16.mxu0 %v2937
    %4077 = vmatpush2.bf16.msra.mxu0 %v2936
    %4078 = vmatprep.subr.bf16.mxu0 %v2929
    %4079 = vmatpush2.bf16.msra.mxu0 %v2928
    %4080 = vmatprep.subr.bf16.mxu0 %v2921
    %4081 = vmatpush2.bf16.msra.mxu0 %v2920
    %4082 = vmatprep.mubr.bf16.mxu0 %v757
    %4083 = vmatmul.mubr.bf16.gmra.mxu0 %v756
    %v4084 = vpop.f32.mrf.mxu0
    %v4085 = vadd.f32 %v1289, %v4084
    %v4086 = vpop.f32.mrf.mxu0
    %v4087 = vadd.f32 %v1293, %v4086
    %v4088 = vpop.f32.mrf.mxu0
    %v4089 = vadd.f32 %v1289, %v4088
    %v4090 = vpop.f32.mrf.mxu0
    %v4091 = vadd.f32 %v1293, %v4090
    %4092 = vdwg.mxu0
    %4093 = vmatprep.subr.bf16.mxu0 %v3041
    %4094 = vmatpush1.bf16.msra.mxu0 %v3040
    %4095 = vmatprep.subr.bf16.mxu0 %v3033
    %4096 = vmatpush1.bf16.msra.mxu0 %v3032
    %4097 = vmatprep.subr.bf16.mxu0 %v3025
    %4098 = vmatpush1.bf16.msra.mxu0 %v3024
    %4099 = vmatprep.subr.bf16.mxu0 %v3017
    %4100 = vmatpush1.bf16.msra.mxu0 %v3016
    %4101 = vmatprep.subr.bf16.mxu0 %v3009
    %4102 = vmatpush1.bf16.msra.mxu0 %v3008
    %4103 = vmatprep.subr.bf16.mxu0 %v3001
    %4104 = vmatpush1.bf16.msra.mxu0 %v3000
    %4105 = vmatprep.subr.bf16.mxu0 %v2993
    %4106 = vmatpush1.bf16.msra.mxu0 %v2992
    %4107 = vmatprep.subr.bf16.mxu0 %v2985
    %4108 = vmatpush1.bf16.msra.mxu0 %v2984
    %4109 = vmatprep.subr.bf16.mxu0 %v3105
    %4110 = vmatpush2.bf16.msra.mxu0 %v3104
    %4111 = vmatprep.subr.bf16.mxu0 %v3097
    %4112 = vmatpush2.bf16.msra.mxu0 %v3096
    %4113 = vmatprep.subr.bf16.mxu0 %v3089
    %4114 = vmatpush2.bf16.msra.mxu0 %v3088
    %4115 = vmatprep.subr.bf16.mxu0 %v3081
    %4116 = vmatpush2.bf16.msra.mxu0 %v3080
    %4117 = vmatprep.subr.bf16.mxu0 %v3073
    %4118 = vmatpush2.bf16.msra.mxu0 %v3072
    %4119 = vmatprep.subr.bf16.mxu0 %v3065
    %4120 = vmatpush2.bf16.msra.mxu0 %v3064
    %4121 = vmatprep.subr.bf16.mxu0 %v3057
    %4122 = vmatpush2.bf16.msra.mxu0 %v3056
    %4123 = vmatprep.subr.bf16.mxu0 %v3049
    %4124 = vmatpush2.bf16.msra.mxu0 %v3048
    %4125 = vmatprep.mubr.bf16.mxu0 %v759
    %4126 = vmatmul.mubr.bf16.gmra.mxu0 %v758
    %v4127 = vpop.f32.mrf.mxu0
    %v4128 = vadd.f32 %v4085, %v4127
    %v4129 = vpop.f32.mrf.mxu0
    %v4130 = vadd.f32 %v4087, %v4129
    %v4131 = vpop.f32.mrf.mxu0
    %v4132 = vadd.f32 %v4089, %v4131
    %v4133 = vpop.f32.mrf.mxu0
    %v4134 = vadd.f32 %v4091, %v4133
    %4135 = vdwg.mxu0
    %4136 = vmatprep.subr.bf16.mxu0 %v3169
    %4137 = vmatpush1.bf16.msra.mxu0 %v3168
    %4138 = vmatprep.subr.bf16.mxu0 %v3161
    %4139 = vmatpush1.bf16.msra.mxu0 %v3160
    %4140 = vmatprep.subr.bf16.mxu0 %v3153
    %4141 = vmatpush1.bf16.msra.mxu0 %v3152
    %4142 = vmatprep.subr.bf16.mxu0 %v3145
    %4143 = vmatpush1.bf16.msra.mxu0 %v3144
    %4144 = vmatprep.subr.bf16.mxu0 %v3137
    %4145 = vmatpush1.bf16.msra.mxu0 %v3136
    %4146 = vmatprep.subr.bf16.mxu0 %v3129
    %4147 = vmatpush1.bf16.msra.mxu0 %v3128
    %4148 = vmatprep.subr.bf16.mxu0 %v3121
    %4149 = vmatpush1.bf16.msra.mxu0 %v3120
    %4150 = vmatprep.subr.bf16.mxu0 %v3113
    %4151 = vmatpush1.bf16.msra.mxu0 %v3112
    %4152 = vmatprep.subr.bf16.mxu0 %v3233
    %4153 = vmatpush2.bf16.msra.mxu0 %v3232
    %4154 = vmatprep.subr.bf16.mxu0 %v3225
    %4155 = vmatpush2.bf16.msra.mxu0 %v3224
    %4156 = vmatprep.subr.bf16.mxu0 %v3217
    %4157 = vmatpush2.bf16.msra.mxu0 %v3216
    %4158 = vmatprep.subr.bf16.mxu0 %v3209
    %4159 = vmatpush2.bf16.msra.mxu0 %v3208
    %4160 = vmatprep.subr.bf16.mxu0 %v3201
    %4161 = vmatpush2.bf16.msra.mxu0 %v3200
    %4162 = vmatprep.subr.bf16.mxu0 %v3193
    %4163 = vmatpush2.bf16.msra.mxu0 %v3192
    %4164 = vmatprep.subr.bf16.mxu0 %v3185
    %4165 = vmatpush2.bf16.msra.mxu0 %v3184
    %4166 = vmatprep.subr.bf16.mxu0 %v3177
    %4167 = vmatpush2.bf16.msra.mxu0 %v3176
    %4168 = vmatprep.mubr.bf16.mxu0 %v761
    %4169 = vmatmul.mubr.bf16.gmra.mxu0 %v760
    %v4170 = vpop.f32.mrf.mxu0
    %v4171 = vadd.f32 %v4128, %v4170
    %v4172 = vpop.f32.mrf.mxu0
    %v4173 = vadd.f32 %v4130, %v4172
    %v4174 = vpop.f32.mrf.mxu0
    %v4175 = vadd.f32 %v4132, %v4174
    %v4176 = vpop.f32.mrf.mxu0
    %v4177 = vadd.f32 %v4134, %v4176
    %4178 = vdwg.mxu0
    %4179 = vmatprep.subr.bf16.mxu0 %v3297
    %4180 = vmatpush1.bf16.msra.mxu0 %v3296
    %4181 = vmatprep.subr.bf16.mxu0 %v3289
    %4182 = vmatpush1.bf16.msra.mxu0 %v3288
    %4183 = vmatprep.subr.bf16.mxu0 %v3281
    %4184 = vmatpush1.bf16.msra.mxu0 %v3280
    %4185 = vmatprep.subr.bf16.mxu0 %v3273
    %4186 = vmatpush1.bf16.msra.mxu0 %v3272
    %4187 = vmatprep.subr.bf16.mxu0 %v3265
    %4188 = vmatpush1.bf16.msra.mxu0 %v3264
    %4189 = vmatprep.subr.bf16.mxu0 %v3257
    %4190 = vmatpush1.bf16.msra.mxu0 %v3256
    %4191 = vmatprep.subr.bf16.mxu0 %v3249
    %4192 = vmatpush1.bf16.msra.mxu0 %v3248
    %4193 = vmatprep.subr.bf16.mxu0 %v3241
    %4194 = vmatpush1.bf16.msra.mxu0 %v3240
    %4195 = vmatprep.subr.bf16.mxu0 %v3361
    %4196 = vmatpush2.bf16.msra.mxu0 %v3360
    %4197 = vmatprep.subr.bf16.mxu0 %v3353
    %4198 = vmatpush2.bf16.msra.mxu0 %v3352
    %4199 = vmatprep.subr.bf16.mxu0 %v3345
    %4200 = vmatpush2.bf16.msra.mxu0 %v3344
    %4201 = vmatprep.subr.bf16.mxu0 %v3337
    %4202 = vmatpush2.bf16.msra.mxu0 %v3336
    %4203 = vmatprep.subr.bf16.mxu0 %v3329
    %4204 = vmatpush2.bf16.msra.mxu0 %v3328
    %4205 = vmatprep.subr.bf16.mxu0 %v3321
    %4206 = vmatpush2.bf16.msra.mxu0 %v3320
    %4207 = vmatprep.subr.bf16.mxu0 %v3313
    %4208 = vmatpush2.bf16.msra.mxu0 %v3312
    %4209 = vmatprep.subr.bf16.mxu0 %v3305
    %4210 = vmatpush2.bf16.msra.mxu0 %v3304
    %4211 = vmatprep.mubr.bf16.mxu0 %v763
    %4212 = vmatmul.mubr.bf16.gmra.mxu0 %v762
    %v4213 = vpop.f32.mrf.mxu0
    %v4214 = vadd.f32 %v4171, %v4213
    %v4215 = vpop.f32.mrf.mxu0
    %v4216 = vadd.f32 %v4173, %v4215
    %v4217 = vpop.f32.mrf.mxu0
    %v4218 = vadd.f32 %v4175, %v4217
    %v4219 = vpop.f32.mrf.mxu0
    %v4220 = vadd.f32 %v4177, %v4219
    %4221 = vdwg.mxu0
    %4222 = vmatprep.subr.bf16.mxu0 %v2915
    %4223 = vmatpush1.bf16.msra.mxu0 %v2914
    %4224 = vmatprep.subr.bf16.mxu0 %v2907
    %4225 = vmatpush1.bf16.msra.mxu0 %v2906
    %4226 = vmatprep.subr.bf16.mxu0 %v2899
    %4227 = vmatpush1.bf16.msra.mxu0 %v2898
    %4228 = vmatprep.subr.bf16.mxu0 %v2891
    %4229 = vmatpush1.bf16.msra.mxu0 %v2890
    %4230 = vmatprep.subr.bf16.mxu0 %v2883
    %4231 = vmatpush1.bf16.msra.mxu0 %v2882
    %4232 = vmatprep.subr.bf16.mxu0 %v2875
    %4233 = vmatpush1.bf16.msra.mxu0 %v2874
    %4234 = vmatprep.subr.bf16.mxu0 %v2867
    %4235 = vmatpush1.bf16.msra.mxu0 %v2866
    %4236 = vmatprep.subr.bf16.mxu0 %v2859
    %4237 = vmatpush1.bf16.msra.mxu0 %v2858
    %4238 = vmatprep.subr.bf16.mxu0 %v2979
    %4239 = vmatpush2.bf16.msra.mxu0 %v2978
    %4240 = vmatprep.subr.bf16.mxu0 %v2971
    %4241 = vmatpush2.bf16.msra.mxu0 %v2970
    %4242 = vmatprep.subr.bf16.mxu0 %v2963
    %4243 = vmatpush2.bf16.msra.mxu0 %v2962
    %4244 = vmatprep.subr.bf16.mxu0 %v2955
    %4245 = vmatpush2.bf16.msra.mxu0 %v2954
    %4246 = vmatprep.subr.bf16.mxu0 %v2947
    %4247 = vmatpush2.bf16.msra.mxu0 %v2946
    %4248 = vmatprep.subr.bf16.mxu0 %v2939
    %4249 = vmatpush2.bf16.msra.mxu0 %v2938
    %4250 = vmatprep.subr.bf16.mxu0 %v2931
    %4251 = vmatpush2.bf16.msra.mxu0 %v2930
    %4252 = vmatprep.subr.bf16.mxu0 %v2923
    %4253 = vmatpush2.bf16.msra.mxu0 %v2922
    %4254 = vmatprep.mubr.bf16.mxu0 %v757
    %4255 = vmatmul.mubr.bf16.gmra.mxu0 %v756
    %v4256 = vpop.f32.mrf.mxu0
    %v4257 = vadd.f32 %v1297, %v4256
    %v4258 = vpop.f32.mrf.mxu0
    %v4259 = vadd.f32 %v1301, %v4258
    %v4260 = vpop.f32.mrf.mxu0
    %v4261 = vadd.f32 %v1297, %v4260
    %v4262 = vpop.f32.mrf.mxu0
    %v4263 = vadd.f32 %v1301, %v4262
    %4264 = vdwg.mxu0
    %4265 = vmatprep.subr.bf16.mxu0 %v3043
    %4266 = vmatpush1.bf16.msra.mxu0 %v3042
    %4267 = vmatprep.subr.bf16.mxu0 %v3035
    %4268 = vmatpush1.bf16.msra.mxu0 %v3034
    %4269 = vmatprep.subr.bf16.mxu0 %v3027
    %4270 = vmatpush1.bf16.msra.mxu0 %v3026
    %4271 = vmatprep.subr.bf16.mxu0 %v3019
    %4272 = vmatpush1.bf16.msra.mxu0 %v3018
    %4273 = vmatprep.subr.bf16.mxu0 %v3011
    %4274 = vmatpush1.bf16.msra.mxu0 %v3010
    %4275 = vmatprep.subr.bf16.mxu0 %v3003
    %4276 = vmatpush1.bf16.msra.mxu0 %v3002
    %4277 = vmatprep.subr.bf16.mxu0 %v2995
    %4278 = vmatpush1.bf16.msra.mxu0 %v2994
    %4279 = vmatprep.subr.bf16.mxu0 %v2987
    %4280 = vmatpush1.bf16.msra.mxu0 %v2986
    %4281 = vmatprep.subr.bf16.mxu0 %v3107
    %4282 = vmatpush2.bf16.msra.mxu0 %v3106
    %4283 = vmatprep.subr.bf16.mxu0 %v3099
    %4284 = vmatpush2.bf16.msra.mxu0 %v3098
    %4285 = vmatprep.subr.bf16.mxu0 %v3091
    %4286 = vmatpush2.bf16.msra.mxu0 %v3090
    %4287 = vmatprep.subr.bf16.mxu0 %v3083
    %4288 = vmatpush2.bf16.msra.mxu0 %v3082
    %4289 = vmatprep.subr.bf16.mxu0 %v3075
    %4290 = vmatpush2.bf16.msra.mxu0 %v3074
    %4291 = vmatprep.subr.bf16.mxu0 %v3067
    %4292 = vmatpush2.bf16.msra.mxu0 %v3066
    %4293 = vmatprep.subr.bf16.mxu0 %v3059
    %4294 = vmatpush2.bf16.msra.mxu0 %v3058
    %4295 = vmatprep.subr.bf16.mxu0 %v3051
    %4296 = vmatpush2.bf16.msra.mxu0 %v3050
    %4297 = vmatprep.mubr.bf16.mxu0 %v759
    %4298 = vmatmul.mubr.bf16.gmra.mxu0 %v758
    %v4299 = vpop.f32.mrf.mxu0
    %v4300 = vadd.f32 %v4257, %v4299
    %v4301 = vpop.f32.mrf.mxu0
    %v4302 = vadd.f32 %v4259, %v4301
    %v4303 = vpop.f32.mrf.mxu0
    %v4304 = vadd.f32 %v4261, %v4303
    %v4305 = vpop.f32.mrf.mxu0
    %v4306 = vadd.f32 %v4263, %v4305
    %4307 = vdwg.mxu0
    %4308 = vmatprep.subr.bf16.mxu0 %v3171
    %4309 = vmatpush1.bf16.msra.mxu0 %v3170
    %4310 = vmatprep.subr.bf16.mxu0 %v3163
    %4311 = vmatpush1.bf16.msra.mxu0 %v3162
    %4312 = vmatprep.subr.bf16.mxu0 %v3155
    %4313 = vmatpush1.bf16.msra.mxu0 %v3154
    %4314 = vmatprep.subr.bf16.mxu0 %v3147
    %4315 = vmatpush1.bf16.msra.mxu0 %v3146
    %4316 = vmatprep.subr.bf16.mxu0 %v3139
    %4317 = vmatpush1.bf16.msra.mxu0 %v3138
    %4318 = vmatprep.subr.bf16.mxu0 %v3131
    %4319 = vmatpush1.bf16.msra.mxu0 %v3130
    %4320 = vmatprep.subr.bf16.mxu0 %v3123
    %4321 = vmatpush1.bf16.msra.mxu0 %v3122
    %4322 = vmatprep.subr.bf16.mxu0 %v3115
    %4323 = vmatpush1.bf16.msra.mxu0 %v3114
    %4324 = vmatprep.subr.bf16.mxu0 %v3235
    %4325 = vmatpush2.bf16.msra.mxu0 %v3234
    %4326 = vmatprep.subr.bf16.mxu0 %v3227
    %4327 = vmatpush2.bf16.msra.mxu0 %v3226
    %4328 = vmatprep.subr.bf16.mxu0 %v3219
    %4329 = vmatpush2.bf16.msra.mxu0 %v3218
    %4330 = vmatprep.subr.bf16.mxu0 %v3211
    %4331 = vmatpush2.bf16.msra.mxu0 %v3210
    %4332 = vmatprep.subr.bf16.mxu0 %v3203
    %4333 = vmatpush2.bf16.msra.mxu0 %v3202
    %4334 = vmatprep.subr.bf16.mxu0 %v3195
    %4335 = vmatpush2.bf16.msra.mxu0 %v3194
    %4336 = vmatprep.subr.bf16.mxu0 %v3187
    %4337 = vmatpush2.bf16.msra.mxu0 %v3186
    %4338 = vmatprep.subr.bf16.mxu0 %v3179
    %4339 = vmatpush2.bf16.msra.mxu0 %v3178
    %4340 = vmatprep.mubr.bf16.mxu0 %v761
    %4341 = vmatmul.mubr.bf16.gmra.mxu0 %v760
    %v4342 = vpop.f32.mrf.mxu0
    %v4343 = vadd.f32 %v4300, %v4342
    %v4344 = vpop.f32.mrf.mxu0
    %v4345 = vadd.f32 %v4302, %v4344
    %v4346 = vpop.f32.mrf.mxu0
    %v4347 = vadd.f32 %v4304, %v4346
    %v4348 = vpop.f32.mrf.mxu0
    %v4349 = vadd.f32 %v4306, %v4348
    %4350 = vdwg.mxu0
    %4351 = vmatprep.subr.bf16.mxu0 %v3299
    %4352 = vmatpush1.bf16.msra.mxu0 %v3298
    %4353 = vmatprep.subr.bf16.mxu0 %v3291
    %4354 = vmatpush1.bf16.msra.mxu0 %v3290
    %4355 = vmatprep.subr.bf16.mxu0 %v3283
    %4356 = vmatpush1.bf16.msra.mxu0 %v3282
    %4357 = vmatprep.subr.bf16.mxu0 %v3275
    %4358 = vmatpush1.bf16.msra.mxu0 %v3274
    %4359 = vmatprep.subr.bf16.mxu0 %v3267
    %4360 = vmatpush1.bf16.msra.mxu0 %v3266
    %4361 = vmatprep.subr.bf16.mxu0 %v3259
    %4362 = vmatpush1.bf16.msra.mxu0 %v3258
    %4363 = vmatprep.subr.bf16.mxu0 %v3251
    %4364 = vmatpush1.bf16.msra.mxu0 %v3250
    %4365 = vmatprep.subr.bf16.mxu0 %v3243
    %4366 = vmatpush1.bf16.msra.mxu0 %v3242
    %4367 = vmatprep.subr.bf16.mxu0 %v3363
    %4368 = vmatpush2.bf16.msra.mxu0 %v3362
    %4369 = vmatprep.subr.bf16.mxu0 %v3355
    %4370 = vmatpush2.bf16.msra.mxu0 %v3354
    %4371 = vmatprep.subr.bf16.mxu0 %v3347
    %4372 = vmatpush2.bf16.msra.mxu0 %v3346
    %4373 = vmatprep.subr.bf16.mxu0 %v3339
    %4374 = vmatpush2.bf16.msra.mxu0 %v3338
    %4375 = vmatprep.subr.bf16.mxu0 %v3331
    %4376 = vmatpush2.bf16.msra.mxu0 %v3330
    %4377 = vmatprep.subr.bf16.mxu0 %v3323
    %4378 = vmatpush2.bf16.msra.mxu0 %v3322
    %4379 = vmatprep.subr.bf16.mxu0 %v3315
    %4380 = vmatpush2.bf16.msra.mxu0 %v3314
    %4381 = vmatprep.subr.bf16.mxu0 %v3307
    %4382 = vmatpush2.bf16.msra.mxu0 %v3306
    %4383 = vmatprep.mubr.bf16.mxu0 %v763
    %4384 = vmatmul.mubr.bf16.gmra.mxu0 %v762
    %v4385 = vpop.f32.mrf.mxu0
    %v4386 = vadd.f32 %v4343, %v4385
    %v4387 = vpop.f32.mrf.mxu0
    %v4388 = vadd.f32 %v4345, %v4387
    %v4389 = vpop.f32.mrf.mxu0
    %v4390 = vadd.f32 %v4347, %v4389
    %v4391 = vpop.f32.mrf.mxu0
    %v4392 = vadd.f32 %v4349, %v4391
    %4393 = vdwg.mxu0
    %4394 = vmatprep.subr.bf16.mxu0 %v2917
    %4395 = vmatpush1.bf16.msra.mxu0 %v2916
    %4396 = vmatprep.subr.bf16.mxu0 %v2909
    %4397 = vmatpush1.bf16.msra.mxu0 %v2908
    %4398 = vmatprep.subr.bf16.mxu0 %v2901
    %4399 = vmatpush1.bf16.msra.mxu0 %v2900
    %4400 = vmatprep.subr.bf16.mxu0 %v2893
    %4401 = vmatpush1.bf16.msra.mxu0 %v2892
    %4402 = vmatprep.subr.bf16.mxu0 %v2885
    %4403 = vmatpush1.bf16.msra.mxu0 %v2884
    %4404 = vmatprep.subr.bf16.mxu0 %v2877
    %4405 = vmatpush1.bf16.msra.mxu0 %v2876
    %4406 = vmatprep.subr.bf16.mxu0 %v2869
    %4407 = vmatpush1.bf16.msra.mxu0 %v2868
    %4408 = vmatprep.subr.bf16.mxu0 %v2861
    %4409 = vmatpush1.bf16.msra.mxu0 %v2860
    %4410 = vmatprep.subr.bf16.mxu0 %v2981
    %4411 = vmatpush2.bf16.msra.mxu0 %v2980
    %4412 = vmatprep.subr.bf16.mxu0 %v2973
    %4413 = vmatpush2.bf16.msra.mxu0 %v2972
    %4414 = vmatprep.subr.bf16.mxu0 %v2965
    %4415 = vmatpush2.bf16.msra.mxu0 %v2964
    %4416 = vmatprep.subr.bf16.mxu0 %v2957
    %4417 = vmatpush2.bf16.msra.mxu0 %v2956
    %4418 = vmatprep.subr.bf16.mxu0 %v2949
    %4419 = vmatpush2.bf16.msra.mxu0 %v2948
    %4420 = vmatprep.subr.bf16.mxu0 %v2941
    %4421 = vmatpush2.bf16.msra.mxu0 %v2940
    %4422 = vmatprep.subr.bf16.mxu0 %v2933
    %4423 = vmatpush2.bf16.msra.mxu0 %v2932
    %4424 = vmatprep.subr.bf16.mxu0 %v2925
    %4425 = vmatpush2.bf16.msra.mxu0 %v2924
    %4426 = vmatprep.mubr.bf16.mxu0 %v757
    %4427 = vmatmul.mubr.bf16.gmra.mxu0 %v756
    %v4428 = vpop.f32.mrf.mxu0
    %v4429 = vadd.f32 %v1305, %v4428
    %v4430 = vpop.f32.mrf.mxu0
    %v4431 = vadd.f32 %v1309, %v4430
    %v4432 = vpop.f32.mrf.mxu0
    %v4433 = vadd.f32 %v1305, %v4432
    %v4434 = vpop.f32.mrf.mxu0
    %v4435 = vadd.f32 %v1309, %v4434
    %4436 = vdwg.mxu0
    %4437 = vmatprep.subr.bf16.mxu0 %v3045
    %4438 = vmatpush1.bf16.msra.mxu0 %v3044
    %4439 = vmatprep.subr.bf16.mxu0 %v3037
    %4440 = vmatpush1.bf16.msra.mxu0 %v3036
    %4441 = vmatprep.subr.bf16.mxu0 %v3029
    %4442 = vmatpush1.bf16.msra.mxu0 %v3028
    %4443 = vmatprep.subr.bf16.mxu0 %v3021
    %4444 = vmatpush1.bf16.msra.mxu0 %v3020
    %4445 = vmatprep.subr.bf16.mxu0 %v3013
    %4446 = vmatpush1.bf16.msra.mxu0 %v3012
    %4447 = vmatprep.subr.bf16.mxu0 %v3005
    %4448 = vmatpush1.bf16.msra.mxu0 %v3004
    %4449 = vmatprep.subr.bf16.mxu0 %v2997
    %4450 = vmatpush1.bf16.msra.mxu0 %v2996
    %4451 = vmatprep.subr.bf16.mxu0 %v2989
    %4452 = vmatpush1.bf16.msra.mxu0 %v2988
    %4453 = vmatprep.subr.bf16.mxu0 %v3109
    %4454 = vmatpush2.bf16.msra.mxu0 %v3108
    %4455 = vmatprep.subr.bf16.mxu0 %v3101
    %4456 = vmatpush2.bf16.msra.mxu0 %v3100
    %4457 = vmatprep.subr.bf16.mxu0 %v3093
    %4458 = vmatpush2.bf16.msra.mxu0 %v3092
    %4459 = vmatprep.subr.bf16.mxu0 %v3085
    %4460 = vmatpush2.bf16.msra.mxu0 %v3084
    %4461 = vmatprep.subr.bf16.mxu0 %v3077
    %4462 = vmatpush2.bf16.msra.mxu0 %v3076
    %4463 = vmatprep.subr.bf16.mxu0 %v3069
    %4464 = vmatpush2.bf16.msra.mxu0 %v3068
    %4465 = vmatprep.subr.bf16.mxu0 %v3061
    %4466 = vmatpush2.bf16.msra.mxu0 %v3060
    %4467 = vmatprep.subr.bf16.mxu0 %v3053
    %4468 = vmatpush2.bf16.msra.mxu0 %v3052
    %4469 = vmatprep.mubr.bf16.mxu0 %v759
    %4470 = vmatmul.mubr.bf16.gmra.mxu0 %v758
    %v4471 = vpop.f32.mrf.mxu0
    %v4472 = vadd.f32 %v4429, %v4471
    %v4473 = vpop.f32.mrf.mxu0
    %v4474 = vadd.f32 %v4431, %v4473
    %v4475 = vpop.f32.mrf.mxu0
    %v4476 = vadd.f32 %v4433, %v4475
    %v4477 = vpop.f32.mrf.mxu0
    %v4478 = vadd.f32 %v4435, %v4477
    %4479 = vdwg.mxu0
    %4480 = vmatprep.subr.bf16.mxu0 %v3173
    %4481 = vmatpush1.bf16.msra.mxu0 %v3172
    %4482 = vmatprep.subr.bf16.mxu0 %v3165
    %4483 = vmatpush1.bf16.msra.mxu0 %v3164
    %4484 = vmatprep.subr.bf16.mxu0 %v3157
    %4485 = vmatpush1.bf16.msra.mxu0 %v3156
    %4486 = vmatprep.subr.bf16.mxu0 %v3149
    %4487 = vmatpush1.bf16.msra.mxu0 %v3148
    %4488 = vmatprep.subr.bf16.mxu0 %v3141
    %4489 = vmatpush1.bf16.msra.mxu0 %v3140
    %4490 = vmatprep.subr.bf16.mxu0 %v3133
    %4491 = vmatpush1.bf16.msra.mxu0 %v3132
    %4492 = vmatprep.subr.bf16.mxu0 %v3125
    %4493 = vmatpush1.bf16.msra.mxu0 %v3124
    %4494 = vmatprep.subr.bf16.mxu0 %v3117
    %4495 = vmatpush1.bf16.msra.mxu0 %v3116
    %4496 = vmatprep.subr.bf16.mxu0 %v3237
    %4497 = vmatpush2.bf16.msra.mxu0 %v3236
    %4498 = vmatprep.subr.bf16.mxu0 %v3229
    %4499 = vmatpush2.bf16.msra.mxu0 %v3228
    %4500 = vmatprep.subr.bf16.mxu0 %v3221
    %4501 = vmatpush2.bf16.msra.mxu0 %v3220
    %4502 = vmatprep.subr.bf16.mxu0 %v3213
    %4503 = vmatpush2.bf16.msra.mxu0 %v3212
    %4504 = vmatprep.subr.bf16.mxu0 %v3205
    %4505 = vmatpush2.bf16.msra.mxu0 %v3204
    %4506 = vmatprep.subr.bf16.mxu0 %v3197
    %4507 = vmatpush2.bf16.msra.mxu0 %v3196
    %4508 = vmatprep.subr.bf16.mxu0 %v3189
    %4509 = vmatpush2.bf16.msra.mxu0 %v3188
    %4510 = vmatprep.subr.bf16.mxu0 %v3181
    %4511 = vmatpush2.bf16.msra.mxu0 %v3180
    %4512 = vmatprep.mubr.bf16.mxu0 %v761
    %4513 = vmatmul.mubr.bf16.gmra.mxu0 %v760
    %v4514 = vpop.f32.mrf.mxu0
    %v4515 = vadd.f32 %v4472, %v4514
    %v4516 = vpop.f32.mrf.mxu0
    %v4517 = vadd.f32 %v4474, %v4516
    %v4518 = vpop.f32.mrf.mxu0
    %v4519 = vadd.f32 %v4476, %v4518
    %v4520 = vpop.f32.mrf.mxu0
    %v4521 = vadd.f32 %v4478, %v4520
    %4522 = vdwg.mxu0
    %4523 = vmatprep.subr.bf16.mxu0 %v3301
    %4524 = vmatpush1.bf16.msra.mxu0 %v3300
    %4525 = vmatprep.subr.bf16.mxu0 %v3293
    %4526 = vmatpush1.bf16.msra.mxu0 %v3292
    %4527 = vmatprep.subr.bf16.mxu0 %v3285
    %4528 = vmatpush1.bf16.msra.mxu0 %v3284
    %4529 = vmatprep.subr.bf16.mxu0 %v3277
    %4530 = vmatpush1.bf16.msra.mxu0 %v3276
    %4531 = vmatprep.subr.bf16.mxu0 %v3269
    %4532 = vmatpush1.bf16.msra.mxu0 %v3268
    %4533 = vmatprep.subr.bf16.mxu0 %v3261
    %4534 = vmatpush1.bf16.msra.mxu0 %v3260
    %4535 = vmatprep.subr.bf16.mxu0 %v3253
    %4536 = vmatpush1.bf16.msra.mxu0 %v3252
    %4537 = vmatprep.subr.bf16.mxu0 %v3245
    %4538 = vmatpush1.bf16.msra.mxu0 %v3244
    %4539 = vmatprep.subr.bf16.mxu0 %v3365
    %4540 = vmatpush2.bf16.msra.mxu0 %v3364
    %4541 = vmatprep.subr.bf16.mxu0 %v3357
    %4542 = vmatpush2.bf16.msra.mxu0 %v3356
    %4543 = vmatprep.subr.bf16.mxu0 %v3349
    %4544 = vmatpush2.bf16.msra.mxu0 %v3348
    %4545 = vmatprep.subr.bf16.mxu0 %v3341
    %4546 = vmatpush2.bf16.msra.mxu0 %v3340
    %4547 = vmatprep.subr.bf16.mxu0 %v3333
    %4548 = vmatpush2.bf16.msra.mxu0 %v3332
    %4549 = vmatprep.subr.bf16.mxu0 %v3325
    %4550 = vmatpush2.bf16.msra.mxu0 %v3324
    %4551 = vmatprep.subr.bf16.mxu0 %v3317
    %4552 = vmatpush2.bf16.msra.mxu0 %v3316
    %4553 = vmatprep.subr.bf16.mxu0 %v3309
    %4554 = vmatpush2.bf16.msra.mxu0 %v3308
    %4555 = vmatprep.mubr.bf16.mxu0 %v763
    %4556 = vmatmul.mubr.bf16.gmra.mxu0 %v762
    %v4557 = vpop.f32.mrf.mxu0
    %v4558 = vadd.f32 %v4515, %v4557
    %v4559 = vpop.f32.mrf.mxu0
    %v4560 = vadd.f32 %v4517, %v4559
    %v4561 = vpop.f32.mrf.mxu0
    %v4562 = vadd.f32 %v4519, %v4561
    %v4563 = vpop.f32.mrf.mxu0
    %v4564 = vadd.f32 %v4521, %v4563
    %4565 = vdwg.mxu0
    %v4566 = vmax.f32 %v4042, 0.0
    %v4567 = vmax.f32 %v4044, 0.0
    %v4568 = vmax.f32 %v4214, 0.0
    %v4569 = vmax.f32 %v4216, 0.0
    %v4570 = vmax.f32 %v4386, 0.0
    %v4571 = vmax.f32 %v4388, 0.0
    %v4572 = vmax.f32 %v4558, 0.0
    %v4573 = vmax.f32 %v4560, 0.0
    %v4574 = vmax.f32 %v4046, 0.0
    %v4575 = vmax.f32 %v4048, 0.0
    %v4576 = vmax.f32 %v4218, 0.0
    %v4577 = vmax.f32 %v4220, 0.0
    %v4578 = vmax.f32 %v4390, 0.0
    %v4579 = vmax.f32 %v4392, 0.0
    %v4580 = vmax.f32 %v4562, 0.0
    %v4581 = vmax.f32 %v4564, 0.0
    %v4582 = vpack.c.bf16 %v4574, %v4566
    %v4583 = vpack.c.bf16 %v4575, %v4567
    %v4584 = vpack.c.bf16 %v4576, %v4568
    %v4585 = vpack.c.bf16 %v4577, %v4569
    %v4586 = vpack.c.bf16 %v4578, %v4570
    %v4587 = vpack.c.bf16 %v4579, %v4571
    %v4588 = vpack.c.bf16 %v4580, %v4572
    %v4589 = vpack.c.bf16 %v4581, %v4573
    %v4590 = vld [vmem:[#allocation9] sm:$0xff]
    %v4591 = vld [vmem:[#allocation9 + $0x8] sm:$0xff]
    %v4592 = vld [vmem:[#allocation9 + $0x10] sm:$0xff]
    %v4593 = vld [vmem:[#allocation9 + $0x18] sm:$0xff]
    %v4594 = vld [vmem:[#allocation9 + $0x20] sm:$0xff]
    %v4595 = vld [vmem:[#allocation9 + $0x28] sm:$0xff]
    %v4596 = vld [vmem:[#allocation9 + $0x30] sm:$0xff]
    %v4597 = vld [vmem:[#allocation9 + $0x38] sm:$0xff]
    %v4598 = vld [vmem:[#allocation9 + $0x40] sm:$0xff]
    %v4599 = vld [vmem:[#allocation9 + $0x48] sm:$0xff]
    %v4600 = vld [vmem:[#allocation9 + $0x50] sm:$0xff]
    %v4601 = vld [vmem:[#allocation9 + $0x58] sm:$0xff]
    %v4602 = vld [vmem:[#allocation9 + $0x60] sm:$0xff]
    %v4603 = vld [vmem:[#allocation9 + $0x68] sm:$0xff]
    %v4604 = vld [vmem:[#allocation9 + $0x70] sm:$0xff]
    %v4605 = vld [vmem:[#allocation9 + $0x78] sm:$0xff]
    %v4606 = vld [vmem:[#allocation9 + $0x80] sm:$0xff]
    %v4607 = vld [vmem:[#allocation9 + $0x88] sm:$0xff]
    %v4608 = vld [vmem:[#allocation9 + $0x90] sm:$0xff]
    %v4609 = vld [vmem:[#allocation9 + $0x98] sm:$0xff]
    %v4610 = vld [vmem:[#allocation9 + $0xa0] sm:$0xff]
    %v4611 = vld [vmem:[#allocation9 + $0xa8] sm:$0xff]
    %v4612 = vld [vmem:[#allocation9 + $0xb0] sm:$0xff]
    %v4613 = vld [vmem:[#allocation9 + $0xb8] sm:$0xff]
    %v4614 = vld [vmem:[#allocation9 + $0xc0] sm:$0xff]
    %v4615 = vld [vmem:[#allocation9 + $0xc8] sm:$0xff]
    %v4616 = vld [vmem:[#allocation9 + $0xd0] sm:$0xff]
    %v4617 = vld [vmem:[#allocation9 + $0xd8] sm:$0xff]
    %v4618 = vld [vmem:[#allocation9 + $0xe0] sm:$0xff]
    %v4619 = vld [vmem:[#allocation9 + $0xe8] sm:$0xff]
    %v4620 = vld [vmem:[#allocation9 + $0xf0] sm:$0xff]
    %v4621 = vld [vmem:[#allocation9 + $0xf8] sm:$0xff]
    %v4622 = vld [vmem:[#allocation9 + $0x100] sm:$0xff]
    %v4623 = vld [vmem:[#allocation9 + $0x108] sm:$0xff]
    %v4624 = vld [vmem:[#allocation9 + $0x110] sm:$0xff]
    %v4625 = vld [vmem:[#allocation9 + $0x118] sm:$0xff]
    %v4626 = vld [vmem:[#allocation9 + $0x120] sm:$0xff]
    %v4627 = vld [vmem:[#allocation9 + $0x128] sm:$0xff]
    %v4628 = vld [vmem:[#allocation9 + $0x130] sm:$0xff]
    %v4629 = vld [vmem:[#allocation9 + $0x138] sm:$0xff]
    %v4630 = vld [vmem:[#allocation9 + $0x140] sm:$0xff]
    %v4631 = vld [vmem:[#allocation9 + $0x148] sm:$0xff]
    %v4632 = vld [vmem:[#allocation9 + $0x150] sm:$0xff]
    %v4633 = vld [vmem:[#allocation9 + $0x158] sm:$0xff]
    %v4634 = vld [vmem:[#allocation9 + $0x160] sm:$0xff]
    %v4635 = vld [vmem:[#allocation9 + $0x168] sm:$0xff]
    %v4636 = vld [vmem:[#allocation9 + $0x170] sm:$0xff]
    %v4637 = vld [vmem:[#allocation9 + $0x178] sm:$0xff]
    %v4638 = vld [vmem:[#allocation9 + $0x180] sm:$0xff]
    %v4639 = vld [vmem:[#allocation9 + $0x188] sm:$0xff]
    %v4640 = vld [vmem:[#allocation9 + $0x190] sm:$0xff]
    %v4641 = vld [vmem:[#allocation9 + $0x198] sm:$0xff]
    %v4642 = vld [vmem:[#allocation9 + $0x1a0] sm:$0xff]
    %v4643 = vld [vmem:[#allocation9 + $0x1a8] sm:$0xff]
    %v4644 = vld [vmem:[#allocation9 + $0x1b0] sm:$0xff]
    %v4645 = vld [vmem:[#allocation9 + $0x1b8] sm:$0xff]
    %v4646 = vld [vmem:[#allocation9 + $0x1c0] sm:$0xff]
    %v4647 = vld [vmem:[#allocation9 + $0x1c8] sm:$0xff]
    %v4648 = vld [vmem:[#allocation9 + $0x1d0] sm:$0xff]
    %v4649 = vld [vmem:[#allocation9 + $0x1d8] sm:$0xff]
    %v4650 = vld [vmem:[#allocation9 + $0x1e0] sm:$0xff]
    %v4651 = vld [vmem:[#allocation9 + $0x1e8] sm:$0xff]
    %v4652 = vld [vmem:[#allocation9 + $0x1f0] sm:$0xff]
    %v4653 = vld [vmem:[#allocation9 + $0x1f8] sm:$0xff]
    %v4654 = vld [vmem:[#allocation9 + $0x200] sm:$0xff]
    %v4655 = vld [vmem:[#allocation9 + $0x208] sm:$0xff]
    %v4656 = vld [vmem:[#allocation9 + $0x210] sm:$0xff]
    %v4657 = vld [vmem:[#allocation9 + $0x218] sm:$0xff]
    %v4658 = vld [vmem:[#allocation9 + $0x220] sm:$0xff]
    %v4659 = vld [vmem:[#allocation9 + $0x228] sm:$0xff]
    %v4660 = vld [vmem:[#allocation9 + $0x230] sm:$0xff]
    %v4661 = vld [vmem:[#allocation9 + $0x238] sm:$0xff]
    %v4662 = vld [vmem:[#allocation9 + $0x240] sm:$0xff]
    %v4663 = vld [vmem:[#allocation9 + $0x248] sm:$0xff]
    %v4664 = vld [vmem:[#allocation9 + $0x250] sm:$0xff]
    %v4665 = vld [vmem:[#allocation9 + $0x258] sm:$0xff]
    %v4666 = vld [vmem:[#allocation9 + $0x260] sm:$0xff]
    %v4667 = vld [vmem:[#allocation9 + $0x268] sm:$0xff]
    %v4668 = vld [vmem:[#allocation9 + $0x270] sm:$0xff]
    %v4669 = vld [vmem:[#allocation9 + $0x278] sm:$0xff]
    %v4670 = vld [vmem:[#allocation9 + $0x280] sm:$0xff]
    %v4671 = vld [vmem:[#allocation9 + $0x288] sm:$0xff]
    %v4672 = vld [vmem:[#allocation9 + $0x290] sm:$0xff]
    %v4673 = vld [vmem:[#allocation9 + $0x298] sm:$0xff]
    %v4674 = vld [vmem:[#allocation9 + $0x2a0] sm:$0xff]
    %v4675 = vld [vmem:[#allocation9 + $0x2a8] sm:$0xff]
    %v4676 = vld [vmem:[#allocation9 + $0x2b0] sm:$0xff]
    %v4677 = vld [vmem:[#allocation9 + $0x2b8] sm:$0xff]
    %v4678 = vld [vmem:[#allocation9 + $0x2c0] sm:$0xff]
    %v4679 = vld [vmem:[#allocation9 + $0x2c8] sm:$0xff]
    %v4680 = vld [vmem:[#allocation9 + $0x2d0] sm:$0xff]
    %v4681 = vld [vmem:[#allocation9 + $0x2d8] sm:$0xff]
    %v4682 = vld [vmem:[#allocation9 + $0x2e0] sm:$0xff]
    %v4683 = vld [vmem:[#allocation9 + $0x2e8] sm:$0xff]
    %v4684 = vld [vmem:[#allocation9 + $0x2f0] sm:$0xff]
    %v4685 = vld [vmem:[#allocation9 + $0x2f8] sm:$0xff]
    %v4686 = vld [vmem:[#allocation9 + $0x300] sm:$0xff]
    %v4687 = vld [vmem:[#allocation9 + $0x308] sm:$0xff]
    %v4688 = vld [vmem:[#allocation9 + $0x310] sm:$0xff]
    %v4689 = vld [vmem:[#allocation9 + $0x318] sm:$0xff]
    %v4690 = vld [vmem:[#allocation9 + $0x320] sm:$0xff]
    %v4691 = vld [vmem:[#allocation9 + $0x328] sm:$0xff]
    %v4692 = vld [vmem:[#allocation9 + $0x330] sm:$0xff]
    %v4693 = vld [vmem:[#allocation9 + $0x338] sm:$0xff]
    %v4694 = vld [vmem:[#allocation9 + $0x340] sm:$0xff]
    %v4695 = vld [vmem:[#allocation9 + $0x348] sm:$0xff]
    %v4696 = vld [vmem:[#allocation9 + $0x350] sm:$0xff]
    %v4697 = vld [vmem:[#allocation9 + $0x358] sm:$0xff]
    %v4698 = vld [vmem:[#allocation9 + $0x360] sm:$0xff]
    %v4699 = vld [vmem:[#allocation9 + $0x368] sm:$0xff]
    %v4700 = vld [vmem:[#allocation9 + $0x370] sm:$0xff]
    %v4701 = vld [vmem:[#allocation9 + $0x378] sm:$0xff]
    %v4702 = vld [vmem:[#allocation9 + $0x380] sm:$0xff]
    %v4703 = vld [vmem:[#allocation9 + $0x388] sm:$0xff]
    %v4704 = vld [vmem:[#allocation9 + $0x390] sm:$0xff]
    %v4705 = vld [vmem:[#allocation9 + $0x398] sm:$0xff]
    %v4706 = vld [vmem:[#allocation9 + $0x3a0] sm:$0xff]
    %v4707 = vld [vmem:[#allocation9 + $0x3a8] sm:$0xff]
    %v4708 = vld [vmem:[#allocation9 + $0x3b0] sm:$0xff]
    %v4709 = vld [vmem:[#allocation9 + $0x3b8] sm:$0xff]
    %v4710 = vld [vmem:[#allocation9 + $0x3c0] sm:$0xff]
    %v4711 = vld [vmem:[#allocation9 + $0x3c8] sm:$0xff]
    %v4712 = vld [vmem:[#allocation9 + $0x3d0] sm:$0xff]
    %v4713 = vld [vmem:[#allocation9 + $0x3d8] sm:$0xff]
    %v4714 = vld [vmem:[#allocation9 + $0x3e0] sm:$0xff]
    %v4715 = vld [vmem:[#allocation9 + $0x3e8] sm:$0xff]
    %v4716 = vld [vmem:[#allocation9 + $0x3f0] sm:$0xff]
    %v4717 = vld [vmem:[#allocation9 + $0x3f8] sm:$0xff]
    %v4718 = vld [vmem:[#allocation10] sm:$0x3]
    %v4720 = vlaneseq
    %v4721 = vshrl.u32 %v4720, 7
    %v4722 = vsub.s32 0, %v4721
    %v4723 = vrot.slane %v4718, %v4722
    %v4724 = vlaneseq
    %v4725 = vshrl.u32 %v4724, 7
    %v4726 = vsub.s32 1, %v4725
    %v4727 = vrot.slane %v4718, %v4726
    %v4858 = vunpack.c.l.b16 %v4590
    %v4859 = vunpack.c.h.b16 %v4590
    %v4860 = vunpack.c.l.b16 %v4591
    %v4861 = vunpack.c.h.b16 %v4591
    %v4862 = vunpack.c.l.b16 %v4592
    %v4863 = vunpack.c.h.b16 %v4592
    %v4864 = vunpack.c.l.b16 %v4593
    %v4865 = vunpack.c.h.b16 %v4593
    %v4866 = vunpack.c.l.b16 %v4594
    %v4867 = vunpack.c.h.b16 %v4594
    %v4868 = vunpack.c.l.b16 %v4595
    %v4869 = vunpack.c.h.b16 %v4595
    %v4870 = vunpack.c.l.b16 %v4596
    %v4871 = vunpack.c.h.b16 %v4596
    %v4872 = vunpack.c.l.b16 %v4597
    %v4873 = vunpack.c.h.b16 %v4597
    %v4874 = vunpack.c.l.b16 %v4598
    %v4875 = vunpack.c.h.b16 %v4598
    %v4876 = vunpack.c.l.b16 %v4599
    %v4877 = vunpack.c.h.b16 %v4599
    %v4878 = vunpack.c.l.b16 %v4600
    %v4879 = vunpack.c.h.b16 %v4600
    %v4880 = vunpack.c.l.b16 %v4601
    %v4881 = vunpack.c.h.b16 %v4601
    %v4882 = vunpack.c.l.b16 %v4602
    %v4883 = vunpack.c.h.b16 %v4602
    %v4884 = vunpack.c.l.b16 %v4603
    %v4885 = vunpack.c.h.b16 %v4603
    %v4886 = vunpack.c.l.b16 %v4604
    %v4887 = vunpack.c.h.b16 %v4604
    %v4888 = vunpack.c.l.b16 %v4605
    %v4889 = vunpack.c.h.b16 %v4605
    %v4890 = vunpack.c.l.b16 %v4606
    %v4891 = vunpack.c.h.b16 %v4606
    %v4892 = vunpack.c.l.b16 %v4607
    %v4893 = vunpack.c.h.b16 %v4607
    %v4894 = vunpack.c.l.b16 %v4608
    %v4895 = vunpack.c.h.b16 %v4608
    %v4896 = vunpack.c.l.b16 %v4609
    %v4897 = vunpack.c.h.b16 %v4609
    %v4898 = vunpack.c.l.b16 %v4610
    %v4899 = vunpack.c.h.b16 %v4610
    %v4900 = vunpack.c.l.b16 %v4611
    %v4901 = vunpack.c.h.b16 %v4611
    %v4902 = vunpack.c.l.b16 %v4612
    %v4903 = vunpack.c.h.b16 %v4612
    %v4904 = vunpack.c.l.b16 %v4613
    %v4905 = vunpack.c.h.b16 %v4613
    %v4906 = vunpack.c.l.b16 %v4614
    %v4907 = vunpack.c.h.b16 %v4614
    %v4908 = vunpack.c.l.b16 %v4615
    %v4909 = vunpack.c.h.b16 %v4615
    %v4910 = vunpack.c.l.b16 %v4616
    %v4911 = vunpack.c.h.b16 %v4616
    %v4912 = vunpack.c.l.b16 %v4617
    %v4913 = vunpack.c.h.b16 %v4617
    %v4914 = vunpack.c.l.b16 %v4618
    %v4915 = vunpack.c.h.b16 %v4618
    %v4916 = vunpack.c.l.b16 %v4619
    %v4917 = vunpack.c.h.b16 %v4619
    %v4918 = vunpack.c.l.b16 %v4620
    %v4919 = vunpack.c.h.b16 %v4620
    %v4920 = vunpack.c.l.b16 %v4621
    %v4921 = vunpack.c.h.b16 %v4621
    %v4922 = vunpack.c.l.b16 %v4622
    %v4923 = vunpack.c.h.b16 %v4622
    %v4924 = vunpack.c.l.b16 %v4623
    %v4925 = vunpack.c.h.b16 %v4623
    %v4926 = vunpack.c.l.b16 %v4624
    %v4927 = vunpack.c.h.b16 %v4624
    %v4928 = vunpack.c.l.b16 %v4625
    %v4929 = vunpack.c.h.b16 %v4625
    %v4930 = vunpack.c.l.b16 %v4626
    %v4931 = vunpack.c.h.b16 %v4626
    %v4932 = vunpack.c.l.b16 %v4627
    %v4933 = vunpack.c.h.b16 %v4627
    %v4934 = vunpack.c.l.b16 %v4628
    %v4935 = vunpack.c.h.b16 %v4628
    %v4936 = vunpack.c.l.b16 %v4629
    %v4937 = vunpack.c.h.b16 %v4629
    %v4938 = vunpack.c.l.b16 %v4630
    %v4939 = vunpack.c.h.b16 %v4630
    %v4940 = vunpack.c.l.b16 %v4631
    %v4941 = vunpack.c.h.b16 %v4631
    %v4942 = vunpack.c.l.b16 %v4632
    %v4943 = vunpack.c.h.b16 %v4632
    %v4944 = vunpack.c.l.b16 %v4633
    %v4945 = vunpack.c.h.b16 %v4633
    %v4946 = vunpack.c.l.b16 %v4634
    %v4947 = vunpack.c.h.b16 %v4634
    %v4948 = vunpack.c.l.b16 %v4635
    %v4949 = vunpack.c.h.b16 %v4635
    %v4950 = vunpack.c.l.b16 %v4636
    %v4951 = vunpack.c.h.b16 %v4636
    %v4952 = vunpack.c.l.b16 %v4637
    %v4953 = vunpack.c.h.b16 %v4637
    %v4954 = vunpack.c.l.b16 %v4638
    %v4955 = vunpack.c.h.b16 %v4638
    %v4956 = vunpack.c.l.b16 %v4639
    %v4957 = vunpack.c.h.b16 %v4639
    %v4958 = vunpack.c.l.b16 %v4640
    %v4959 = vunpack.c.h.b16 %v4640
    %v4960 = vunpack.c.l.b16 %v4641
    %v4961 = vunpack.c.h.b16 %v4641
    %v4962 = vunpack.c.l.b16 %v4642
    %v4963 = vunpack.c.h.b16 %v4642
    %v4964 = vunpack.c.l.b16 %v4643
    %v4965 = vunpack.c.h.b16 %v4643
    %v4966 = vunpack.c.l.b16 %v4644
    %v4967 = vunpack.c.h.b16 %v4644
    %v4968 = vunpack.c.l.b16 %v4645
    %v4969 = vunpack.c.h.b16 %v4645
    %v4970 = vunpack.c.l.b16 %v4646
    %v4971 = vunpack.c.h.b16 %v4646
    %v4972 = vunpack.c.l.b16 %v4647
    %v4973 = vunpack.c.h.b16 %v4647
    %v4974 = vunpack.c.l.b16 %v4648
    %v4975 = vunpack.c.h.b16 %v4648
    %v4976 = vunpack.c.l.b16 %v4649
    %v4977 = vunpack.c.h.b16 %v4649
    %v4978 = vunpack.c.l.b16 %v4650
    %v4979 = vunpack.c.h.b16 %v4650
    %v4980 = vunpack.c.l.b16 %v4651
    %v4981 = vunpack.c.h.b16 %v4651
    %v4982 = vunpack.c.l.b16 %v4652
    %v4983 = vunpack.c.h.b16 %v4652
    %v4984 = vunpack.c.l.b16 %v4653
    %v4985 = vunpack.c.h.b16 %v4653
    %v4986 = vunpack.c.l.b16 %v4654
    %v4987 = vunpack.c.h.b16 %v4654
    %v4988 = vunpack.c.l.b16 %v4655
    %v4989 = vunpack.c.h.b16 %v4655
    %v4990 = vunpack.c.l.b16 %v4656
    %v4991 = vunpack.c.h.b16 %v4656
    %v4992 = vunpack.c.l.b16 %v4657
    %v4993 = vunpack.c.h.b16 %v4657
    %v4994 = vunpack.c.l.b16 %v4658
    %v4995 = vunpack.c.h.b16 %v4658
    %v4996 = vunpack.c.l.b16 %v4659
    %v4997 = vunpack.c.h.b16 %v4659
    %v4998 = vunpack.c.l.b16 %v4660
    %v4999 = vunpack.c.h.b16 %v4660
    %v5000 = vunpack.c.l.b16 %v4661
    %v5001 = vunpack.c.h.b16 %v4661
    %v5002 = vunpack.c.l.b16 %v4662
    %v5003 = vunpack.c.h.b16 %v4662
    %v5004 = vunpack.c.l.b16 %v4663
    %v5005 = vunpack.c.h.b16 %v4663
    %v5006 = vunpack.c.l.b16 %v4664
    %v5007 = vunpack.c.h.b16 %v4664
    %v5008 = vunpack.c.l.b16 %v4665
    %v5009 = vunpack.c.h.b16 %v4665
    %v5010 = vunpack.c.l.b16 %v4666
    %v5011 = vunpack.c.h.b16 %v4666
    %v5012 = vunpack.c.l.b16 %v4667
    %v5013 = vunpack.c.h.b16 %v4667
    %v5014 = vunpack.c.l.b16 %v4668
    %v5015 = vunpack.c.h.b16 %v4668
    %v5016 = vunpack.c.l.b16 %v4669
    %v5017 = vunpack.c.h.b16 %v4669
    %v5018 = vunpack.c.l.b16 %v4670
    %v5019 = vunpack.c.h.b16 %v4670
    %v5020 = vunpack.c.l.b16 %v4671
    %v5021 = vunpack.c.h.b16 %v4671
    %v5022 = vunpack.c.l.b16 %v4672
    %v5023 = vunpack.c.h.b16 %v4672
    %v5024 = vunpack.c.l.b16 %v4673
    %v5025 = vunpack.c.h.b16 %v4673
    %v5026 = vunpack.c.l.b16 %v4674
    %v5027 = vunpack.c.h.b16 %v4674
    %v5028 = vunpack.c.l.b16 %v4675
    %v5029 = vunpack.c.h.b16 %v4675
    %v5030 = vunpack.c.l.b16 %v4676
    %v5031 = vunpack.c.h.b16 %v4676
    %v5032 = vunpack.c.l.b16 %v4677
    %v5033 = vunpack.c.h.b16 %v4677
    %v5034 = vunpack.c.l.b16 %v4678
    %v5035 = vunpack.c.h.b16 %v4678
    %v5036 = vunpack.c.l.b16 %v4679
    %v5037 = vunpack.c.h.b16 %v4679
    %v5038 = vunpack.c.l.b16 %v4680
    %v5039 = vunpack.c.h.b16 %v4680
    %v5040 = vunpack.c.l.b16 %v4681
    %v5041 = vunpack.c.h.b16 %v4681
    %v5042 = vunpack.c.l.b16 %v4682
    %v5043 = vunpack.c.h.b16 %v4682
    %v5044 = vunpack.c.l.b16 %v4683
    %v5045 = vunpack.c.h.b16 %v4683
    %v5046 = vunpack.c.l.b16 %v4684
    %v5047 = vunpack.c.h.b16 %v4684
    %v5048 = vunpack.c.l.b16 %v4685
    %v5049 = vunpack.c.h.b16 %v4685
    %v5050 = vunpack.c.l.b16 %v4686
    %v5051 = vunpack.c.h.b16 %v4686
    %v5052 = vunpack.c.l.b16 %v4687
    %v5053 = vunpack.c.h.b16 %v4687
    %v5054 = vunpack.c.l.b16 %v4688
    %v5055 = vunpack.c.h.b16 %v4688
    %v5056 = vunpack.c.l.b16 %v4689
    %v5057 = vunpack.c.h.b16 %v4689
    %v5058 = vunpack.c.l.b16 %v4690
    %v5059 = vunpack.c.h.b16 %v4690
    %v5060 = vunpack.c.l.b16 %v4691
    %v5061 = vunpack.c.h.b16 %v4691
    %v5062 = vunpack.c.l.b16 %v4692
    %v5063 = vunpack.c.h.b16 %v4692
    %v5064 = vunpack.c.l.b16 %v4693
    %v5065 = vunpack.c.h.b16 %v4693
    %v5066 = vunpack.c.l.b16 %v4694
    %v5067 = vunpack.c.h.b16 %v4694
    %v5068 = vunpack.c.l.b16 %v4695
    %v5069 = vunpack.c.h.b16 %v4695
    %v5070 = vunpack.c.l.b16 %v4696
    %v5071 = vunpack.c.h.b16 %v4696
    %v5072 = vunpack.c.l.b16 %v4697
    %v5073 = vunpack.c.h.b16 %v4697
    %v5074 = vunpack.c.l.b16 %v4698
    %v5075 = vunpack.c.h.b16 %v4698
    %v5076 = vunpack.c.l.b16 %v4699
    %v5077 = vunpack.c.h.b16 %v4699
    %v5078 = vunpack.c.l.b16 %v4700
    %v5079 = vunpack.c.h.b16 %v4700
    %v5080 = vunpack.c.l.b16 %v4701
    %v5081 = vunpack.c.h.b16 %v4701
    %v5082 = vunpack.c.l.b16 %v4702
    %v5083 = vunpack.c.h.b16 %v4702
    %v5084 = vunpack.c.l.b16 %v4703
    %v5085 = vunpack.c.h.b16 %v4703
    %v5086 = vunpack.c.l.b16 %v4704
    %v5087 = vunpack.c.h.b16 %v4704
    %v5088 = vunpack.c.l.b16 %v4705
    %v5089 = vunpack.c.h.b16 %v4705
    %v5090 = vunpack.c.l.b16 %v4706
    %v5091 = vunpack.c.h.b16 %v4706
    %v5092 = vunpack.c.l.b16 %v4707
    %v5093 = vunpack.c.h.b16 %v4707
    %v5094 = vunpack.c.l.b16 %v4708
    %v5095 = vunpack.c.h.b16 %v4708
    %v5096 = vunpack.c.l.b16 %v4709
    %v5097 = vunpack.c.h.b16 %v4709
    %v5098 = vunpack.c.l.b16 %v4710
    %v5099 = vunpack.c.h.b16 %v4710
    %v5100 = vunpack.c.l.b16 %v4711
    %v5101 = vunpack.c.h.b16 %v4711
    %v5102 = vunpack.c.l.b16 %v4712
    %v5103 = vunpack.c.h.b16 %v4712
    %v5104 = vunpack.c.l.b16 %v4713
    %v5105 = vunpack.c.h.b16 %v4713
    %v5106 = vunpack.c.l.b16 %v4714
    %v5107 = vunpack.c.h.b16 %v4714
    %v5108 = vunpack.c.l.b16 %v4715
    %v5109 = vunpack.c.h.b16 %v4715
    %v5110 = vunpack.c.l.b16 %v4716
    %v5111 = vunpack.c.h.b16 %v4716
    %v5112 = vunpack.c.l.b16 %v4717
    %v5113 = vunpack.c.h.b16 %v4717
    %v5114 = vpack.c.b16 %v4860, %v4858
    %v5115 = vpack.c.b16 %v4861, %v4859
    %v5116 = vpack.c.b16 %v4864, %v4862
    %v5117 = vpack.c.b16 %v4865, %v4863
    %v5118 = vpack.c.b16 %v4868, %v4866
    %v5119 = vpack.c.b16 %v4869, %v4867
    %v5120 = vpack.c.b16 %v4872, %v4870
    %v5121 = vpack.c.b16 %v4873, %v4871
    %v5122 = vpack.c.b16 %v4876, %v4874
    %v5123 = vpack.c.b16 %v4877, %v4875
    %v5124 = vpack.c.b16 %v4880, %v4878
    %v5125 = vpack.c.b16 %v4881, %v4879
    %v5126 = vpack.c.b16 %v4884, %v4882
    %v5127 = vpack.c.b16 %v4885, %v4883
    %v5128 = vpack.c.b16 %v4888, %v4886
    %v5129 = vpack.c.b16 %v4889, %v4887
    %v5130 = vpack.c.b16 %v4892, %v4890
    %v5131 = vpack.c.b16 %v4893, %v4891
    %v5132 = vpack.c.b16 %v4896, %v4894
    %v5133 = vpack.c.b16 %v4897, %v4895
    %v5134 = vpack.c.b16 %v4900, %v4898
    %v5135 = vpack.c.b16 %v4901, %v4899
    %v5136 = vpack.c.b16 %v4904, %v4902
    %v5137 = vpack.c.b16 %v4905, %v4903
    %v5138 = vpack.c.b16 %v4908, %v4906
    %v5139 = vpack.c.b16 %v4909, %v4907
    %v5140 = vpack.c.b16 %v4912, %v4910
    %v5141 = vpack.c.b16 %v4913, %v4911
    %v5142 = vpack.c.b16 %v4916, %v4914
    %v5143 = vpack.c.b16 %v4917, %v4915
    %v5144 = vpack.c.b16 %v4920, %v4918
    %v5145 = vpack.c.b16 %v4921, %v4919
    %v5146 = vpack.c.b16 %v4924, %v4922
    %v5147 = vpack.c.b16 %v4925, %v4923
    %v5148 = vpack.c.b16 %v4928, %v4926
    %v5149 = vpack.c.b16 %v4929, %v4927
    %v5150 = vpack.c.b16 %v4932, %v4930
    %v5151 = vpack.c.b16 %v4933, %v4931
    %v5152 = vpack.c.b16 %v4936, %v4934
    %v5153 = vpack.c.b16 %v4937, %v4935
    %v5154 = vpack.c.b16 %v4940, %v4938
    %v5155 = vpack.c.b16 %v4941, %v4939
    %v5156 = vpack.c.b16 %v4944, %v4942
    %v5157 = vpack.c.b16 %v4945, %v4943
    %v5158 = vpack.c.b16 %v4948, %v4946
    %v5159 = vpack.c.b16 %v4949, %v4947
    %v5160 = vpack.c.b16 %v4952, %v4950
    %v5161 = vpack.c.b16 %v4953, %v4951
    %v5162 = vpack.c.b16 %v4956, %v4954
    %v5163 = vpack.c.b16 %v4957, %v4955
    %v5164 = vpack.c.b16 %v4960, %v4958
    %v5165 = vpack.c.b16 %v4961, %v4959
    %v5166 = vpack.c.b16 %v4964, %v4962
    %v5167 = vpack.c.b16 %v4965, %v4963
    %v5168 = vpack.c.b16 %v4968, %v4966
    %v5169 = vpack.c.b16 %v4969, %v4967
    %v5170 = vpack.c.b16 %v4972, %v4970
    %v5171 = vpack.c.b16 %v4973, %v4971
    %v5172 = vpack.c.b16 %v4976, %v4974
    %v5173 = vpack.c.b16 %v4977, %v4975
    %v5174 = vpack.c.b16 %v4980, %v4978
    %v5175 = vpack.c.b16 %v4981, %v4979
    %v5176 = vpack.c.b16 %v4984, %v4982
    %v5177 = vpack.c.b16 %v4985, %v4983
    %v5178 = vpack.c.b16 %v4988, %v4986
    %v5179 = vpack.c.b16 %v4989, %v4987
    %v5180 = vpack.c.b16 %v4992, %v4990
    %v5181 = vpack.c.b16 %v4993, %v4991
    %v5182 = vpack.c.b16 %v4996, %v4994
    %v5183 = vpack.c.b16 %v4997, %v4995
    %v5184 = vpack.c.b16 %v5000, %v4998
    %v5185 = vpack.c.b16 %v5001, %v4999
    %v5186 = vpack.c.b16 %v5004, %v5002
    %v5187 = vpack.c.b16 %v5005, %v5003
    %v5188 = vpack.c.b16 %v5008, %v5006
    %v5189 = vpack.c.b16 %v5009, %v5007
    %v5190 = vpack.c.b16 %v5012, %v5010
    %v5191 = vpack.c.b16 %v5013, %v5011
    %v5192 = vpack.c.b16 %v5016, %v5014
    %v5193 = vpack.c.b16 %v5017, %v5015
    %v5194 = vpack.c.b16 %v5020, %v5018
    %v5195 = vpack.c.b16 %v5021, %v5019
    %v5196 = vpack.c.b16 %v5024, %v5022
    %v5197 = vpack.c.b16 %v5025, %v5023
    %v5198 = vpack.c.b16 %v5028, %v5026
    %v5199 = vpack.c.b16 %v5029, %v5027
    %v5200 = vpack.c.b16 %v5032, %v5030
    %v5201 = vpack.c.b16 %v5033, %v5031
    %v5202 = vpack.c.b16 %v5036, %v5034
    %v5203 = vpack.c.b16 %v5037, %v5035
    %v5204 = vpack.c.b16 %v5040, %v5038
    %v5205 = vpack.c.b16 %v5041, %v5039
    %v5206 = vpack.c.b16 %v5044, %v5042
    %v5207 = vpack.c.b16 %v5045, %v5043
    %v5208 = vpack.c.b16 %v5048, %v5046
    %v5209 = vpack.c.b16 %v5049, %v5047
    %v5210 = vpack.c.b16 %v5052, %v5050
    %v5211 = vpack.c.b16 %v5053, %v5051
    %v5212 = vpack.c.b16 %v5056, %v5054
    %v5213 = vpack.c.b16 %v5057, %v5055
    %v5214 = vpack.c.b16 %v5060, %v5058
    %v5215 = vpack.c.b16 %v5061, %v5059
    %v5216 = vpack.c.b16 %v5064, %v5062
    %v5217 = vpack.c.b16 %v5065, %v5063
    %v5218 = vpack.c.b16 %v5068, %v5066
    %v5219 = vpack.c.b16 %v5069, %v5067
    %v5220 = vpack.c.b16 %v5072, %v5070
    %v5221 = vpack.c.b16 %v5073, %v5071
    %v5222 = vpack.c.b16 %v5076, %v5074
    %v5223 = vpack.c.b16 %v5077, %v5075
    %v5224 = vpack.c.b16 %v5080, %v5078
    %v5225 = vpack.c.b16 %v5081, %v5079
    %v5226 = vpack.c.b16 %v5084, %v5082
    %v5227 = vpack.c.b16 %v5085, %v5083
    %v5228 = vpack.c.b16 %v5088, %v5086
    %v5229 = vpack.c.b16 %v5089, %v5087
    %v5230 = vpack.c.b16 %v5092, %v5090
    %v5231 = vpack.c.b16 %v5093, %v5091
    %v5232 = vpack.c.b16 %v5096, %v5094
    %v5233 = vpack.c.b16 %v5097, %v5095
    %v5234 = vpack.c.b16 %v5100, %v5098
    %v5235 = vpack.c.b16 %v5101, %v5099
    %v5236 = vpack.c.b16 %v5104, %v5102
    %v5237 = vpack.c.b16 %v5105, %v5103
    %v5238 = vpack.c.b16 %v5108, %v5106
    %v5239 = vpack.c.b16 %v5109, %v5107
    %v5240 = vpack.c.b16 %v5112, %v5110
    %v5241 = vpack.c.b16 %v5113, %v5111
    %5370 = vmatprep.subr.bf16.mxu0 %v5129
    %5371 = vmatpush1.bf16.msra.mxu0 %v5128
    %5372 = vmatprep.subr.bf16.mxu0 %v5127
    %5373 = vmatpush1.bf16.msra.mxu0 %v5126
    %5374 = vmatprep.subr.bf16.mxu0 %v5125
    %5375 = vmatpush1.bf16.msra.mxu0 %v5124
    %5376 = vmatprep.subr.bf16.mxu0 %v5123
    %5377 = vmatpush1.bf16.msra.mxu0 %v5122
    %5378 = vmatprep.subr.bf16.mxu0 %v5121
    %5379 = vmatpush1.bf16.msra.mxu0 %v5120
    %5380 = vmatprep.subr.bf16.mxu0 %v5119
    %5381 = vmatpush1.bf16.msra.mxu0 %v5118
    %5382 = vmatprep.subr.bf16.mxu0 %v5117
    %5383 = vmatpush1.bf16.msra.mxu0 %v5116
    %5384 = vmatprep.subr.bf16.mxu0 %v5115
    %5385 = vmatpush1.bf16.msra.mxu0 %v5114
    %5386 = vmatprep.subr.bf16.mxu0 %v5145
    %5387 = vmatpush2.bf16.msra.mxu0 %v5144
    %5388 = vmatprep.subr.bf16.mxu0 %v5143
    %5389 = vmatpush2.bf16.msra.mxu0 %v5142
    %5390 = vmatprep.subr.bf16.mxu0 %v5141
    %5391 = vmatpush2.bf16.msra.mxu0 %v5140
    %5392 = vmatprep.subr.bf16.mxu0 %v5139
    %5393 = vmatpush2.bf16.msra.mxu0 %v5138
    %5394 = vmatprep.subr.bf16.mxu0 %v5137
    %5395 = vmatpush2.bf16.msra.mxu0 %v5136
    %5396 = vmatprep.subr.bf16.mxu0 %v5135
    %5397 = vmatpush2.bf16.msra.mxu0 %v5134
    %5398 = vmatprep.subr.bf16.mxu0 %v5133
    %5399 = vmatpush2.bf16.msra.mxu0 %v5132
    %5400 = vmatprep.subr.bf16.mxu0 %v5131
    %5401 = vmatpush2.bf16.msra.mxu0 %v5130
    %5402 = vmatprep.mubr.bf16.mxu0 %v4583
    %5403 = vmatmul.mubr.bf16.gmra.mxu0 %v4582
    %v5404 = vpop.f32.mrf.mxu0
    %v5405 = vadd.f32 %v4723, %v5404
    %v5406 = vpop.f32.mrf.mxu0
    %v5407 = vadd.f32 %v4727, %v5406
    %v5408 = vpop.f32.mrf.mxu0
    %v5409 = vadd.f32 %v4723, %v5408
    %v5410 = vpop.f32.mrf.mxu0
    %v5411 = vadd.f32 %v4727, %v5410
    %5412 = vdwg.mxu0
    %5413 = vmatprep.subr.bf16.mxu0 %v5161
    %5414 = vmatpush1.bf16.msra.mxu0 %v5160
    %5415 = vmatprep.subr.bf16.mxu0 %v5159
    %5416 = vmatpush1.bf16.msra.mxu0 %v5158
    %5417 = vmatprep.subr.bf16.mxu0 %v5157
    %5418 = vmatpush1.bf16.msra.mxu0 %v5156
    %5419 = vmatprep.subr.bf16.mxu0 %v5155
    %5420 = vmatpush1.bf16.msra.mxu0 %v5154
    %5421 = vmatprep.subr.bf16.mxu0 %v5153
    %5422 = vmatpush1.bf16.msra.mxu0 %v5152
    %5423 = vmatprep.subr.bf16.mxu0 %v5151
    %5424 = vmatpush1.bf16.msra.mxu0 %v5150
    %5425 = vmatprep.subr.bf16.mxu0 %v5149
    %5426 = vmatpush1.bf16.msra.mxu0 %v5148
    %5427 = vmatprep.subr.bf16.mxu0 %v5147
    %5428 = vmatpush1.bf16.msra.mxu0 %v5146
    %5429 = vmatprep.subr.bf16.mxu0 %v5177
    %5430 = vmatpush2.bf16.msra.mxu0 %v5176
    %5431 = vmatprep.subr.bf16.mxu0 %v5175
    %5432 = vmatpush2.bf16.msra.mxu0 %v5174
    %5433 = vmatprep.subr.bf16.mxu0 %v5173
    %5434 = vmatpush2.bf16.msra.mxu0 %v5172
    %5435 = vmatprep.subr.bf16.mxu0 %v5171
    %5436 = vmatpush2.bf16.msra.mxu0 %v5170
    %5437 = vmatprep.subr.bf16.mxu0 %v5169
    %5438 = vmatpush2.bf16.msra.mxu0 %v5168
    %5439 = vmatprep.subr.bf16.mxu0 %v5167
    %5440 = vmatpush2.bf16.msra.mxu0 %v5166
    %5441 = vmatprep.subr.bf16.mxu0 %v5165
    %5442 = vmatpush2.bf16.msra.mxu0 %v5164
    %5443 = vmatprep.subr.bf16.mxu0 %v5163
    %5444 = vmatpush2.bf16.msra.mxu0 %v5162
    %5445 = vmatprep.mubr.bf16.mxu0 %v4585
    %5446 = vmatmul.mubr.bf16.gmra.mxu0 %v4584
    %v5447 = vpop.f32.mrf.mxu0
    %v5448 = vadd.f32 %v5405, %v5447
    %v5449 = vpop.f32.mrf.mxu0
    %v5450 = vadd.f32 %v5407, %v5449
    %v5451 = vpop.f32.mrf.mxu0
    %v5452 = vadd.f32 %v5409, %v5451
    %v5453 = vpop.f32.mrf.mxu0
    %v5454 = vadd.f32 %v5411, %v5453
    %5455 = vdwg.mxu0
    %5456 = vmatprep.subr.bf16.mxu0 %v5193
    %5457 = vmatpush1.bf16.msra.mxu0 %v5192
    %5458 = vmatprep.subr.bf16.mxu0 %v5191
    %5459 = vmatpush1.bf16.msra.mxu0 %v5190
    %5460 = vmatprep.subr.bf16.mxu0 %v5189
    %5461 = vmatpush1.bf16.msra.mxu0 %v5188
    %5462 = vmatprep.subr.bf16.mxu0 %v5187
    %5463 = vmatpush1.bf16.msra.mxu0 %v5186
    %5464 = vmatprep.subr.bf16.mxu0 %v5185
    %5465 = vmatpush1.bf16.msra.mxu0 %v5184
    %5466 = vmatprep.subr.bf16.mxu0 %v5183
    %5467 = vmatpush1.bf16.msra.mxu0 %v5182
    %5468 = vmatprep.subr.bf16.mxu0 %v5181
    %5469 = vmatpush1.bf16.msra.mxu0 %v5180
    %5470 = vmatprep.subr.bf16.mxu0 %v5179
    %5471 = vmatpush1.bf16.msra.mxu0 %v5178
    %5472 = vmatprep.subr.bf16.mxu0 %v5209
    %5473 = vmatpush2.bf16.msra.mxu0 %v5208
    %5474 = vmatprep.subr.bf16.mxu0 %v5207
    %5475 = vmatpush2.bf16.msra.mxu0 %v5206
    %5476 = vmatprep.subr.bf16.mxu0 %v5205
    %5477 = vmatpush2.bf16.msra.mxu0 %v5204
    %5478 = vmatprep.subr.bf16.mxu0 %v5203
    %5479 = vmatpush2.bf16.msra.mxu0 %v5202
    %5480 = vmatprep.subr.bf16.mxu0 %v5201
    %5481 = vmatpush2.bf16.msra.mxu0 %v5200
    %5482 = vmatprep.subr.bf16.mxu0 %v5199
    %5483 = vmatpush2.bf16.msra.mxu0 %v5198
    %5484 = vmatprep.subr.bf16.mxu0 %v5197
    %5485 = vmatpush2.bf16.msra.mxu0 %v5196
    %5486 = vmatprep.subr.bf16.mxu0 %v5195
    %5487 = vmatpush2.bf16.msra.mxu0 %v5194
    %5488 = vmatprep.mubr.bf16.mxu0 %v4587
    %5489 = vmatmul.mubr.bf16.gmra.mxu0 %v4586
    %v5490 = vpop.f32.mrf.mxu0
    %v5491 = vadd.f32 %v5448, %v5490
    %v5492 = vpop.f32.mrf.mxu0
    %v5493 = vadd.f32 %v5450, %v5492
    %v5494 = vpop.f32.mrf.mxu0
    %v5495 = vadd.f32 %v5452, %v5494
    %v5496 = vpop.f32.mrf.mxu0
    %v5497 = vadd.f32 %v5454, %v5496
    %5498 = vdwg.mxu0
    %5499 = vmatprep.subr.bf16.mxu0 %v5225
    %5500 = vmatpush1.bf16.msra.mxu0 %v5224
    %5501 = vmatprep.subr.bf16.mxu0 %v5223
    %5502 = vmatpush1.bf16.msra.mxu0 %v5222
    %5503 = vmatprep.subr.bf16.mxu0 %v5221
    %5504 = vmatpush1.bf16.msra.mxu0 %v5220
    %5505 = vmatprep.subr.bf16.mxu0 %v5219
    %5506 = vmatpush1.bf16.msra.mxu0 %v5218
    %5507 = vmatprep.subr.bf16.mxu0 %v5217
    %5508 = vmatpush1.bf16.msra.mxu0 %v5216
    %5509 = vmatprep.subr.bf16.mxu0 %v5215
    %5510 = vmatpush1.bf16.msra.mxu0 %v5214
    %5511 = vmatprep.subr.bf16.mxu0 %v5213
    %5512 = vmatpush1.bf16.msra.mxu0 %v5212
    %5513 = vmatprep.subr.bf16.mxu0 %v5211
    %5514 = vmatpush1.bf16.msra.mxu0 %v5210
    %5515 = vmatprep.subr.bf16.mxu0 %v5241
    %5516 = vmatpush2.bf16.msra.mxu0 %v5240
    %5517 = vmatprep.subr.bf16.mxu0 %v5239
    %5518 = vmatpush2.bf16.msra.mxu0 %v5238
    %5519 = vmatprep.subr.bf16.mxu0 %v5237
    %5520 = vmatpush2.bf16.msra.mxu0 %v5236
    %5521 = vmatprep.subr.bf16.mxu0 %v5235
    %5522 = vmatpush2.bf16.msra.mxu0 %v5234
    %5523 = vmatprep.subr.bf16.mxu0 %v5233
    %5524 = vmatpush2.bf16.msra.mxu0 %v5232
    %5525 = vmatprep.subr.bf16.mxu0 %v5231
    %5526 = vmatpush2.bf16.msra.mxu0 %v5230
    %5527 = vmatprep.subr.bf16.mxu0 %v5229
    %5528 = vmatpush2.bf16.msra.mxu0 %v5228
    %5529 = vmatprep.subr.bf16.mxu0 %v5227
    %5530 = vmatpush2.bf16.msra.mxu0 %v5226
    %5531 = vmatprep.mubr.bf16.mxu0 %v4589
    %5532 = vmatmul.mubr.bf16.gmra.mxu0 %v4588
    %v5533 = vpop.f32.mrf.mxu0
    %v5534 = vadd.f32 %v5491, %v5533
    %v5535 = vpop.f32.mrf.mxu0
    %v5536 = vadd.f32 %v5493, %v5535
    %v5537 = vpop.f32.mrf.mxu0
    %v5538 = vadd.f32 %v5495, %v5537
    %v5539 = vpop.f32.mrf.mxu0
    %v5540 = vadd.f32 %v5497, %v5539
    %5541 = vdwg.mxu0
    %v5542 = vmax.f32 %v5534, 0.0
    %v5543 = vmax.f32 %v5536, 0.0
    %v5544 = vmax.f32 %v5538, 0.0
    %v5545 = vmax.f32 %v5540, 0.0
    %v5546 = vpack.c.bf16 %v5544, %v5542
    %v5547 = vpack.c.bf16 %v5545, %v5543
    %v5548 = vld [vmem:[#allocation12] sm:$0xf]
    %v5549 = vld [vmem:[#allocation12 + $0x4] sm:$0xf]
    %v5550 = vld [vmem:[#allocation12 + $0x8] sm:$0xf]
    %v5551 = vld [vmem:[#allocation12 + $0xc] sm:$0xf]
    %v5552 = vld [vmem:[#allocation12 + $0x10] sm:$0xf]
    %v5553 = vld [vmem:[#allocation12 + $0x14] sm:$0xf]
    %v5554 = vld [vmem:[#allocation12 + $0x18] sm:$0xf]
    %v5555 = vld [vmem:[#allocation12 + $0x1c] sm:$0xf]
    %v5556 = vld [vmem:[#allocation12 + $0x20] sm:$0xf]
    %v5557 = vld [vmem:[#allocation12 + $0x24] sm:$0xf]
    %v5558 = vld [vmem:[#allocation12 + $0x28] sm:$0xf]
    %v5559 = vld [vmem:[#allocation12 + $0x2c] sm:$0xf]
    %v5560 = vld [vmem:[#allocation12 + $0x30] sm:$0xf]
    %v5561 = vld [vmem:[#allocation12 + $0x34] sm:$0xf]
    %v5562 = vld [vmem:[#allocation12 + $0x38] sm:$0xf]
    %v5563 = vld [vmem:[#allocation12 + $0x3c] sm:$0xf]
    %v5564 = vld [vmem:[#allocation12 + $0x40] sm:$0xf]
    %v5565 = vld [vmem:[#allocation12 + $0x44] sm:$0xf]
    %v5566 = vld [vmem:[#allocation12 + $0x48] sm:$0xf]
    %v5567 = vld [vmem:[#allocation12 + $0x4c] sm:$0xf]
    %v5568 = vld [vmem:[#allocation12 + $0x50] sm:$0xf]
    %v5569 = vld [vmem:[#allocation12 + $0x54] sm:$0xf]
    %v5570 = vld [vmem:[#allocation12 + $0x58] sm:$0xf]
    %v5571 = vld [vmem:[#allocation12 + $0x5c] sm:$0xf]
    %v5572 = vld [vmem:[#allocation12 + $0x60] sm:$0xf]
    %v5573 = vld [vmem:[#allocation12 + $0x64] sm:$0xf]
    %v5574 = vld [vmem:[#allocation12 + $0x68] sm:$0xf]
    %v5575 = vld [vmem:[#allocation12 + $0x6c] sm:$0xf]
    %v5576 = vld [vmem:[#allocation12 + $0x70] sm:$0xf]
    %v5577 = vld [vmem:[#allocation12 + $0x74] sm:$0xf]
    %v5578 = vld [vmem:[#allocation12 + $0x78] sm:$0xf]
    %v5579 = vld [vmem:[#allocation12 + $0x7c] sm:$0xf]
    %v5580 = vld [vmem:[#allocation13] sm:$0x1]
    %v5582 = vlaneseq
    %v5583 = vshrl.u32 %v5582, 7
    %v5584 = vsub.s32 0, %v5583
    %v5585 = vrot.slane %v5580, %v5584
    %v5619 = vunpack.c.l.b16 %v5548
    %v5620 = vunpack.c.l.b16 %v5549
    %v5621 = vunpack.c.l.b16 %v5550
    %v5622 = vunpack.c.l.b16 %v5551
    %v5623 = vunpack.c.l.b16 %v5552
    %v5624 = vunpack.c.l.b16 %v5553
    %v5625 = vunpack.c.l.b16 %v5554
    %v5626 = vunpack.c.l.b16 %v5555
    %v5627 = vunpack.c.l.b16 %v5556
    %v5628 = vunpack.c.l.b16 %v5557
    %v5629 = vunpack.c.l.b16 %v5558
    %v5630 = vunpack.c.l.b16 %v5559
    %v5631 = vunpack.c.l.b16 %v5560
    %v5632 = vunpack.c.l.b16 %v5561
    %v5633 = vunpack.c.l.b16 %v5562
    %v5634 = vunpack.c.l.b16 %v5563
    %v5635 = vunpack.c.l.b16 %v5564
    %v5636 = vunpack.c.l.b16 %v5565
    %v5637 = vunpack.c.l.b16 %v5566
    %v5638 = vunpack.c.l.b16 %v5567
    %v5639 = vunpack.c.l.b16 %v5568
    %v5640 = vunpack.c.l.b16 %v5569
    %v5641 = vunpack.c.l.b16 %v5570
    %v5642 = vunpack.c.l.b16 %v5571
    %v5643 = vunpack.c.l.b16 %v5572
    %v5644 = vunpack.c.l.b16 %v5573
    %v5645 = vunpack.c.l.b16 %v5574
    %v5646 = vunpack.c.l.b16 %v5575
    %v5647 = vunpack.c.l.b16 %v5576
    %v5648 = vunpack.c.l.b16 %v5577
    %v5649 = vunpack.c.l.b16 %v5578
    %v5650 = vunpack.c.l.b16 %v5579
    %v5651 = vpack.c.b16 %v5620, %v5619
    %v5652 = vpack.c.b16 %v5622, %v5621
    %v5653 = vpack.c.b16 %v5624, %v5623
    %v5654 = vpack.c.b16 %v5626, %v5625
    %v5655 = vpack.c.b16 %v5628, %v5627
    %v5656 = vpack.c.b16 %v5630, %v5629
    %v5657 = vpack.c.b16 %v5632, %v5631
    %v5658 = vpack.c.b16 %v5634, %v5633
    %v5659 = vpack.c.b16 %v5636, %v5635
    %v5660 = vpack.c.b16 %v5638, %v5637
    %v5661 = vpack.c.b16 %v5640, %v5639
    %v5662 = vpack.c.b16 %v5642, %v5641
    %v5663 = vpack.c.b16 %v5644, %v5643
    %v5664 = vpack.c.b16 %v5646, %v5645
    %v5665 = vpack.c.b16 %v5648, %v5647
    %v5666 = vpack.c.b16 %v5650, %v5649
    %5683 = vmatprep.subr.bf16.mxu0 0
    %5684 = vmatpush1.bf16.msra.mxu0 %v5658
    %5685 = vmatprep.subr.bf16.mxu0 0
    %5686 = vmatpush1.bf16.msra.mxu0 %v5657
    %5687 = vmatprep.subr.bf16.mxu0 0
    %5688 = vmatpush1.bf16.msra.mxu0 %v5656
    %5689 = vmatprep.subr.bf16.mxu0 0
    %5690 = vmatpush1.bf16.msra.mxu0 %v5655
    %5691 = vmatprep.subr.bf16.mxu0 0
    %5692 = vmatpush1.bf16.msra.mxu0 %v5654
    %5693 = vmatprep.subr.bf16.mxu0 0
    %5694 = vmatpush1.bf16.msra.mxu0 %v5653
    %5695 = vmatprep.subr.bf16.mxu0 0
    %5696 = vmatpush1.bf16.msra.mxu0 %v5652
    %5697 = vmatprep.subr.bf16.mxu0 0
    %5698 = vmatpush1.bf16.msra.mxu0 %v5651
    %5699 = vmatprep.subr.bf16.mxu0 0
    %5700 = vmatpush2.bf16.msra.mxu0 %v5666
    %5701 = vmatprep.subr.bf16.mxu0 0
    %5702 = vmatpush2.bf16.msra.mxu0 %v5665
    %5703 = vmatprep.subr.bf16.mxu0 0
    %5704 = vmatpush2.bf16.msra.mxu0 %v5664
    %5705 = vmatprep.subr.bf16.mxu0 0
    %5706 = vmatpush2.bf16.msra.mxu0 %v5663
    %5707 = vmatprep.subr.bf16.mxu0 0
    %5708 = vmatpush2.bf16.msra.mxu0 %v5662
    %5709 = vmatprep.subr.bf16.mxu0 0
    %5710 = vmatpush2.bf16.msra.mxu0 %v5661
    %5711 = vmatprep.subr.bf16.mxu0 0
    %5712 = vmatpush2.bf16.msra.mxu0 %v5660
    %5713 = vmatprep.subr.bf16.mxu0 0
    %5714 = vmatpush2.bf16.msra.mxu0 %v5659
    %5715 = vmatprep.mubr.bf16.mxu0 %v5547
    %5716 = vmatmul.mubr.bf16.gmra.mxu0 %v5546
    %v5717 = vpop.f32.mrf.mxu0
    %v5718 = vadd.f32 %v5585, %v5717
    %v5719 = vpop.f32.mrf.mxu0
    %v5720 = vpop.f32.mrf.mxu0
    %v5721 = vadd.f32 %v5585, %v5720
    %v5722 = vpop.f32.mrf.mxu0
    %5723 = vdwg.mxu0
    %5724 = vst [vmem:[%s10] sm:$0xff] %v5718
    %5725 = vst [vmem:[%s10 + $0x8] sm:$0xff] %v5721
    %v5726 = vlaneseq
    %v5727 = vshrl.u32 %v5726, 7
    %v5728 = vadd.s32 %v5727, 8
    %s5729 = smul.u32 0, 16
    %v5730 = vstv %s5729
    %v5731 = vadd.s32 %v5727, %v5730
    %v5732 = vadd.s32 %v5728, %v5730
    %vm5733 = vcmp.lt.s32.totalorder %v5731, 2
    %vm5734 = vcmp.lt.s32.totalorder %v5732, 2
    %v5735 = vld [vmem:[%s9] sm:$0xff]
    %v5736 = vld [vmem:[%s9 + $0x8] sm:$0xff]
    %v5737 = vsub.f32 %v5718, %v5735
    %v5738 = vsub.f32 %v5721, %v5736
    %v5739 = vsel %vm5733, %v5737, 0.0
    %v5740 = vsel %vm5734, %v5738, 0.0
    %v5741 = vmul.f32 %v5739, %v5739
    %v5742 = vmul.f32 %v5740, %v5740
    %v5743 = vadd.f32 %v5741, %v5742
    %5744 = vadd.xlane.f32.xlu0 %v5743
    %v5745 = vpop.xlane.xlu0 %5744
    %v5746 = vrot.slane %v5745, 4
    %v5747 = vadd.f32 %v5745, %v5746
    %v5748 = vrot.slane %v5747, 2
    %v5749 = vadd.f32 %v5747, %v5748
    %v5750 = vrot.slane %v5749, 1
    %v5751 = vadd.f32 %v5749, %v5750
    %s5752 = vtos %v5751
    %v5753 = vstv %s5752
    %5754 = vst [vmem:[%s11] sm:$0xff] %v5753
    // Predicated region
    $region74: #{wireless_loc_fcnn_forward.1} parent=1 // pred_check
      _
    $region75: #{wireless_loc_fcnn_forward.1} parent=1 // pred_check_branch
      %5756 = sbr.rel (0) target = $region77
    $region76: #{wireless_loc_fcnn_forward.1} parent=1 // pred_region
      _
    $region77: #{wireless_loc_fcnn_forward.1} parent=1 // pred_fallthru
      _
    // Predicated region
    $region78: #{wireless_loc_fcnn_forward.1} parent=1 // pred_check
      _
    $region79: #{wireless_loc_fcnn_forward.1} parent=1 // pred_check_branch
      %5758 = sbr.rel (0) target = $region81
    $region80: #{wireless_loc_fcnn_forward.1} parent=1 // pred_region
      _
    $region81: #{wireless_loc_fcnn_forward.1} parent=1 // pred_fallthru
      _
    // Predicated region
    $region82: #{wireless_loc_fcnn_forward.1} parent=1 // pred_check
      _
    $region83: #{wireless_loc_fcnn_forward.1} parent=1 // pred_check_branch
      %5760 = sbr.rel (0) target = $region85
    $region84: #{wireless_loc_fcnn_forward.1} parent=1 // pred_region
      _
    $region85: #{wireless_loc_fcnn_forward.1} parent=1 // pred_fallthru
      _
    // Predicated region
    $region86: #{wireless_loc_fcnn_forward.1} parent=1 // pred_check
      _
    $region87: #{wireless_loc_fcnn_forward.1} parent=1 // pred_check_branch
      %5762 = sbr.rel (0) target = $region89
    $region88: #{wireless_loc_fcnn_forward.1} parent=1 // pred_region
      _
    $region89: #{wireless_loc_fcnn_forward.1} parent=1 // pred_fallthru
      _
    %5763 = vsyncpa [#allocation3], 1
    %5764 = vsyncpa [#allocation5], 1
    %5765 = vsyncpa [#allocation8], 1
    %5766 = vsyncpa [#allocation11], 1
    %5767 = vsyncpa [#allocation14], 1

</llo_original>
